<compile_context>
chip_gen: v7x
topology: tpu7x:2x2x1
jax: 0.10.0
libtpu: 0.0.40
codegen_flags: <defaults>
</compile_context>

<pallas_src>
import jax
import jax.numpy as jnp
from jax.experimental import pallas as pl
from jax.experimental.pallas import tpu as pltpu

LANE = 128  # TPU lane width; narrow tail dims are zero-padded up to this.


# ----------------------------------------------------------------------------
# Pallas kernel: one (row-tile, k-tile) grid step.
# ----------------------------------------------------------------------------
def gnn_actor_kernel(a_ref, xk_ref, xrow_ref, invdeg_ref,
                     wl_ref, wr_ref, bs_ref,
                     w1_ref, b1_ref,
                     w2_ref, b2_ref,
                     w3_ref, b3_ref,
                     out_ref, agg_ref):
    k = pl.program_id(1)

    @pl.when(k == 0)
    def _():
        agg_ref[...] = jnp.zeros_like(agg_ref)

    # Neighbor-sum accumulation for this row tile:
    # (tile_n, tile_k) bf16 0/1  @  (tile_k, 256) bf16  ->  f32 accumulate.
    agg_ref[...] += jnp.dot(a_ref[...], xk_ref[...],
                            preferred_element_type=jnp.float32)

    @pl.when(k == pl.num_programs(1) - 1)
    def _():
        x_row = xrow_ref[...]                       # (tile_n, 256) f32 features
        # mean = sum * (1/deg): exact 0/1 sums scaled in f32 (no bf16 1/deg).
        agg = agg_ref[...] * invdeg_ref[...]

        # SAGEConv: W_l @ mean(neigh) + W_r @ x + b   (two K=256 MXU matmuls).
        h = (jnp.dot(agg.astype(jnp.bfloat16), wl_ref[...],
                     preferred_element_type=jnp.float32)
             + jnp.dot(x_row.astype(jnp.bfloat16), wr_ref[...],
                       preferred_element_type=jnp.float32)
             + bs_ref[...])
        h = jnp.maximum(h, 0.0)                     # relu(conv1)

        # Residual with the original f32 features (matches PyTorch out + data.x).
        # TODO(synk): on v6e/v7x the elementwise tail could run in bf16 to halve
        # vreg/VMEM pressure at tile_n=256; kept f32 for v5e portability.
        x1 = h + x_row

        # lin1 -> relu
        y = jnp.dot(x1.astype(jnp.bfloat16), w1_ref[...],
                    preferred_element_type=jnp.float32) + b1_ref[...]
        y = jnp.maximum(y, 0.0)
        # lin2 -> relu (zero-padded to 128 lanes; padded lanes stay 0)
        y = jnp.dot(y.astype(jnp.bfloat16), w2_ref[...],
                    preferred_element_type=jnp.float32) + b2_ref[...]
        y = jnp.maximum(y, 0.0)
        # lin3 (Dirichlet concentration logits, lane-padded; sliced outside)
        out_ref[...] = jnp.dot(y.astype(jnp.bfloat16), w3_ref[...],
                               preferred_element_type=jnp.float32) + b3_ref[...]


# ----------------------------------------------------------------------------
# Wrapper: (row, k)-tiled pallas_call with padding to tile multiples.
# ----------------------------------------------------------------------------
def gnn_actor_forward(a01, inv_deg, x, kp, out_dim, tile_n=256, tile_k=256):
    """GNNActor forward; returns (N, out_dim) f32 concentration logits.

    a01:     (N, N)  f32/any 0-1 adjacency (dst receives mean over src).
    inv_deg: (N, 1)  f32 per-row 1/max(deg,1).
    x:       (N, 256) f32 node features.
    """
    n, f = x.shape
    assert f == 256, "residual `out + data.x` requires input_size == 256"

    # Pad node count up to the tile multiples (padded rows/cols are zero and
    # mathematically inert; padded outputs are sliced off below).
    n_m = pl.cdiv(n, tile_n) * tile_n           # row (M) padding
    n_k = pl.cdiv(n, tile_k) * tile_k           # reduction (K) padding

    a_p = jnp.zeros((n_m, n_k), jnp.bfloat16).at[:n, :n].set(a01.astype(jnp.bfloat16))
    xk_p = jnp.zeros((n_k, f), jnp.bfloat16).at[:n].set(x.astype(jnp.bfloat16))
    xm_p = jnp.zeros((n_m, f), jnp.float32).at[:n].set(x)
    inv_p = jnp.zeros((n_m, 1), jnp.float32).at[:n].set(inv_deg)

    grid = (n_m // tile_n, n_k // tile_k)

    operands = (
        a_p,                              # (n_m, n_k) bf16 0/1 adjacency, streamed (i,k)
        xk_p,                             # (n_k, 256) bf16 features, streamed (k)
        xm_p,                             # (n_m, 256) f32 row tile (root proj + residual)
        inv_p,                            # (n_m, 1)   f32 1/deg
        kp["wl"], kp["wr"], kp["b_sage"], # (256,256)bf16 x2, (1,256)f32
        kp["w1"], kp["b1"],               # (256,128)bf16, (1,128)f32
        kp["w2"], kp["b2"],               # (128,128)bf16 (padded), (1,128)f32
        kp["w3"], kp["b3"],               # (128,128)bf16 (padded), (1,128)f32
    )

    def resident(arr):
        # Whole-array block, same block index every step -> stays resident in VMEM.
        return pl.BlockSpec(arr.shape, lambda i, k: (0,) * arr.ndim)

    in_specs = [
        pl.BlockSpec((tile_n, tile_k), lambda i, k: (i, k)),   # A tile
        pl.BlockSpec((tile_k, f), lambda i, k: (k, 0)),        # X k-chunk
        pl.BlockSpec((tile_n, f), lambda i, k: (i, 0)),        # X row tile (per i only)
        pl.BlockSpec((tile_n, 1), lambda i, k: (i, 0)),        # 1/deg row tile
        resident(kp["wl"]), resident(kp["wr"]), resident(kp["b_sage"]),
        resident(kp["w1"]), resident(kp["b1"]),
        resident(kp["w2"]), resident(kp["b2"]),
        resident(kp["w3"]), resident(kp["b3"]),
    ]

    flops = (2 * n_m * n_k * 256                                   # aggregation
             + 2 * n_m * (2 * 256 * 256 + 256 * 128 + 2 * 128 * 128))
    bytes_accessed = (a_p.size * 2
                      + (n_m // tile_n) * xk_p.size * 2            # X re-streamed per row tile
                      + xm_p.size * 4 + inv_p.size * 4
                      + sum(int(kp[w].size) * kp[w].dtype.itemsize
                            for w in ("wl", "wr", "b_sage", "w1", "b1", "w2", "b2", "w3", "b3"))
                      + n_m * LANE * 4)

    out_padded = pl.pallas_call(
        gnn_actor_kernel,
        out_shape=jax.ShapeDtypeStruct((n_m, LANE), jnp.float32),
        grid_spec=pltpu.PrefetchScalarGridSpec(
            num_scalar_prefetch=0,
            grid=grid,
            in_specs=in_specs,
            out_specs=pl.BlockSpec((tile_n, LANE), lambda i, k: (i, 0)),
            scratch_shapes=[pltpu.VMEM((tile_n, f), jnp.float32)],  # agg accumulator
        ),
        # TODO(synk): on v7x use pltpu.CORE_PARALLEL on the row axis (or an
        # explicit core_map) so the second TensorCore is actually used.
        compiler_params=pltpu.CompilerParams(
            dimension_semantics=("parallel", "arbitrary")),
        cost_estimate=pl.CostEstimate(flops=flops, transcendentals=0,
                                      bytes_accessed=bytes_accessed),
    )(*operands)

    # Slice padding rows and lane-padding back to the true output width.
    return out_padded[:n, :out_dim]


# ----------------------------------------------------------------------------
# Parameter init / packing + dense 0/1 adjacency (+ 1/deg) from edge_index.
# ----------------------------------------------------------------------------
def init_params(key, input_size=256, output_size=8):
    ks = jax.random.split(key, 8)
    scale = 0.05
    # Weights stored as (in, out) — transposed w.r.t. torch nn.Linear.weight.
    return {
        # SAGEConv(input_size, 256): lin_l (aggregated, has bias), lin_r (root)
        "wl": scale * jax.random.normal(ks[0], (input_size, 256), jnp.float32),
        "bl": scale * jax.random.normal(ks[1], (1, 256), jnp.float32),
        "wr": scale * jax.random.normal(ks[2], (input_size, 256), jnp.float32),
        "w1": scale * jax.random.normal(ks[3], (256, 128), jnp.float32),
        "b1": scale * jax.random.normal(ks[4], (1, 128), jnp.float32),
        "w2": scale * jax.random.normal(ks[5], (128, 32), jnp.float32),
        "b2": scale * jax.random.normal(ks[6], (1, 32), jnp.float32),
        "w3": scale * jax.random.normal(ks[7], (32, output_size), jnp.float32),
        "b3": jnp.zeros((1, output_size), jnp.float32),
    }


def prepare_kernel_params(p):
    """Zero-pad the narrow MLP tail to 128 lanes and cast matmul operands to
    bf16 (biases stay f32). W_l / W_r are kept separate (no concat in-kernel)."""
    out_dim = p["b3"].shape[-1]
    # Padding is inert: padded lin2 columns are relu(0 + 0) = 0 and the
    # corresponding (zero) rows of padded w3 contribute nothing.
    w2p = jnp.zeros((128, LANE), jnp.float32).at[:, :32].set(p["w2"])
    b2p = jnp.zeros((1, LANE), jnp.float32).at[:, :32].set(p["b2"])
    w3p = jnp.zeros((LANE, LANE), jnp.float32).at[:32, :out_dim].set(p["w3"])
    b3p = jnp.zeros((1, LANE), jnp.float32).at[:, :out_dim].set(p["b3"])
    return {
        "wl": p["wl"].astype(jnp.bfloat16),
        "wr": p["wr"].astype(jnp.bfloat16),
        "b_sage": p["bl"],
        "w1": p["w1"].astype(jnp.bfloat16),
        "b1": p["b1"],
        "w2": w2p.astype(jnp.bfloat16),
        "b2": b2p,
        "w3": w3p.astype(jnp.bfloat16),
        "b3": b3p,
    }


def build_mean_adjacency(edge_index, num_nodes):
    """Dense 0/1 adjacency (dst <- src) and per-row 1/max(deg, 1).

    (mean aggregation = (A01 @ X) * inv_deg, with inv_deg applied in f32.)
    """
    # TODO(synk): for large/sparse graphs replace this dense O(N^2) matmul with
    # an edge-list gather/segment-mean driven by scalar-prefetched CSR offsets
    # (PrefetchScalarGridSpec) — avoids N^2 FLOPs and HBM traffic entirely.
    # TODO(synk): store A in int8 (v5e/v6e) or fp8 (v7x) to halve/quarter the
    # dominant HBM stream; kept bf16 0/1 here for portable MXU lowering.
    src, dst = edge_index[0], edge_index[1]
    a = jnp.zeros((num_nodes, num_nodes), jnp.float32).at[dst, src].add(1.0)
    a = jnp.minimum(a, 1.0)  # 0/1 (duplicate edges collapse, as in a simple graph)
    deg = a.sum(axis=1, keepdims=True)
    inv_deg = 1.0 / jnp.maximum(deg, 1.0)
    return a, inv_deg


def reference_forward(a01, inv_deg, x, kp, out_dim):
    """Pure-JAX reference mirroring the kernel math (bf16 matmuls, f32 accum)."""
    x_bf = x.astype(jnp.bfloat16)
    agg = jnp.dot(a01.astype(jnp.bfloat16), x_bf,
                  preferred_element_type=jnp.float32) * inv_deg
    h = (jnp.dot(agg.astype(jnp.bfloat16), kp["wl"], preferred_element_type=jnp.float32)
         + jnp.dot(x_bf, kp["wr"], preferred_element_type=jnp.float32)
         + kp["b_sage"])
    h = jnp.maximum(h, 0.0)
    x1 = h + x
    y = jnp.maximum(jnp.dot(x1.astype(jnp.bfloat16), kp["w1"],
                            preferred_element_type=jnp.float32) + kp["b1"], 0.0)
    y = jnp.maximum(jnp.dot(y.astype(jnp.bfloat16), kp["w2"],
                            preferred_element_type=jnp.float32) + kp["b2"], 0.0)
    out = jnp.dot(y.astype(jnp.bfloat16), kp["w3"],
                  preferred_element_type=jnp.float32) + kp["b3"]
    return out[:, :out_dim]


if __name__ == "__main__":
    key = jax.random.PRNGKey(0)
    k_feat, k_edges, k_param = jax.random.split(key, 3)

    num_nodes = 300            # not a tile multiple -> exercises padding path
    input_size = 256           # residual `out + data.x` forces input_size == 256
    output_size = 8
    num_edges = 2000

    # Node features and a random directed edge list (edge_index: [2, E]).
    x = jax.random.normal(k_feat, (num_nodes, input_size), jnp.float32)
    edge_index = jax.random.randint(k_edges, (2, num_edges), 0, num_nodes)

    a01, inv_deg = build_mean_adjacency(edge_index, num_nodes)
    params = init_params(k_param, input_size, output_size)
    kparams = prepare_kernel_params(params)

    out = gnn_actor_forward(a01, inv_deg, x, kparams, output_size,
                            tile_n=256, tile_k=256)   # grid (2, 2) after padding
    out = jax.block_until_ready(out)

    ref = reference_forward(a01, inv_deg, x, kparams, output_size)
    assert out.shape == (num_nodes, output_size)
    assert jnp.allclose(out, ref, atol=1e-2, rtol=1e-2), "mismatch vs reference"

    # TODO(synk): the Dirichlet distribution built on these concentrations (SAC
    # policy sampling) lives outside forward() and is not implemented as a kernel.
    print("KERNEL_OK")
</pallas_src>

<mosaic_0001>
module attributes {stable_mosaic.version = 11 : i64} {
  func.func @gnn_actor_kernel(%arg0: i32, %arg1: i32, %arg2: memref<256x256xbf16, #tpu.memory_space<vmem>>, %arg3: memref<256x256xbf16, #tpu.memory_space<vmem>>, %arg4: memref<256x256xf32, #tpu.memory_space<vmem>>, %arg5: memref<256x1xf32, #tpu.memory_space<vmem>>, %arg6: memref<256x256xbf16, #tpu.memory_space<vmem>>, %arg7: memref<256x256xbf16, #tpu.memory_space<vmem>>, %arg8: memref<1x256xf32, #tpu.memory_space<vmem>>, %arg9: memref<256x128xbf16, #tpu.memory_space<vmem>>, %arg10: memref<1x128xf32, #tpu.memory_space<vmem>>, %arg11: memref<128x128xbf16, #tpu.memory_space<vmem>>, %arg12: memref<1x128xf32, #tpu.memory_space<vmem>>, %arg13: memref<128x128xbf16, #tpu.memory_space<vmem>>, %arg14: memref<1x128xf32, #tpu.memory_space<vmem>>, %arg15: memref<256x128xf32, #tpu.memory_space<vmem>>, %arg16: memref<256x256xf32, #tpu.memory_space<vmem>>) attributes {dimension_semantics = [#tpu.dimension_semantics<parallel>, #tpu.dimension_semantics<arbitrary>], iteration_bounds = array<i64: 2, 2>, scalar_prefetch = 0 : i64, scratch_operands = 1 : i64, tpu.core_type = #tpu.core_type<tc>, window_params = [{transform_indices = @transform_0, window_bounds = array<i64: 256, 256>}, {transform_indices = @transform_1, window_bounds = array<i64: 256, 256>}, {transform_indices = @transform_2, window_bounds = array<i64: 256, 256>}, {transform_indices = @transform_3, window_bounds = array<i64: 256, 1>}, {pipeline_mode = #tpu.pipeline_mode<synchronous>, transform_indices = @transform_4, window_bounds = array<i64: 256, 256>}, {pipeline_mode = #tpu.pipeline_mode<synchronous>, transform_indices = @transform_5, window_bounds = array<i64: 256, 256>}, {pipeline_mode = #tpu.pipeline_mode<synchronous>, transform_indices = @transform_6, window_bounds = array<i64: 1, 256>}, {pipeline_mode = #tpu.pipeline_mode<synchronous>, transform_indices = @transform_7, window_bounds = array<i64: 256, 128>}, {pipeline_mode = #tpu.pipeline_mode<synchronous>, transform_indices = @transform_8, window_bounds = array<i64: 1, 128>}, {pipeline_mode = #tpu.pipeline_mode<synchronous>, transform_indices = @transform_9, window_bounds = array<i64: 128, 128>}, {pipeline_mode = #tpu.pipeline_mode<synchronous>, transform_indices = @transform_10, window_bounds = array<i64: 1, 128>}, {pipeline_mode = #tpu.pipeline_mode<synchronous>, transform_indices = @transform_11, window_bounds = array<i64: 128, 128>}, {pipeline_mode = #tpu.pipeline_mode<synchronous>, transform_indices = @transform_12, window_bounds = array<i64: 1, 128>}, {transform_indices = @transform_13, window_bounds = array<i64: 256, 128>}]} {
    %c0_i32 = arith.constant 0 : i32
    %0 = arith.cmpi eq, %arg1, %c0_i32 : i32
    %1 = arith.extui %0 : i1 to i32
    %c0_i32_0 = arith.constant 0 : i32
    %2 = arith.cmpi ne, %1, %c0_i32_0 : i32
    scf.if %2 {
      %cst_9 = arith.constant 0.000000e+00 : f32
      %12 = vector.broadcast %cst_9 : f32 to vector<256x256xf32>
      %c0_10 = arith.constant 0 : index
      %c0_11 = arith.constant 0 : index
      %13 = vector.load %arg16[%c0_10, %c0_11] : memref<256x256xf32, #tpu.memory_space<vmem>>, vector<256x256xf32>
      tpu.vector_store %arg16[%c0_10, %c0_11], %12 {strides = array<i32>} : memref<256x256xf32, #tpu.memory_space<vmem>>, vector<256x256xf32>,
    } else {
    }
    %c0 = arith.constant 0 : index
    %c0_1 = arith.constant 0 : index
    %3 = vector.load %arg16[%c0, %c0_1] : memref<256x256xf32, #tpu.memory_space<vmem>>, vector<256x256xf32>
    %c0_2 = arith.constant 0 : index
    %c0_3 = arith.constant 0 : index
    %4 = vector.load %arg2[%c0_2, %c0_3] : memref<256x256xbf16, #tpu.memory_space<vmem>>, vector<256x256xbf16>
    %c0_4 = arith.constant 0 : index
    %c0_5 = arith.constant 0 : index
    %5 = vector.load %arg3[%c0_4, %c0_5] : memref<256x256xbf16, #tpu.memory_space<vmem>>, vector<256x256xbf16>
    %cst = arith.constant dense<0.000000e+00> : vector<256x256xf32>
    %6 = tpu.matmul %4, %5, %cst {dimension_numbers = #tpu.dot_dimension_numbers<[1], [0], [0], [1], [0, 0, 1, 1], [], []>} : vector<256x256xbf16>, vector<256x256xbf16>, vector<256x256xf32> -> vector<256x256xf32>
    %7 = arith.addf %3, %6 : vector<256x256xf32>
    %c0_6 = arith.constant 0 : index
    %c0_7 = arith.constant 0 : index
    %8 = vector.load %arg16[%c0_6, %c0_7] : memref<256x256xf32, #tpu.memory_space<vmem>>, vector<256x256xf32>
    tpu.vector_store %arg16[%c0_6, %c0_7], %7 {strides = array<i32>} : memref<256x256xf32, #tpu.memory_space<vmem>>, vector<256x256xf32>,
    %c1_i32 = arith.constant 1 : i32
    %9 = arith.cmpi eq, %arg1, %c1_i32 : i32
    %10 = arith.extui %9 : i1 to i32
    %c0_i32_8 = arith.constant 0 : i32
    %11 = arith.cmpi ne, %10, %c0_i32_8 : i32
    scf.if %11 {
      %c0_9 = arith.constant 0 : index
      %c0_10 = arith.constant 0 : index
      %12 = vector.load %arg4[%c0_9, %c0_10] : memref<256x256xf32, #tpu.memory_space<vmem>>, vector<256x256xf32>
      %c0_11 = arith.constant 0 : index
      %c0_12 = arith.constant 0 : index
      %13 = vector.load %arg16[%c0_11, %c0_12] : memref<256x256xf32, #tpu.memory_space<vmem>>, vector<256x256xf32>
      %c0_13 = arith.constant 0 : index
      %c0_14 = arith.constant 0 : index
      %14 = vector.load %arg5[%c0_13, %c0_14] : memref<256x1xf32, #tpu.memory_space<vmem>>, vector<256x1xf32>
      %15 = vector.broadcast %14 : vector<256x1xf32> to vector<256x256xf32>
      %16 = arith.mulf %13, %15 : vector<256x256xf32>
      %17 = arith.truncf %16 : vector<256x256xf32> to vector<256x256xbf16>
      %c0_15 = arith.constant 0 : index
      %c0_16 = arith.constant 0 : index
      %18 = vector.load %arg6[%c0_15, %c0_16] : memref<256x256xbf16, #tpu.memory_space<vmem>>, vector<256x256xbf16>
      %cst_17 = arith.constant dense<0.000000e+00> : vector<256x256xf32>
      %19 = tpu.matmul %17, %18, %cst_17 {dimension_numbers = #tpu.dot_dimension_numbers<[1], [0], [0], [1], [0, 0, 1, 1], [], []>} : vector<256x256xbf16>, vector<256x256xbf16>, vector<256x256xf32> -> vector<256x256xf32>
      %20 = arith.truncf %12 : vector<256x256xf32> to vector<256x256xbf16>
      %c0_18 = arith.constant 0 : index
      %c0_19 = arith.constant 0 : index
      %21 = vector.load %arg7[%c0_18, %c0_19] : memref<256x256xbf16, #tpu.memory_space<vmem>>, vector<256x256xbf16>
      %cst_20 = arith.constant dense<0.000000e+00> : vector<256x256xf32>
      %22 = tpu.matmul %20, %21, %cst_20 {dimension_numbers = #tpu.dot_dimension_numbers<[1], [0], [0], [1], [0, 0, 1, 1], [], []>} : vector<256x256xbf16>, vector<256x256xbf16>, vector<256x256xf32> -> vector<256x256xf32>
      %23 = arith.addf %19, %22 : vector<256x256xf32>
      %c0_21 = arith.constant 0 : index
      %c0_22 = arith.constant 0 : index
      %24 = vector.load %arg8[%c0_21, %c0_22] : memref<1x256xf32, #tpu.memory_space<vmem>>, vector<1x256xf32>
      %25 = vector.broadcast %24 : vector<1x256xf32> to vector<256x256xf32>
      %26 = arith.addf %23, %25 : vector<256x256xf32>
      %cst_23 = arith.constant 0.000000e+00 : f32
      %27 = vector.broadcast %cst_23 : f32 to vector<256x256xf32>
      %28 = arith.maximumf %26, %27 : vector<256x256xf32>
      %29 = arith.addf %28, %12 : vector<256x256xf32>
      %30 = arith.truncf %29 : vector<256x256xf32> to vector<256x256xbf16>
      %c0_24 = arith.constant 0 : index
      %c0_25 = arith.constant 0 : index
      %31 = vector.load %arg9[%c0_24, %c0_25] : memref<256x128xbf16, #tpu.memory_space<vmem>>, vector<256x128xbf16>
      %cst_26 = arith.constant dense<0.000000e+00> : vector<256x128xf32>
      %32 = tpu.matmul %30, %31, %cst_26 {dimension_numbers = #tpu.dot_dimension_numbers<[1], [0], [0], [1], [0, 0, 1, 1], [], []>} : vector<256x256xbf16>, vector<256x128xbf16>, vector<256x128xf32> -> vector<256x128xf32>
      %c0_27 = arith.constant 0 : index
      %c0_28 = arith.constant 0 : index
      %33 = vector.load %arg10[%c0_27, %c0_28] : memref<1x128xf32, #tpu.memory_space<vmem>>, vector<1x128xf32>
      %34 = vector.broadcast %33 : vector<1x128xf32> to vector<256x128xf32>
      %35 = arith.addf %32, %34 : vector<256x128xf32>
      %cst_29 = arith.constant 0.000000e+00 : f32
      %36 = vector.broadcast %cst_29 : f32 to vector<256x128xf32>
      %37 = arith.maximumf %35, %36 : vector<256x128xf32>
      %38 = arith.truncf %37 : vector<256x128xf32> to vector<256x128xbf16>
      %c0_30 = arith.constant 0 : index
      %c0_31 = arith.constant 0 : index
      %39 = vector.load %arg11[%c0_30, %c0_31] : memref<128x128xbf16, #tpu.memory_space<vmem>>, vector<128x128xbf16>
      %cst_32 = arith.constant dense<0.000000e+00> : vector<256x128xf32>
      %40 = tpu.matmul %38, %39, %cst_32 {dimension_numbers = #tpu.dot_dimension_numbers<[1], [0], [0], [1], [0, 0, 1, 1], [], []>} : vector<256x128xbf16>, vector<128x128xbf16>, vector<256x128xf32> -> vector<256x128xf32>
      %c0_33 = arith.constant 0 : index
      %c0_34 = arith.constant 0 : index
      %41 = vector.load %arg12[%c0_33, %c0_34] : memref<1x128xf32, #tpu.memory_space<vmem>>, vector<1x128xf32>
      %42 = vector.broadcast %41 : vector<1x128xf32> to vector<256x128xf32>
      %43 = arith.addf %40, %42 : vector<256x128xf32>
      %cst_35 = arith.constant 0.000000e+00 : f32
      %44 = vector.broadcast %cst_35 : f32 to vector<256x128xf32>
      %45 = arith.maximumf %43, %44 : vector<256x128xf32>
      %46 = arith.truncf %45 : vector<256x128xf32> to vector<256x128xbf16>
      %c0_36 = arith.constant 0 : index
      %c0_37 = arith.constant 0 : index
      %47 = vector.load %arg13[%c0_36, %c0_37] : memref<128x128xbf16, #tpu.memory_space<vmem>>, vector<128x128xbf16>
      %cst_38 = arith.constant dense<0.000000e+00> : vector<256x128xf32>
      %48 = tpu.matmul %46, %47, %cst_38 {dimension_numbers = #tpu.dot_dimension_numbers<[1], [0], [0], [1], [0, 0, 1, 1], [], []>} : vector<256x128xbf16>, vector<128x128xbf16>, vector<256x128xf32> -> vector<256x128xf32>
      %c0_39 = arith.constant 0 : index
      %c0_40 = arith.constant 0 : index
      %49 = vector.load %arg14[%c0_39, %c0_40] : memref<1x128xf32, #tpu.memory_space<vmem>>, vector<1x128xf32>
      %50 = vector.broadcast %49 : vector<1x128xf32> to vector<256x128xf32>
      %51 = arith.addf %48, %50 : vector<256x128xf32>
      %c0_41 = arith.constant 0 : index
      %c0_42 = arith.constant 0 : index
      %52 = vector.load %arg15[%c0_41, %c0_42] : memref<256x128xf32, #tpu.memory_space<vmem>>, vector<256x128xf32>
      tpu.vector_store %arg15[%c0_41, %c0_42], %51 {strides = array<i32>} : memref<256x128xf32, #tpu.memory_space<vmem>>, vector<256x128xf32>,
    } else {
    }
    return
  }
  func.func @transform_0(%arg0: i32, %arg1: i32) -> (i32, i32) {
    %c0_i32 = arith.constant 0 : i32
    return %arg0, %arg1 : i32, i32
  }
  func.func @transform_1(%arg0: i32, %arg1: i32) -> (i32, i32) {
    %c0_i32 = arith.constant 0 : i32
    %c0_i32_0 = arith.constant 0 : i32
    return %arg1, %c0_i32 : i32, i32
  }
  func.func @transform_2(%arg0: i32, %arg1: i32) -> (i32, i32) {
    %c0_i32 = arith.constant 0 : i32
    %c0_i32_0 = arith.constant 0 : i32
    return %arg0, %c0_i32 : i32, i32
  }
  func.func @transform_3(%arg0: i32, %arg1: i32) -> (i32, i32) {
    %c0_i32 = arith.constant 0 : i32
    %c0_i32_0 = arith.constant 0 : i32
    return %arg0, %c0_i32 : i32, i32
  }
  func.func @transform_4(%arg0: i32, %arg1: i32) -> (i32, i32) {
    %c0_i32 = arith.constant 0 : i32
    %c0_i32_0 = arith.constant 0 : i32
    %c0_i32_1 = arith.constant 0 : i32
    return %c0_i32, %c0_i32_0 : i32, i32
  }
  func.func @transform_5(%arg0: i32, %arg1: i32) -> (i32, i32) {
    %c0_i32 = arith.constant 0 : i32
    %c0_i32_0 = arith.constant 0 : i32
    %c0_i32_1 = arith.constant 0 : i32
    return %c0_i32, %c0_i32_0 : i32, i32
  }
  func.func @transform_6(%arg0: i32, %arg1: i32) -> (i32, i32) {
    %c0_i32 = arith.constant 0 : i32
    %c0_i32_0 = arith.constant 0 : i32
    %c0_i32_1 = arith.constant 0 : i32
    return %c0_i32, %c0_i32_0 : i32, i32
  }
  func.func @transform_7(%arg0: i32, %arg1: i32) -> (i32, i32) {
    %c0_i32 = arith.constant 0 : i32
    %c0_i32_0 = arith.constant 0 : i32
    %c0_i32_1 = arith.constant 0 : i32
    return %c0_i32, %c0_i32_0 : i32, i32
  }
  func.func @transform_8(%arg0: i32, %arg1: i32) -> (i32, i32) {
    %c0_i32 = arith.constant 0 : i32
    %c0_i32_0 = arith.constant 0 : i32
    %c0_i32_1 = arith.constant 0 : i32
    return %c0_i32, %c0_i32_0 : i32, i32
  }
  func.func @transform_9(%arg0: i32, %arg1: i32) -> (i32, i32) {
    %c0_i32 = arith.constant 0 : i32
    %c0_i32_0 = arith.constant 0 : i32
    %c0_i32_1 = arith.constant 0 : i32
    return %c0_i32, %c0_i32_0 : i32, i32
  }
  func.func @transform_10(%arg0: i32, %arg1: i32) -> (i32, i32) {
    %c0_i32 = arith.constant 0 : i32
    %c0_i32_0 = arith.constant 0 : i32
    %c0_i32_1 = arith.constant 0 : i32
    return %c0_i32, %c0_i32_0 : i32, i32
  }
  func.func @transform_11(%arg0: i32, %arg1: i32) -> (i32, i32) {
    %c0_i32 = arith.constant 0 : i32
    %c0_i32_0 = arith.constant 0 : i32
    %c0_i32_1 = arith.constant 0 : i32
    return %c0_i32, %c0_i32_0 : i32, i32
  }
  func.func @transform_12(%arg0: i32, %arg1: i32) -> (i32, i32) {
    %c0_i32 = arith.constant 0 : i32
    %c0_i32_0 = arith.constant 0 : i32
    %c0_i32_1 = arith.constant 0 : i32
    return %c0_i32, %c0_i32_0 : i32, i32
  }
  func.func @transform_13(%arg0: i32, %arg1: i32) -> (i32, i32) {
    %c0_i32 = arith.constant 0 : i32
    %c0_i32_0 = arith.constant 0 : i32
    return %arg0, %c0_i32 : i32, i32
  }
}

</mosaic_0001>

<llo_original>
// kernel: tpu_custom_call.1
$region0: #{tpu_custom_call.1}
  #allocation0 [shape = 'u32[]', space=smem, size = 0x4, offset = 0x4, fixed_abs, tag = 'smem constant byte address 0x4 - core index']
  #allocation1 [shape = 'u32[144,128]{1,0:T(1,128)}', space=vmem, size = 0x12000, scoped, tag = 'internal scratch']
  #allocation2 [shape = 'f32[256,256]{1,0:T(8,128)}', space=vmem, size = 0x40000, scoped, tag = 'scratch operand']
  %s0 = inlined_call_operand.hbm [shape: bf16[512,512], index: 0, kind: input, shape index: {}]
  %s1 = inlined_call_operand.vmem [shape: bf16[512,256], index: 1, kind: input, shape index: {}]
  %s2 = inlined_call_operand.hbm [shape: f32[512,256], index: 2, kind: input, shape index: {}]
  %s3 = inlined_call_operand.vmem [shape: f32[512,1], index: 3, kind: input, shape index: {}]
  %s4 = inlined_call_operand.hbm [shape: bf16[256,256], index: 4, kind: input, shape index: {}]
  %s5 = inlined_call_operand.hbm [shape: bf16[256,256], index: 5, kind: input, shape index: {}]
  %s6 = inlined_call_operand.vmem [shape: f32[1,256], index: 6, kind: input, shape index: {}]
  %s7 = inlined_call_operand.hbm [shape: bf16[256,128], index: 7, kind: input, shape index: {}]
  %s8 = inlined_call_operand.vmem [shape: f32[1,128], index: 8, kind: input, shape index: {}]
  %s9 = inlined_call_operand.hbm [shape: bf16[128,128], index: 9, kind: input, shape index: {}]
  %s10 = inlined_call_operand.vmem [shape: f32[1,128], index: 10, kind: input, shape index: {}]
  %s11 = inlined_call_operand.hbm [shape: bf16[128,128], index: 11, kind: input, shape index: {}]
  %s12 = inlined_call_operand.vmem [shape: f32[1,128], index: 12, kind: input, shape index: {}]
  %s13 = inlined_call_operand.hbm [shape: f32[512,128], index: 13, kind: output, shape index: {}]
  %s14 = sld [smem:[#allocation0]]
  $region121: #{tpu_custom_call.1} parent=0
    _
  %s16 = ssub.s32 1, %s14
  %s17 = scalar_select 0, %s16, %s14
  $region1: #{tpu_custom_call.1} parent=0
    #allocation3 [shape = 'u8[262144]{0}', space=vmem, size = 0x40000, scoped, tag = 'input window, operand 0']
    #allocation4 [shape = 's32[2]{0}', space=sflag, size = 0x8, scoped, tag = 'scoped memory for tpu_custom_call.1']
    #allocation5 [shape = 's32[2]{0}', space=sflag, size = 0x8, scoped, tag = 'scoped memory for tpu_custom_call.1']
    #allocation6 [shape = 'u8[524288]{0}', space=vmem, size = 0x80000, scoped, tag = 'input window, operand 2']
    #allocation7 [shape = 's32[2]{0}', space=sflag, size = 0x8, scoped, tag = 'scoped memory for tpu_custom_call.1']
    #allocation8 [shape = 'u8[131072]{0}', space=vmem, size = 0x20000, scoped, tag = 'input window, operand 4, single buffered']
    #allocation9 [shape = 'u8[131072]{0}', space=vmem, size = 0x20000, scoped, tag = 'input window, operand 5, single buffered']
    #allocation10 [shape = 's32[1]{0}', space=sflag, size = 0x4, scoped, tag = 'scoped memory for tpu_custom_call.1']
    #allocation11 [shape = 'u8[65536]{0}', space=vmem, size = 0x10000, scoped, tag = 'input window, operand 7, single buffered']
    #allocation12 [shape = 'u8[32768]{0}', space=vmem, size = 0x8000, scoped, tag = 'input window, operand 9, single buffered']
    #allocation13 [shape = 's32[1]{0}', space=sflag, size = 0x4, scoped, tag = 'scoped memory for tpu_custom_call.1']
    #allocation14 [shape = 'u8[32768]{0}', space=vmem, size = 0x8000, scoped, tag = 'input window, operand 11, single buffered']
    #allocation15 [shape = 'u8[262144]{0}', space=vmem, size = 0x40000, scoped, tag = 'output window, operand 0']
    %18 = vsyncpa [#allocation4], 0
    %s19 = scalar_lea.sflag [#allocation4], 1
    %20 = vsyncpa %s19, 0
    %21 = vsyncpa [#allocation7], 0
    %s22 = scalar_lea.sflag [#allocation7], 1
    %23 = vsyncpa %s22, 0
    %24 = vsyncpa [#allocation10], 0
    %25 = vsyncpa [#allocation13], 0
    %26 = vsyncpa [#allocation5], 0
    %s27 = scalar_lea.sflag [#allocation5], 1
    %28 = vsyncpa %s27, 0
    loop: start=0, step=1, limit=6
    $region2: #{tpu_custom_call.1} parent=1 // loop_pre_header
      _
    $region3: #{tpu_custom_call.1} parent=1 // loop_header
      %s30 = sphi 0, %s34
      %p31 = scmp.ge.s32.totalorder %s30, 6
      %s37 = sphi 0, %s49
      %s38 = sphi 0, %s45
      %s39 = sphi 0, %s37
      %s40 = sphi 0, %s38
      %s41 = sphi 0, %s39
      %s42 = sphi 0, %s40
      %s54 = sphi 0, %s56
      %s57 = sphi 0, %s54
      %s58 = sphi 0, %s57
      %s74 = sphi 0, %s58
      %s80 = sphi 0, %s82
      %s83 = sphi 0, %s80
      %s84 = sphi 0, %s83
      %s100 = sphi 0, %s84
      %s106 = sphi 0, %s108
      %s109 = sphi 0, %s106
      %s110 = sphi 0, %s109
      %s126 = sphi 0, %s110
      %s132 = sphi 0, %s134
      %s135 = sphi 0, %s132
      %s136 = sphi 0, %s135
      %s152 = sphi 0, %s136
      %s156 = sphi 0, %s156
      %s158 = sphi 0, %s156
      %s159 = sphi 0, %s158
      %s173 = sphi 0, %s159
      %s177 = sphi 0, %s177
      %s179 = sphi 0, %s177
      %s180 = sphi 0, %s179
      %s194 = sphi 0, %s180
      %s198 = sphi 0, %s198
      %s200 = sphi 0, %s198
      %s201 = sphi 0, %s200
      %s215 = sphi 0, %s201
      %s219 = sphi 0, %s219
      %s221 = sphi 0, %s219
      %s222 = sphi 0, %s221
      %s236 = sphi 0, %s222
      %s240 = sphi 0, %s240
      %s242 = sphi 0, %s240
      %s243 = sphi 0, %s242
      %s257 = sphi 0, %s243
      %s261 = sphi 0, %s261
      %s263 = sphi 0, %s261
      %s264 = sphi 0, %s263
      %s278 = sphi 0, %s264
      %s282 = sphi 0, %s282
      %s284 = sphi 0, %s282
      %s285 = sphi 0, %s284
      %s299 = sphi 0, %s285
      %s303 = sphi 0, %s303
      %s305 = sphi 0, %s303
      %s306 = sphi 0, %s305
      %s320 = sphi 0, %s306
      %s324 = sphi 0, %s324
      %s326 = sphi 0, %s324
      %s327 = sphi 0, %s326
      %s341 = sphi 0, %s327
      %s347 = sphi 0, %s349
      %s350 = sphi 0, %s347
      %s351 = sphi 0, %s350
      %s367 = sphi 0, %s351
    $region4: #{tpu_custom_call.1} parent=1 // loop_header_branch
      %33 = sbr.rel (%p31) target = $region8
    $region5: #{tpu_custom_call.1} parent=1 // loop_body
      %s35 = ssub.s32 %s30, 1
      %s36 = ssub.s32 %s30, 2
      %s43 = sadd.s32 1, %s38
      %p44 = scmp.ge.s32.totalorder %s43, 2
      %s45 = scalar_select %p44, 0, %s43
      %s46 = sadd.s32 1, %s37
      %s47 = scalar_select %p44, %s46, %s37
      %p48 = scmp.ge.s32.totalorder %s47, 2
      %s49 = scalar_select %p48, 0, %s47
      %s50 = ssub.s32 %s37, %s49
      %s51 = ssub.s32 %s38, %s45
      %s52 = sor.u32 %s50, %s51
      %p53 = scmp.eq.s32.totalorder %s52, 0
      %s55 = sadd.s32 %s54, 1
      %s56 = scalar_select %p53, %s54, %s55
      %p59 = pneg %p53
      %p60 = scmp.eq.s32.totalorder %s30, 3
      %p61 = por %p59, %p60
      %p62 = scmp.ne.s32.totalorder %s54, %s57
      %p63 = scmp.eq.s32.totalorder %s30, 0
      %p64 = por %p62, %p63
      %p65 = scmp.ne.s32.totalorder %s54, %s57
      %p66 = scmp.eq.s32.totalorder %s35, 3
      %p67 = por %p65, %p66
      %p68 = scmp.ne.s32.totalorder %s57, %s58
      %p69 = scmp.eq.s32.totalorder %s35, 0
      %p70 = por %p68, %p69
      %p71 = scmp.ne.s32.totalorder %s57, %s58
      %p72 = scmp.eq.s32.totalorder %s36, 3
      %p73 = por %p71, %p72
      %p75 = scmp.ne.s32.totalorder %s58, %s74
      %p76 = scmp.eq.s32.totalorder %s36, 0
      %p77 = por %p75, %p76
      %s78 = ssub.s32 %s38, %s45
      %p79 = scmp.eq.s32.totalorder %s78, 0
      %s81 = sadd.s32 %s80, 1
      %s82 = scalar_select %p79, %s80, %s81
      %p85 = pneg %p79
      %p86 = scmp.eq.s32.totalorder %s30, 3
      %p87 = por %p85, %p86
      %p88 = scmp.ne.s32.totalorder %s80, %s83
      %p89 = scmp.eq.s32.totalorder %s30, 0
      %p90 = por %p88, %p89
      %p91 = scmp.ne.s32.totalorder %s80, %s83
      %p92 = scmp.eq.s32.totalorder %s35, 3
      %p93 = por %p91, %p92
      %p94 = scmp.ne.s32.totalorder %s83, %s84
      %p95 = scmp.eq.s32.totalorder %s35, 0
      %p96 = por %p94, %p95
      %p97 = scmp.ne.s32.totalorder %s83, %s84
      %p98 = scmp.eq.s32.totalorder %s36, 3
      %p99 = por %p97, %p98
      %p101 = scmp.ne.s32.totalorder %s84, %s100
      %p102 = scmp.eq.s32.totalorder %s36, 0
      %p103 = por %p101, %p102
      %s104 = ssub.s32 %s37, %s49
      %p105 = scmp.eq.s32.totalorder %s104, 0
      %s107 = sadd.s32 %s106, 1
      %s108 = scalar_select %p105, %s106, %s107
      %p111 = pneg %p105
      %p112 = scmp.eq.s32.totalorder %s30, 3
      %p113 = por %p111, %p112
      %p114 = scmp.ne.s32.totalorder %s106, %s109
      %p115 = scmp.eq.s32.totalorder %s30, 0
      %p116 = por %p114, %p115
      %p117 = scmp.ne.s32.totalorder %s106, %s109
      %p118 = scmp.eq.s32.totalorder %s35, 3
      %p119 = por %p117, %p118
      %p120 = scmp.ne.s32.totalorder %s109, %s110
      %p121 = scmp.eq.s32.totalorder %s35, 0
      %p122 = por %p120, %p121
      %p123 = scmp.ne.s32.totalorder %s109, %s110
      %p124 = scmp.eq.s32.totalorder %s36, 3
      %p125 = por %p123, %p124
      %p127 = scmp.ne.s32.totalorder %s110, %s126
      %p128 = scmp.eq.s32.totalorder %s36, 0
      %p129 = por %p127, %p128
      %s130 = ssub.s32 %s37, %s49
      %p131 = scmp.eq.s32.totalorder %s130, 0
      %s133 = sadd.s32 %s132, 1
      %s134 = scalar_select %p131, %s132, %s133
      %p137 = pneg %p131
      %p138 = scmp.eq.s32.totalorder %s30, 3
      %p139 = por %p137, %p138
      %p140 = scmp.ne.s32.totalorder %s132, %s135
      %p141 = scmp.eq.s32.totalorder %s30, 0
      %p142 = por %p140, %p141
      %p143 = scmp.ne.s32.totalorder %s132, %s135
      %p144 = scmp.eq.s32.totalorder %s35, 3
      %p145 = por %p143, %p144
      %p146 = scmp.ne.s32.totalorder %s135, %s136
      %p147 = scmp.eq.s32.totalorder %s35, 0
      %p148 = por %p146, %p147
      %p149 = scmp.ne.s32.totalorder %s135, %s136
      %p150 = scmp.eq.s32.totalorder %s36, 3
      %p151 = por %p149, %p150
      %p153 = scmp.ne.s32.totalorder %s136, %s152
      %p154 = scmp.eq.s32.totalorder %s36, 0
      %p155 = por %p153, %p154
      %s157 = sadd.s32 %s156, 1
      %p160 = scmp.eq.s32.totalorder %s30, 3
      %p161 = scmp.ne.s32.totalorder %s156, %s158
      %p162 = scmp.eq.s32.totalorder %s30, 0
      %p163 = por %p161, %p162
      %p164 = scmp.ne.s32.totalorder %s156, %s158
      %p165 = scmp.eq.s32.totalorder %s35, 3
      %p166 = por %p164, %p165
      %p167 = scmp.ne.s32.totalorder %s158, %s159
      %p168 = scmp.eq.s32.totalorder %s35, 0
      %p169 = por %p167, %p168
      %p170 = scmp.ne.s32.totalorder %s158, %s159
      %p171 = scmp.eq.s32.totalorder %s36, 3
      %p172 = por %p170, %p171
      %p174 = scmp.ne.s32.totalorder %s159, %s173
      %p175 = scmp.eq.s32.totalorder %s36, 0
      %p176 = por %p174, %p175
      %s178 = sadd.s32 %s177, 1
      %p181 = scmp.eq.s32.totalorder %s30, 3
      %p182 = scmp.ne.s32.totalorder %s177, %s179
      %p183 = scmp.eq.s32.totalorder %s30, 0
      %p184 = por %p182, %p183
      %p185 = scmp.ne.s32.totalorder %s177, %s179
      %p186 = scmp.eq.s32.totalorder %s35, 3
      %p187 = por %p185, %p186
      %p188 = scmp.ne.s32.totalorder %s179, %s180
      %p189 = scmp.eq.s32.totalorder %s35, 0
      %p190 = por %p188, %p189
      %p191 = scmp.ne.s32.totalorder %s179, %s180
      %p192 = scmp.eq.s32.totalorder %s36, 3
      %p193 = por %p191, %p192
      %p195 = scmp.ne.s32.totalorder %s180, %s194
      %p196 = scmp.eq.s32.totalorder %s36, 0
      %p197 = por %p195, %p196
      %s199 = sadd.s32 %s198, 1
      %p202 = scmp.eq.s32.totalorder %s30, 3
      %p203 = scmp.ne.s32.totalorder %s198, %s200
      %p204 = scmp.eq.s32.totalorder %s30, 0
      %p205 = por %p203, %p204
      %p206 = scmp.ne.s32.totalorder %s198, %s200
      %p207 = scmp.eq.s32.totalorder %s35, 3
      %p208 = por %p206, %p207
      %p209 = scmp.ne.s32.totalorder %s200, %s201
      %p210 = scmp.eq.s32.totalorder %s35, 0
      %p211 = por %p209, %p210
      %p212 = scmp.ne.s32.totalorder %s200, %s201
      %p213 = scmp.eq.s32.totalorder %s36, 3
      %p214 = por %p212, %p213
      %p216 = scmp.ne.s32.totalorder %s201, %s215
      %p217 = scmp.eq.s32.totalorder %s36, 0
      %p218 = por %p216, %p217
      %s220 = sadd.s32 %s219, 1
      %p223 = scmp.eq.s32.totalorder %s30, 3
      %p224 = scmp.ne.s32.totalorder %s219, %s221
      %p225 = scmp.eq.s32.totalorder %s30, 0
      %p226 = por %p224, %p225
      %p227 = scmp.ne.s32.totalorder %s219, %s221
      %p228 = scmp.eq.s32.totalorder %s35, 3
      %p229 = por %p227, %p228
      %p230 = scmp.ne.s32.totalorder %s221, %s222
      %p231 = scmp.eq.s32.totalorder %s35, 0
      %p232 = por %p230, %p231
      %p233 = scmp.ne.s32.totalorder %s221, %s222
      %p234 = scmp.eq.s32.totalorder %s36, 3
      %p235 = por %p233, %p234
      %p237 = scmp.ne.s32.totalorder %s222, %s236
      %p238 = scmp.eq.s32.totalorder %s36, 0
      %p239 = por %p237, %p238
      %s241 = sadd.s32 %s240, 1
      %p244 = scmp.eq.s32.totalorder %s30, 3
      %p245 = scmp.ne.s32.totalorder %s240, %s242
      %p246 = scmp.eq.s32.totalorder %s30, 0
      %p247 = por %p245, %p246
      %p248 = scmp.ne.s32.totalorder %s240, %s242
      %p249 = scmp.eq.s32.totalorder %s35, 3
      %p250 = por %p248, %p249
      %p251 = scmp.ne.s32.totalorder %s242, %s243
      %p252 = scmp.eq.s32.totalorder %s35, 0
      %p253 = por %p251, %p252
      %p254 = scmp.ne.s32.totalorder %s242, %s243
      %p255 = scmp.eq.s32.totalorder %s36, 3
      %p256 = por %p254, %p255
      %p258 = scmp.ne.s32.totalorder %s243, %s257
      %p259 = scmp.eq.s32.totalorder %s36, 0
      %p260 = por %p258, %p259
      %s262 = sadd.s32 %s261, 1
      %p265 = scmp.eq.s32.totalorder %s30, 3
      %p266 = scmp.ne.s32.totalorder %s261, %s263
      %p267 = scmp.eq.s32.totalorder %s30, 0
      %p268 = por %p266, %p267
      %p269 = scmp.ne.s32.totalorder %s261, %s263
      %p270 = scmp.eq.s32.totalorder %s35, 3
      %p271 = por %p269, %p270
      %p272 = scmp.ne.s32.totalorder %s263, %s264
      %p273 = scmp.eq.s32.totalorder %s35, 0
      %p274 = por %p272, %p273
      %p275 = scmp.ne.s32.totalorder %s263, %s264
      %p276 = scmp.eq.s32.totalorder %s36, 3
      %p277 = por %p275, %p276
      %p279 = scmp.ne.s32.totalorder %s264, %s278
      %p280 = scmp.eq.s32.totalorder %s36, 0
      %p281 = por %p279, %p280
      %s283 = sadd.s32 %s282, 1
      %p286 = scmp.eq.s32.totalorder %s30, 3
      %p287 = scmp.ne.s32.totalorder %s282, %s284
      %p288 = scmp.eq.s32.totalorder %s30, 0
      %p289 = por %p287, %p288
      %p290 = scmp.ne.s32.totalorder %s282, %s284
      %p291 = scmp.eq.s32.totalorder %s35, 3
      %p292 = por %p290, %p291
      %p293 = scmp.ne.s32.totalorder %s284, %s285
      %p294 = scmp.eq.s32.totalorder %s35, 0
      %p295 = por %p293, %p294
      %p296 = scmp.ne.s32.totalorder %s284, %s285
      %p297 = scmp.eq.s32.totalorder %s36, 3
      %p298 = por %p296, %p297
      %p300 = scmp.ne.s32.totalorder %s285, %s299
      %p301 = scmp.eq.s32.totalorder %s36, 0
      %p302 = por %p300, %p301
      %s304 = sadd.s32 %s303, 1
      %p307 = scmp.eq.s32.totalorder %s30, 3
      %p308 = scmp.ne.s32.totalorder %s303, %s305
      %p309 = scmp.eq.s32.totalorder %s30, 0
      %p310 = por %p308, %p309
      %p311 = scmp.ne.s32.totalorder %s303, %s305
      %p312 = scmp.eq.s32.totalorder %s35, 3
      %p313 = por %p311, %p312
      %p314 = scmp.ne.s32.totalorder %s305, %s306
      %p315 = scmp.eq.s32.totalorder %s35, 0
      %p316 = por %p314, %p315
      %p317 = scmp.ne.s32.totalorder %s305, %s306
      %p318 = scmp.eq.s32.totalorder %s36, 3
      %p319 = por %p317, %p318
      %p321 = scmp.ne.s32.totalorder %s306, %s320
      %p322 = scmp.eq.s32.totalorder %s36, 0
      %p323 = por %p321, %p322
      %s325 = sadd.s32 %s324, 1
      %p328 = scmp.eq.s32.totalorder %s30, 3
      %p329 = scmp.ne.s32.totalorder %s324, %s326
      %p330 = scmp.eq.s32.totalorder %s30, 0
      %p331 = por %p329, %p330
      %p332 = scmp.ne.s32.totalorder %s324, %s326
      %p333 = scmp.eq.s32.totalorder %s35, 3
      %p334 = por %p332, %p333
      %p335 = scmp.ne.s32.totalorder %s326, %s327
      %p336 = scmp.eq.s32.totalorder %s35, 0
      %p337 = por %p335, %p336
      %p338 = scmp.ne.s32.totalorder %s326, %s327
      %p339 = scmp.eq.s32.totalorder %s36, 3
      %p340 = por %p338, %p339
      %p342 = scmp.ne.s32.totalorder %s327, %s341
      %p343 = scmp.eq.s32.totalorder %s36, 0
      %p344 = por %p342, %p343
      %s345 = ssub.s32 %s37, %s49
      %p346 = scmp.eq.s32.totalorder %s345, 0
      %s348 = sadd.s32 %s347, 1
      %s349 = scalar_select %p346, %s347, %s348
      %p352 = pneg %p346
      %p353 = scmp.eq.s32.totalorder %s30, 3
      %p354 = por %p352, %p353
      %p355 = scmp.ne.s32.totalorder %s347, %s350
      %p356 = scmp.eq.s32.totalorder %s30, 0
      %p357 = por %p355, %p356
      %p358 = scmp.ne.s32.totalorder %s347, %s350
      %p359 = scmp.eq.s32.totalorder %s35, 3
      %p360 = por %p358, %p359
      %p361 = scmp.ne.s32.totalorder %s350, %s351
      %p362 = scmp.eq.s32.totalorder %s35, 0
      %p363 = por %p361, %p362
      %p364 = scmp.ne.s32.totalorder %s350, %s351
      %p365 = scmp.eq.s32.totalorder %s36, 3
      %p366 = por %p364, %p365
      %p368 = scmp.ne.s32.totalorder %s351, %s367
      %p369 = scmp.eq.s32.totalorder %s36, 0
      %p370 = por %p368, %p369
      %p371 = scmp.le.s32.totalorder 1, %s30
      %p372 = scmp.lt.s32.totalorder %s30, 5
      %p373 = pnand %p371, %p372
      %p374 = pneg %p373
      // Predicated region
      $region9: #{tpu_custom_call.1} parent=5 // pred_check
        _
      $region10: #{tpu_custom_call.1} parent=5 // pred_check_branch
        %376 = sbr.rel (%p373) target = $region12
      $region11: #{tpu_custom_call.1} parent=5 // pred_region
        %s377 = ssub.s32 %s30, 1
        // Predicated region
        $region13: #{tpu_custom_call.1} parent=11 // pred_check
          %p378 = pneg %p169
        $region14: #{tpu_custom_call.1} parent=11 // pred_check_branch
          %380 = sbr.rel (%p378) target = $region16
        $region15: #{tpu_custom_call.1} parent=11 // pred_region
          %s382 = ssub.s32 4096, 4096
          %383 = vsyncadd [#allocation7], %s382
          %s384 = sshll.u32 [#allocation8], 4
          %s385 = int_to_ptr.vmem [resolvable:$true] %s384
          %390 = dma.hbm_to_vmem [thread:$0]  %s4, 4096, %s385, [#allocation7], 128, 128, 8
        $region16: #{tpu_custom_call.1} parent=11 // pred_fallthru
          _
        // Predicated region
        $region17: #{tpu_custom_call.1} parent=11 // pred_check
          %p391 = pneg %p190
        $region18: #{tpu_custom_call.1} parent=11 // pred_check_branch
          %393 = sbr.rel (%p391) target = $region20
        $region19: #{tpu_custom_call.1} parent=11 // pred_region
          %s395 = ssub.s32 4096, 4096
          %396 = vsyncadd [#allocation10], %s395
          %s397 = sshll.u32 [#allocation9], 4
          %s398 = int_to_ptr.vmem [resolvable:$true] %s397
          %403 = dma.hbm_to_vmem [thread:$0]  %s5, 4096, %s398, [#allocation10], 128, 128, 8
        $region20: #{tpu_custom_call.1} parent=11 // pred_fallthru
          _
        // Predicated region
        $region21: #{tpu_custom_call.1} parent=11 // pred_check
          %p404 = pneg %p211
        $region22: #{tpu_custom_call.1} parent=11 // pred_check_branch
          %406 = sbr.rel (%p404) target = $region24
        $region23: #{tpu_custom_call.1} parent=11 // pred_region
          _
        $region24: #{tpu_custom_call.1} parent=11 // pred_fallthru
          _
        // Predicated region
        $region25: #{tpu_custom_call.1} parent=11 // pred_check
          %p407 = pneg %p232
        $region26: #{tpu_custom_call.1} parent=11 // pred_check_branch
          %409 = sbr.rel (%p407) target = $region28
        $region27: #{tpu_custom_call.1} parent=11 // pred_region
          %s411 = ssub.s32 2048, 2048
          %412 = vsyncadd [#allocation10], %s411
          %s413 = sshll.u32 [#allocation11], 4
          %s414 = int_to_ptr.vmem [resolvable:$true] %s413
          %419 = dma.hbm_to_vmem [thread:$0]  %s7, 2048, %s414, [#allocation10], 64, 64, 4
        $region28: #{tpu_custom_call.1} parent=11 // pred_fallthru
          _
        // Predicated region
        $region29: #{tpu_custom_call.1} parent=11 // pred_check
          %p420 = pneg %p253
        $region30: #{tpu_custom_call.1} parent=11 // pred_check_branch
          %422 = sbr.rel (%p420) target = $region32
        $region31: #{tpu_custom_call.1} parent=11 // pred_region
          _
        $region32: #{tpu_custom_call.1} parent=11 // pred_fallthru
          _
        // Predicated region
        $region33: #{tpu_custom_call.1} parent=11 // pred_check
          %p423 = pneg %p274
        $region34: #{tpu_custom_call.1} parent=11 // pred_check_branch
          %425 = sbr.rel (%p423) target = $region36
        $region35: #{tpu_custom_call.1} parent=11 // pred_region
          %s427 = ssub.s32 1024, 1024
          %428 = vsyncadd [#allocation13], %s427
          %s429 = sshll.u32 [#allocation12], 4
          %s430 = int_to_ptr.vmem [resolvable:$true] %s429
          %435 = dma.hbm_to_vmem [thread:$0]  %s9, 1024, %s430, [#allocation13], 64, 64, 4
        $region36: #{tpu_custom_call.1} parent=11 // pred_fallthru
          _
        // Predicated region
        $region37: #{tpu_custom_call.1} parent=11 // pred_check
          %p436 = pneg %p295
        $region38: #{tpu_custom_call.1} parent=11 // pred_check_branch
          %438 = sbr.rel (%p436) target = $region40
        $region39: #{tpu_custom_call.1} parent=11 // pred_region
          _
        $region40: #{tpu_custom_call.1} parent=11 // pred_fallthru
          _
        // Predicated region
        $region41: #{tpu_custom_call.1} parent=11 // pred_check
          %p439 = pneg %p316
        $region42: #{tpu_custom_call.1} parent=11 // pred_check_branch
          %441 = sbr.rel (%p439) target = $region44
        $region43: #{tpu_custom_call.1} parent=11 // pred_region
          %s443 = ssub.s32 1024, 1024
          %444 = vsyncadd [#allocation13], %s443
          %s445 = sshll.u32 [#allocation14], 4
          %s446 = int_to_ptr.vmem [resolvable:$true] %s445
          %451 = dma.hbm_to_vmem [thread:$0]  %s11, 1024, %s446, [#allocation13], 64, 64, 4
        $region44: #{tpu_custom_call.1} parent=11 // pred_fallthru
          _
        // Predicated region
        $region45: #{tpu_custom_call.1} parent=11 // pred_check
          %p452 = pneg %p337
        $region46: #{tpu_custom_call.1} parent=11 // pred_check_branch
          %454 = sbr.rel (%p452) target = $region48
        $region47: #{tpu_custom_call.1} parent=11 // pred_region
          _
        $region48: #{tpu_custom_call.1} parent=11 // pred_fallthru
          _
      $region12: #{tpu_custom_call.1} parent=5 // pred_fallthru
        _
      %p455 = scmp.lt.s32.totalorder %s30, 4
      // Predicated region
      $region49: #{tpu_custom_call.1} parent=5 // pred_check
        %p456 = pneg %p455
      $region50: #{tpu_custom_call.1} parent=5 // pred_check_branch
        %458 = sbr.rel (%p456) target = $region52
      $region51: #{tpu_custom_call.1} parent=5 // pred_region
        // Predicated region
        $region53: #{tpu_custom_call.1} parent=51 // pred_check
          %p459 = pneg %p64
        $region54: #{tpu_custom_call.1} parent=51 // pred_check_branch
          %461 = sbr.rel (%p459) target = $region56
        $region55: #{tpu_custom_call.1} parent=51 // pred_region
          %s462 = sand.u32 %s54, 1
          %s463 = scalar_lea.sflag [#allocation4], %s462
          %s464 = sand.u32 %s54, 1
          %s465 = smul.addr %s464, 256
          %s466 = scalar_lea.vmem [#allocation3], %s465
          %s467 = smul.u32 32, %s37
          %s468 = smul.u32 2, %s38
          %s470 = ssub.s32 4096, 4096
          %471 = vsyncadd %s463, %s470
          %s472 = smul.addr %s467, 4
          %s473 = sadd.s32 %s468, %s472
          %s474 = smul.addr %s473, 64
          %s475 = scalar_lea.hbm %s0, %s474
          %s476 = sshll.u32 %s466, 4
          %s477 = int_to_ptr.vmem [resolvable:$true] %s476
          %482 = dma.hbm_to_vmem [thread:$0]  %s475, 4096, %s477, %s463, 256, 128, 8
        $region56: #{tpu_custom_call.1} parent=51 // pred_fallthru
          _
        // Predicated region
        $region57: #{tpu_custom_call.1} parent=51 // pred_check
          %p483 = pneg %p90
        $region58: #{tpu_custom_call.1} parent=51 // pred_check_branch
          %485 = sbr.rel (%p483) target = $region60
        $region59: #{tpu_custom_call.1} parent=51 // pred_region
          %s486 = smul.u32 32, %s38
          %p487 = scmp.lt.s32.totalorder %s486, 63
          %s488 = scalar_select %p487, %s486, 63
          %s489 = smul.addr %s488, 2
          %s490 = smul.addr %s489, 4
          %s491 = scalar_lea.vmem %s1, %s490
          %s492 = smul.u32 32, %s38
        $region60: #{tpu_custom_call.1} parent=51 // pred_fallthru
          _
        // Predicated region
        $region61: #{tpu_custom_call.1} parent=51 // pred_check
          %p493 = pneg %p116
        $region62: #{tpu_custom_call.1} parent=51 // pred_check_branch
          %495 = sbr.rel (%p493) target = $region64
        $region63: #{tpu_custom_call.1} parent=51 // pred_region
          %s496 = sand.u32 %s30, 1
          %s497 = scalar_lea.sflag [#allocation7], %s496
          %s498 = sand.u32 %s106, 1
          %s499 = smul.addr %s498, 512
          %s500 = scalar_lea.vmem [#allocation6], %s499
          %s501 = smul.u32 32, %s37
          %s503 = ssub.s32 8192, 8192
          %504 = vsyncadd %s497, %s503
          %s505 = smul.addr %s501, 2
          %s506 = smul.addr %s505, 128
          %s507 = scalar_lea.hbm %s2, %s506
          %s508 = sshll.u32 %s500, 4
          %s509 = int_to_ptr.vmem [resolvable:$true] %s508
          %514 = dma.hbm_to_vmem [thread:$0]  %s507, 8192, %s509, %s497, 256, 256, 16
        $region64: #{tpu_custom_call.1} parent=51 // pred_fallthru
          _
        // Predicated region
        $region65: #{tpu_custom_call.1} parent=51 // pred_check
          %p515 = pneg %p142
        $region66: #{tpu_custom_call.1} parent=51 // pred_check_branch
          %517 = sbr.rel (%p515) target = $region68
        $region67: #{tpu_custom_call.1} parent=51 // pred_region
          %s518 = smul.u32 32, %s37
          %p519 = scmp.lt.s32.totalorder %s518, 63
          %s520 = scalar_select %p519, %s518, 63
          %s521 = smul.addr %s520, 8
          %s522 = scalar_lea.vmem %s3, %s521
          %s523 = smul.u32 32, %s37
        $region68: #{tpu_custom_call.1} parent=51 // pred_fallthru
          _
      $region52: #{tpu_custom_call.1} parent=5 // pred_fallthru
        _
      %p524 = scmp.le.s32.totalorder 1, %s30
      %p525 = scmp.lt.s32.totalorder %s30, 5
      %p526 = pnand %p524, %p525
      %p527 = pneg %p526
      // Predicated region
      $region69: #{tpu_custom_call.1} parent=5 // pred_check
        _
      $region70: #{tpu_custom_call.1} parent=5 // pred_check_branch
        %529 = sbr.rel (%p526) target = $region72
      $region71: #{tpu_custom_call.1} parent=5 // pred_region
        %s530 = ssub.s32 %s30, 1
        %s531 = sand.u32 %s57, 1
        %s532 = scalar_lea.sflag [#allocation4], %s531
        %s533 = sand.u32 %s57, 1
        %s534 = smul.addr %s533, 256
        %s535 = scalar_lea.vmem [#allocation3], %s534
        // Predicated region
        $region73: #{tpu_custom_call.1} parent=71 // pred_check
          %p536 = pneg %p70
        $region74: #{tpu_custom_call.1} parent=71 // pred_check_branch
          %538 = sbr.rel (%p536) target = $region76
        $region75: #{tpu_custom_call.1} parent=71 // pred_region
          %539 = dma.done %s532, 4096
        $region76: #{tpu_custom_call.1} parent=71 // pred_fallthru
          _
        %s540 = sand.u32 %s35, 1
        %s541 = scalar_lea.sflag [#allocation7], %s540
        %s542 = sand.u32 %s109, 1
        %s543 = smul.addr %s542, 512
        %s544 = scalar_lea.vmem [#allocation6], %s543
        // Predicated region
        $region77: #{tpu_custom_call.1} parent=71 // pred_check
          %p545 = pneg %p122
        $region78: #{tpu_custom_call.1} parent=71 // pred_check_branch
          %547 = sbr.rel (%p545) target = $region80
        $region79: #{tpu_custom_call.1} parent=71 // pred_region
          %548 = dma.done %s541, 8192
        $region80: #{tpu_custom_call.1} parent=71 // pred_fallthru
          _
        // Predicated region
        $region81: #{tpu_custom_call.1} parent=71 // pred_check
          %p549 = pneg %p169
        $region82: #{tpu_custom_call.1} parent=71 // pred_check_branch
          %551 = sbr.rel (%p549) target = $region84
        $region83: #{tpu_custom_call.1} parent=71 // pred_region
          %552 = dma.done [#allocation7], 4096
        $region84: #{tpu_custom_call.1} parent=71 // pred_fallthru
          _
        // Predicated region
        $region85: #{tpu_custom_call.1} parent=71 // pred_check
          %p553 = pneg %p190
        $region86: #{tpu_custom_call.1} parent=71 // pred_check_branch
          %555 = sbr.rel (%p553) target = $region88
        $region87: #{tpu_custom_call.1} parent=71 // pred_region
          %556 = dma.done [#allocation10], 4096
        $region88: #{tpu_custom_call.1} parent=71 // pred_fallthru
          _
        // Predicated region
        $region89: #{tpu_custom_call.1} parent=71 // pred_check
          %p557 = pneg %p232
        $region90: #{tpu_custom_call.1} parent=71 // pred_check_branch
          %559 = sbr.rel (%p557) target = $region92
        $region91: #{tpu_custom_call.1} parent=71 // pred_region
          %560 = dma.done [#allocation10], 2048
        $region92: #{tpu_custom_call.1} parent=71 // pred_fallthru
          _
        // Predicated region
        $region93: #{tpu_custom_call.1} parent=71 // pred_check
          %p561 = pneg %p274
        $region94: #{tpu_custom_call.1} parent=71 // pred_check_branch
          %563 = sbr.rel (%p561) target = $region96
        $region95: #{tpu_custom_call.1} parent=71 // pred_region
          %564 = dma.done [#allocation13], 1024
        $region96: #{tpu_custom_call.1} parent=71 // pred_fallthru
          _
        // Predicated region
        $region97: #{tpu_custom_call.1} parent=71 // pred_check
          %p565 = pneg %p316
        $region98: #{tpu_custom_call.1} parent=71 // pred_check_branch
          %567 = sbr.rel (%p565) target = $region100
        $region99: #{tpu_custom_call.1} parent=71 // pred_region
          %568 = dma.done [#allocation13], 1024
        $region100: #{tpu_custom_call.1} parent=71 // pred_fallthru
          _
        %s569 = sand.u32 %s57, 1
        %s570 = scalar_lea.sflag [#allocation4], %s569
        %s571 = sand.u32 %s57, 1
        %s572 = smul.addr %s571, 256
        %s573 = scalar_lea.vmem [#allocation3], %s572
        %p574 = pneg %p70
        %p575 = pneg %p67
        %s576 = smul.u32 32, %s40
        %p577 = scmp.lt.s32.totalorder %s576, 63
        %s578 = scalar_select %p577, %s576, 63
        %s579 = smul.addr %s578, 2
        %s580 = smul.addr %s579, 4
        %s581 = scalar_lea.vmem %s1, %s580
        %p582 = pneg %p96
        %p583 = pneg %p93
        %s584 = sand.u32 %s35, 1
        %s585 = scalar_lea.sflag [#allocation7], %s584
        %s586 = sand.u32 %s109, 1
        %s587 = smul.addr %s586, 512
        %s588 = scalar_lea.vmem [#allocation6], %s587
        %p589 = pneg %p122
        %p590 = pneg %p119
        %s591 = smul.u32 32, %s39
        %p592 = scmp.lt.s32.totalorder %s591, 63
        %s593 = scalar_select %p592, %s591, 63
        %s594 = smul.addr %s593, 8
        %s595 = scalar_lea.vmem %s3, %s594
        %p596 = pneg %p148
        %p597 = pneg %p145
        %p598 = pneg %p169
        %p599 = pneg %p166
        %p600 = pneg %p190
        %p601 = pneg %p187
        %p602 = pneg %p211
        %p603 = pneg %p208
        %p604 = pneg %p232
        %p605 = pneg %p229
        %p606 = pneg %p253
        %p607 = pneg %p250
        %p608 = pneg %p274
        %p609 = pneg %p271
        %p610 = pneg %p295
        %p611 = pneg %p292
        %p612 = pneg %p316
        %p613 = pneg %p313
        %p614 = pneg %p337
        %p615 = pneg %p334
        %p616 = pneg %p363
        %p617 = pneg %p360
        %s618 = sand.u32 %s350, 1
        %s619 = scalar_lea.sflag [#allocation5], %s618
        %s620 = sand.u32 %s350, 1
        %s621 = smul.addr %s620, 256
        %s622 = scalar_lea.vmem [#allocation15], %s621
        %s623 = smul.u32 32, %s39
        %s624 = smul.u32 2, %s40
        %s625 = smul.u32 32, %s40
        %p626 = scmp.lt.s32.totalorder %s625, 63
        %s627 = scalar_select %p626, %s625, 63
        %s628 = smul.addr %s627, 2
        %s629 = smul.addr %s628, 4
        %s630 = scalar_lea.vmem %s1, %s629
        %s631 = smul.u32 32, %s40
        %s632 = smul.u32 32, %s39
        %s633 = smul.u32 32, %s39
        %p634 = scmp.lt.s32.totalorder %s633, 63
        %s635 = scalar_select %p634, %s633, 63
        %s636 = smul.addr %s635, 8
        %s637 = scalar_lea.vmem %s3, %s636
        %s638 = smul.u32 32, %s39
        %s639 = smul.u32 32, %s39
        %p641 = scmp.eq.s32.totalorder %s40, 0
        // Predicated region
        $region101: #{tpu_custom_call.1} parent=71 // pred_check
          %p642 = pneg %p641
        $region102: #{tpu_custom_call.1} parent=71 // pred_check_branch
          %644 = sbr.rel (%p642) target = $region104
        $region103: #{tpu_custom_call.1} parent=71 // pred_region
          %645 = vst [vmem:[#allocation2] sm:$0xff] 0.0
          %646 = vst [vmem:[#allocation2 + $0x8] sm:$0xff] 0.0
          %647 = vst [vmem:[#allocation2 + $0x10] sm:$0xff] 0.0
          %648 = vst [vmem:[#allocation2 + $0x18] sm:$0xff] 0.0
          %649 = vst [vmem:[#allocation2 + $0x20] sm:$0xff] 0.0
          %650 = vst [vmem:[#allocation2 + $0x28] sm:$0xff] 0.0
          %651 = vst [vmem:[#allocation2 + $0x30] sm:$0xff] 0.0
          %652 = vst [vmem:[#allocation2 + $0x38] sm:$0xff] 0.0
          %653 = vst [vmem:[#allocation2 + $0x40] sm:$0xff] 0.0
          %654 = vst [vmem:[#allocation2 + $0x48] sm:$0xff] 0.0
          %655 = vst [vmem:[#allocation2 + $0x50] sm:$0xff] 0.0
          %656 = vst [vmem:[#allocation2 + $0x58] sm:$0xff] 0.0
          %657 = vst [vmem:[#allocation2 + $0x60] sm:$0xff] 0.0
          %658 = vst [vmem:[#allocation2 + $0x68] sm:$0xff] 0.0
          %659 = vst [vmem:[#allocation2 + $0x70] sm:$0xff] 0.0
          %660 = vst [vmem:[#allocation2 + $0x78] sm:$0xff] 0.0
          %661 = vst [vmem:[#allocation2 + $0x80] sm:$0xff] 0.0
          %662 = vst [vmem:[#allocation2 + $0x88] sm:$0xff] 0.0
          %663 = vst [vmem:[#allocation2 + $0x90] sm:$0xff] 0.0
          %664 = vst [vmem:[#allocation2 + $0x98] sm:$0xff] 0.0
          %665 = vst [vmem:[#allocation2 + $0xa0] sm:$0xff] 0.0
          %666 = vst [vmem:[#allocation2 + $0xa8] sm:$0xff] 0.0
          %667 = vst [vmem:[#allocation2 + $0xb0] sm:$0xff] 0.0
          %668 = vst [vmem:[#allocation2 + $0xb8] sm:$0xff] 0.0
          %669 = vst [vmem:[#allocation2 + $0xc0] sm:$0xff] 0.0
          %670 = vst [vmem:[#allocation2 + $0xc8] sm:$0xff] 0.0
          %671 = vst [vmem:[#allocation2 + $0xd0] sm:$0xff] 0.0
          %672 = vst [vmem:[#allocation2 + $0xd8] sm:$0xff] 0.0
          %673 = vst [vmem:[#allocation2 + $0xe0] sm:$0xff] 0.0
          %674 = vst [vmem:[#allocation2 + $0xe8] sm:$0xff] 0.0
          %675 = vst [vmem:[#allocation2 + $0xf0] sm:$0xff] 0.0
          %676 = vst [vmem:[#allocation2 + $0xf8] sm:$0xff] 0.0
          %677 = vst [vmem:[#allocation2 + $0x100] sm:$0xff] 0.0
          %678 = vst [vmem:[#allocation2 + $0x108] sm:$0xff] 0.0
          %679 = vst [vmem:[#allocation2 + $0x110] sm:$0xff] 0.0
          %680 = vst [vmem:[#allocation2 + $0x118] sm:$0xff] 0.0
          %681 = vst [vmem:[#allocation2 + $0x120] sm:$0xff] 0.0
          %682 = vst [vmem:[#allocation2 + $0x128] sm:$0xff] 0.0
          %683 = vst [vmem:[#allocation2 + $0x130] sm:$0xff] 0.0
          %684 = vst [vmem:[#allocation2 + $0x138] sm:$0xff] 0.0
          %685 = vst [vmem:[#allocation2 + $0x140] sm:$0xff] 0.0
          %686 = vst [vmem:[#allocation2 + $0x148] sm:$0xff] 0.0
          %687 = vst [vmem:[#allocation2 + $0x150] sm:$0xff] 0.0
          %688 = vst [vmem:[#allocation2 + $0x158] sm:$0xff] 0.0
          %689 = vst [vmem:[#allocation2 + $0x160] sm:$0xff] 0.0
          %690 = vst [vmem:[#allocation2 + $0x168] sm:$0xff] 0.0
          %691 = vst [vmem:[#allocation2 + $0x170] sm:$0xff] 0.0
          %692 = vst [vmem:[#allocation2 + $0x178] sm:$0xff] 0.0
          %693 = vst [vmem:[#allocation2 + $0x180] sm:$0xff] 0.0
          %694 = vst [vmem:[#allocation2 + $0x188] sm:$0xff] 0.0
          %695 = vst [vmem:[#allocation2 + $0x190] sm:$0xff] 0.0
          %696 = vst [vmem:[#allocation2 + $0x198] sm:$0xff] 0.0
          %697 = vst [vmem:[#allocation2 + $0x1a0] sm:$0xff] 0.0
          %698 = vst [vmem:[#allocation2 + $0x1a8] sm:$0xff] 0.0
          %699 = vst [vmem:[#allocation2 + $0x1b0] sm:$0xff] 0.0
          %700 = vst [vmem:[#allocation2 + $0x1b8] sm:$0xff] 0.0
          %701 = vst [vmem:[#allocation2 + $0x1c0] sm:$0xff] 0.0
          %702 = vst [vmem:[#allocation2 + $0x1c8] sm:$0xff] 0.0
          %703 = vst [vmem:[#allocation2 + $0x1d0] sm:$0xff] 0.0
          %704 = vst [vmem:[#allocation2 + $0x1d8] sm:$0xff] 0.0
          %705 = vst [vmem:[#allocation2 + $0x1e0] sm:$0xff] 0.0
          %706 = vst [vmem:[#allocation2 + $0x1e8] sm:$0xff] 0.0
          %707 = vst [vmem:[#allocation2 + $0x1f0] sm:$0xff] 0.0
          %708 = vst [vmem:[#allocation2 + $0x1f8] sm:$0xff] 0.0
        $region104: #{tpu_custom_call.1} parent=71 // pred_fallthru
          _
        %v709 = vld [vmem:[#allocation2] sm:$0xff]
        %v710 = vld [vmem:[#allocation2 + $0x8] sm:$0xff]
        %v711 = vld [vmem:[#allocation2 + $0x10] sm:$0xff]
        %v712 = vld [vmem:[#allocation2 + $0x18] sm:$0xff]
        %v713 = vld [vmem:[#allocation2 + $0x20] sm:$0xff]
        %v714 = vld [vmem:[#allocation2 + $0x28] sm:$0xff]
        %v715 = vld [vmem:[#allocation2 + $0x30] sm:$0xff]
        %v716 = vld [vmem:[#allocation2 + $0x38] sm:$0xff]
        %v717 = vld [vmem:[#allocation2 + $0x40] sm:$0xff]
        %v718 = vld [vmem:[#allocation2 + $0x48] sm:$0xff]
        %v719 = vld [vmem:[#allocation2 + $0x50] sm:$0xff]
        %v720 = vld [vmem:[#allocation2 + $0x58] sm:$0xff]
        %v721 = vld [vmem:[#allocation2 + $0x60] sm:$0xff]
        %v722 = vld [vmem:[#allocation2 + $0x68] sm:$0xff]
        %v723 = vld [vmem:[#allocation2 + $0x70] sm:$0xff]
        %v724 = vld [vmem:[#allocation2 + $0x78] sm:$0xff]
        %v725 = vld [vmem:[#allocation2 + $0x80] sm:$0xff]
        %v726 = vld [vmem:[#allocation2 + $0x88] sm:$0xff]
        %v727 = vld [vmem:[#allocation2 + $0x90] sm:$0xff]
        %v728 = vld [vmem:[#allocation2 + $0x98] sm:$0xff]
        %v729 = vld [vmem:[#allocation2 + $0xa0] sm:$0xff]
        %v730 = vld [vmem:[#allocation2 + $0xa8] sm:$0xff]
        %v731 = vld [vmem:[#allocation2 + $0xb0] sm:$0xff]
        %v732 = vld [vmem:[#allocation2 + $0xb8] sm:$0xff]
        %v733 = vld [vmem:[#allocation2 + $0xc0] sm:$0xff]
        %v734 = vld [vmem:[#allocation2 + $0xc8] sm:$0xff]
        %v735 = vld [vmem:[#allocation2 + $0xd0] sm:$0xff]
        %v736 = vld [vmem:[#allocation2 + $0xd8] sm:$0xff]
        %v737 = vld [vmem:[#allocation2 + $0xe0] sm:$0xff]
        %v738 = vld [vmem:[#allocation2 + $0xe8] sm:$0xff]
        %v739 = vld [vmem:[#allocation2 + $0xf0] sm:$0xff]
        %v740 = vld [vmem:[#allocation2 + $0xf8] sm:$0xff]
        %v741 = vld [vmem:[#allocation2 + $0x100] sm:$0xff]
        %v742 = vld [vmem:[#allocation2 + $0x108] sm:$0xff]
        %v743 = vld [vmem:[#allocation2 + $0x110] sm:$0xff]
        %v744 = vld [vmem:[#allocation2 + $0x118] sm:$0xff]
        %v745 = vld [vmem:[#allocation2 + $0x120] sm:$0xff]
        %v746 = vld [vmem:[#allocation2 + $0x128] sm:$0xff]
        %v747 = vld [vmem:[#allocation2 + $0x130] sm:$0xff]
        %v748 = vld [vmem:[#allocation2 + $0x138] sm:$0xff]
        %v749 = vld [vmem:[#allocation2 + $0x140] sm:$0xff]
        %v750 = vld [vmem:[#allocation2 + $0x148] sm:$0xff]
        %v751 = vld [vmem:[#allocation2 + $0x150] sm:$0xff]
        %v752 = vld [vmem:[#allocation2 + $0x158] sm:$0xff]
        %v753 = vld [vmem:[#allocation2 + $0x160] sm:$0xff]
        %v754 = vld [vmem:[#allocation2 + $0x168] sm:$0xff]
        %v755 = vld [vmem:[#allocation2 + $0x170] sm:$0xff]
        %v756 = vld [vmem:[#allocation2 + $0x178] sm:$0xff]
        %v757 = vld [vmem:[#allocation2 + $0x180] sm:$0xff]
        %v758 = vld [vmem:[#allocation2 + $0x188] sm:$0xff]
        %v759 = vld [vmem:[#allocation2 + $0x190] sm:$0xff]
        %v760 = vld [vmem:[#allocation2 + $0x198] sm:$0xff]
        %v761 = vld [vmem:[#allocation2 + $0x1a0] sm:$0xff]
        %v762 = vld [vmem:[#allocation2 + $0x1a8] sm:$0xff]
        %v763 = vld [vmem:[#allocation2 + $0x1b0] sm:$0xff]
        %v764 = vld [vmem:[#allocation2 + $0x1b8] sm:$0xff]
        %v765 = vld [vmem:[#allocation2 + $0x1c0] sm:$0xff]
        %v766 = vld [vmem:[#allocation2 + $0x1c8] sm:$0xff]
        %v767 = vld [vmem:[#allocation2 + $0x1d0] sm:$0xff]
        %v768 = vld [vmem:[#allocation2 + $0x1d8] sm:$0xff]
        %v769 = vld [vmem:[#allocation2 + $0x1e0] sm:$0xff]
        %v770 = vld [vmem:[#allocation2 + $0x1e8] sm:$0xff]
        %v771 = vld [vmem:[#allocation2 + $0x1f0] sm:$0xff]
        %v772 = vld [vmem:[#allocation2 + $0x1f8] sm:$0xff]
        %v773 = vld [vmem:[%s535] sm:$0xff]
        %v774 = vld [vmem:[%s535 + $0x8] sm:$0xff]
        %v775 = vld [vmem:[%s535 + $0x10] sm:$0xff]
        %v776 = vld [vmem:[%s535 + $0x18] sm:$0xff]
        %v777 = vld [vmem:[%s535 + $0x20] sm:$0xff]
        %v778 = vld [vmem:[%s535 + $0x28] sm:$0xff]
        %v779 = vld [vmem:[%s535 + $0x30] sm:$0xff]
        %v780 = vld [vmem:[%s535 + $0x38] sm:$0xff]
        %v781 = vld [vmem:[%s535 + $0x40] sm:$0xff]
        %v782 = vld [vmem:[%s535 + $0x48] sm:$0xff]
        %v783 = vld [vmem:[%s535 + $0x50] sm:$0xff]
        %v784 = vld [vmem:[%s535 + $0x58] sm:$0xff]
        %v785 = vld [vmem:[%s535 + $0x60] sm:$0xff]
        %v786 = vld [vmem:[%s535 + $0x68] sm:$0xff]
        %v787 = vld [vmem:[%s535 + $0x70] sm:$0xff]
        %v788 = vld [vmem:[%s535 + $0x78] sm:$0xff]
        %v789 = vld [vmem:[%s535 + $0x80] sm:$0xff]
        %v790 = vld [vmem:[%s535 + $0x88] sm:$0xff]
        %v791 = vld [vmem:[%s535 + $0x90] sm:$0xff]
        %v792 = vld [vmem:[%s535 + $0x98] sm:$0xff]
        %v793 = vld [vmem:[%s535 + $0xa0] sm:$0xff]
        %v794 = vld [vmem:[%s535 + $0xa8] sm:$0xff]
        %v795 = vld [vmem:[%s535 + $0xb0] sm:$0xff]
        %v796 = vld [vmem:[%s535 + $0xb8] sm:$0xff]
        %v797 = vld [vmem:[%s535 + $0xc0] sm:$0xff]
        %v798 = vld [vmem:[%s535 + $0xc8] sm:$0xff]
        %v799 = vld [vmem:[%s535 + $0xd0] sm:$0xff]
        %v800 = vld [vmem:[%s535 + $0xd8] sm:$0xff]
        %v801 = vld [vmem:[%s535 + $0xe0] sm:$0xff]
        %v802 = vld [vmem:[%s535 + $0xe8] sm:$0xff]
        %v803 = vld [vmem:[%s535 + $0xf0] sm:$0xff]
        %v804 = vld [vmem:[%s535 + $0xf8] sm:$0xff]
        %v805 = vld [vmem:[%s630] sm:$0xff]
        %v806 = vld [vmem:[%s630 + $0x8] sm:$0xff]
        %v807 = vld [vmem:[%s630 + $0x10] sm:$0xff]
        %v808 = vld [vmem:[%s630 + $0x18] sm:$0xff]
        %v809 = vld [vmem:[%s630 + $0x20] sm:$0xff]
        %v810 = vld [vmem:[%s630 + $0x28] sm:$0xff]
        %v811 = vld [vmem:[%s630 + $0x30] sm:$0xff]
        %v812 = vld [vmem:[%s630 + $0x38] sm:$0xff]
        %v813 = vld [vmem:[%s630 + $0x40] sm:$0xff]
        %v814 = vld [vmem:[%s630 + $0x48] sm:$0xff]
        %v815 = vld [vmem:[%s630 + $0x50] sm:$0xff]
        %v816 = vld [vmem:[%s630 + $0x58] sm:$0xff]
        %v817 = vld [vmem:[%s630 + $0x60] sm:$0xff]
        %v818 = vld [vmem:[%s630 + $0x68] sm:$0xff]
        %v819 = vld [vmem:[%s630 + $0x70] sm:$0xff]
        %v820 = vld [vmem:[%s630 + $0x78] sm:$0xff]
        %v821 = vld [vmem:[%s630 + $0x80] sm:$0xff]
        %v822 = vld [vmem:[%s630 + $0x88] sm:$0xff]
        %v823 = vld [vmem:[%s630 + $0x90] sm:$0xff]
        %v824 = vld [vmem:[%s630 + $0x98] sm:$0xff]
        %v825 = vld [vmem:[%s630 + $0xa0] sm:$0xff]
        %v826 = vld [vmem:[%s630 + $0xa8] sm:$0xff]
        %v827 = vld [vmem:[%s630 + $0xb0] sm:$0xff]
        %v828 = vld [vmem:[%s630 + $0xb8] sm:$0xff]
        %v829 = vld [vmem:[%s630 + $0xc0] sm:$0xff]
        %v830 = vld [vmem:[%s630 + $0xc8] sm:$0xff]
        %v831 = vld [vmem:[%s630 + $0xd0] sm:$0xff]
        %v832 = vld [vmem:[%s630 + $0xd8] sm:$0xff]
        %v833 = vld [vmem:[%s630 + $0xe0] sm:$0xff]
        %v834 = vld [vmem:[%s630 + $0xe8] sm:$0xff]
        %v835 = vld [vmem:[%s630 + $0xf0] sm:$0xff]
        %v836 = vld [vmem:[%s630 + $0xf8] sm:$0xff]
        %v869 = vunpack.c.l.b16 %v773
        %v870 = vunpack.c.h.b16 %v773
        %v871 = vunpack.c.l.b16 %v774
        %v872 = vunpack.c.h.b16 %v774
        %v873 = vunpack.c.l.b16 %v775
        %v874 = vunpack.c.h.b16 %v775
        %v875 = vunpack.c.l.b16 %v776
        %v876 = vunpack.c.h.b16 %v776
        %v877 = vunpack.c.l.b16 %v777
        %v878 = vunpack.c.h.b16 %v777
        %v879 = vunpack.c.l.b16 %v778
        %v880 = vunpack.c.h.b16 %v778
        %v881 = vunpack.c.l.b16 %v779
        %v882 = vunpack.c.h.b16 %v779
        %v883 = vunpack.c.l.b16 %v780
        %v884 = vunpack.c.h.b16 %v780
        %v885 = vunpack.c.l.b16 %v781
        %v886 = vunpack.c.h.b16 %v781
        %v887 = vunpack.c.l.b16 %v782
        %v888 = vunpack.c.h.b16 %v782
        %v889 = vunpack.c.l.b16 %v783
        %v890 = vunpack.c.h.b16 %v783
        %v891 = vunpack.c.l.b16 %v784
        %v892 = vunpack.c.h.b16 %v784
        %v893 = vunpack.c.l.b16 %v785
        %v894 = vunpack.c.h.b16 %v785
        %v895 = vunpack.c.l.b16 %v786
        %v896 = vunpack.c.h.b16 %v786
        %v897 = vunpack.c.l.b16 %v787
        %v898 = vunpack.c.h.b16 %v787
        %v899 = vunpack.c.l.b16 %v788
        %v900 = vunpack.c.h.b16 %v788
        %v901 = vunpack.c.l.b16 %v789
        %v902 = vunpack.c.h.b16 %v789
        %v903 = vunpack.c.l.b16 %v790
        %v904 = vunpack.c.h.b16 %v790
        %v905 = vunpack.c.l.b16 %v791
        %v906 = vunpack.c.h.b16 %v791
        %v907 = vunpack.c.l.b16 %v792
        %v908 = vunpack.c.h.b16 %v792
        %v909 = vunpack.c.l.b16 %v793
        %v910 = vunpack.c.h.b16 %v793
        %v911 = vunpack.c.l.b16 %v794
        %v912 = vunpack.c.h.b16 %v794
        %v913 = vunpack.c.l.b16 %v795
        %v914 = vunpack.c.h.b16 %v795
        %v915 = vunpack.c.l.b16 %v796
        %v916 = vunpack.c.h.b16 %v796
        %v917 = vunpack.c.l.b16 %v797
        %v918 = vunpack.c.h.b16 %v797
        %v919 = vunpack.c.l.b16 %v798
        %v920 = vunpack.c.h.b16 %v798
        %v921 = vunpack.c.l.b16 %v799
        %v922 = vunpack.c.h.b16 %v799
        %v923 = vunpack.c.l.b16 %v800
        %v924 = vunpack.c.h.b16 %v800
        %v925 = vunpack.c.l.b16 %v801
        %v926 = vunpack.c.h.b16 %v801
        %v927 = vunpack.c.l.b16 %v802
        %v928 = vunpack.c.h.b16 %v802
        %v929 = vunpack.c.l.b16 %v803
        %v930 = vunpack.c.h.b16 %v803
        %v931 = vunpack.c.l.b16 %v804
        %v932 = vunpack.c.h.b16 %v804
        %v933 = vpack.c.b16 %v871, %v869
        %v934 = vpack.c.b16 %v872, %v870
        %v935 = vpack.c.b16 %v875, %v873
        %v936 = vpack.c.b16 %v876, %v874
        %v937 = vpack.c.b16 %v879, %v877
        %v938 = vpack.c.b16 %v880, %v878
        %v939 = vpack.c.b16 %v883, %v881
        %v940 = vpack.c.b16 %v884, %v882
        %v941 = vpack.c.b16 %v887, %v885
        %v942 = vpack.c.b16 %v888, %v886
        %v943 = vpack.c.b16 %v891, %v889
        %v944 = vpack.c.b16 %v892, %v890
        %v945 = vpack.c.b16 %v895, %v893
        %v946 = vpack.c.b16 %v896, %v894
        %v947 = vpack.c.b16 %v899, %v897
        %v948 = vpack.c.b16 %v900, %v898
        %v949 = vpack.c.b16 %v903, %v901
        %v950 = vpack.c.b16 %v904, %v902
        %v951 = vpack.c.b16 %v907, %v905
        %v952 = vpack.c.b16 %v908, %v906
        %v953 = vpack.c.b16 %v911, %v909
        %v954 = vpack.c.b16 %v912, %v910
        %v955 = vpack.c.b16 %v915, %v913
        %v956 = vpack.c.b16 %v916, %v914
        %v957 = vpack.c.b16 %v919, %v917
        %v958 = vpack.c.b16 %v920, %v918
        %v959 = vpack.c.b16 %v923, %v921
        %v960 = vpack.c.b16 %v924, %v922
        %v961 = vpack.c.b16 %v927, %v925
        %v962 = vpack.c.b16 %v928, %v926
        %v963 = vpack.c.b16 %v931, %v929
        %v964 = vpack.c.b16 %v932, %v930
        %v1029 = vunpack.c.l.b16 %v805
        %v1030 = vunpack.c.h.b16 %v805
        %v1031 = vunpack.c.l.b16 %v806
        %v1032 = vunpack.c.h.b16 %v806
        %v1033 = vunpack.c.l.b16 %v807
        %v1034 = vunpack.c.h.b16 %v807
        %v1035 = vunpack.c.l.b16 %v808
        %v1036 = vunpack.c.h.b16 %v808
        %v1037 = vunpack.c.l.b16 %v809
        %v1038 = vunpack.c.h.b16 %v809
        %v1039 = vunpack.c.l.b16 %v810
        %v1040 = vunpack.c.h.b16 %v810
        %v1041 = vunpack.c.l.b16 %v811
        %v1042 = vunpack.c.h.b16 %v811
        %v1043 = vunpack.c.l.b16 %v812
        %v1044 = vunpack.c.h.b16 %v812
        %v1045 = vunpack.c.l.b16 %v813
        %v1046 = vunpack.c.h.b16 %v813
        %v1047 = vunpack.c.l.b16 %v814
        %v1048 = vunpack.c.h.b16 %v814
        %v1049 = vunpack.c.l.b16 %v815
        %v1050 = vunpack.c.h.b16 %v815
        %v1051 = vunpack.c.l.b16 %v816
        %v1052 = vunpack.c.h.b16 %v816
        %v1053 = vunpack.c.l.b16 %v817
        %v1054 = vunpack.c.h.b16 %v817
        %v1055 = vunpack.c.l.b16 %v818
        %v1056 = vunpack.c.h.b16 %v818
        %v1057 = vunpack.c.l.b16 %v819
        %v1058 = vunpack.c.h.b16 %v819
        %v1059 = vunpack.c.l.b16 %v820
        %v1060 = vunpack.c.h.b16 %v820
        %v1061 = vunpack.c.l.b16 %v821
        %v1062 = vunpack.c.h.b16 %v821
        %v1063 = vunpack.c.l.b16 %v822
        %v1064 = vunpack.c.h.b16 %v822
        %v1065 = vunpack.c.l.b16 %v823
        %v1066 = vunpack.c.h.b16 %v823
        %v1067 = vunpack.c.l.b16 %v824
        %v1068 = vunpack.c.h.b16 %v824
        %v1069 = vunpack.c.l.b16 %v825
        %v1070 = vunpack.c.h.b16 %v825
        %v1071 = vunpack.c.l.b16 %v826
        %v1072 = vunpack.c.h.b16 %v826
        %v1073 = vunpack.c.l.b16 %v827
        %v1074 = vunpack.c.h.b16 %v827
        %v1075 = vunpack.c.l.b16 %v828
        %v1076 = vunpack.c.h.b16 %v828
        %v1077 = vunpack.c.l.b16 %v829
        %v1078 = vunpack.c.h.b16 %v829
        %v1079 = vunpack.c.l.b16 %v830
        %v1080 = vunpack.c.h.b16 %v830
        %v1081 = vunpack.c.l.b16 %v831
        %v1082 = vunpack.c.h.b16 %v831
        %v1083 = vunpack.c.l.b16 %v832
        %v1084 = vunpack.c.h.b16 %v832
        %v1085 = vunpack.c.l.b16 %v833
        %v1086 = vunpack.c.h.b16 %v833
        %v1087 = vunpack.c.l.b16 %v834
        %v1088 = vunpack.c.h.b16 %v834
        %v1089 = vunpack.c.l.b16 %v835
        %v1090 = vunpack.c.h.b16 %v835
        %v1091 = vunpack.c.l.b16 %v836
        %v1092 = vunpack.c.h.b16 %v836
        %v1093 = vpack.c.b16 %v1031, %v1029
        %v1094 = vpack.c.b16 %v1032, %v1030
        %v1095 = vpack.c.b16 %v1035, %v1033
        %v1096 = vpack.c.b16 %v1036, %v1034
        %v1097 = vpack.c.b16 %v1039, %v1037
        %v1098 = vpack.c.b16 %v1040, %v1038
        %v1099 = vpack.c.b16 %v1043, %v1041
        %v1100 = vpack.c.b16 %v1044, %v1042
        %v1101 = vpack.c.b16 %v1047, %v1045
        %v1102 = vpack.c.b16 %v1048, %v1046
        %v1103 = vpack.c.b16 %v1051, %v1049
        %v1104 = vpack.c.b16 %v1052, %v1050
        %v1105 = vpack.c.b16 %v1055, %v1053
        %v1106 = vpack.c.b16 %v1056, %v1054
        %v1107 = vpack.c.b16 %v1059, %v1057
        %v1108 = vpack.c.b16 %v1060, %v1058
        %v1109 = vpack.c.b16 %v1063, %v1061
        %v1110 = vpack.c.b16 %v1064, %v1062
        %v1111 = vpack.c.b16 %v1067, %v1065
        %v1112 = vpack.c.b16 %v1068, %v1066
        %v1113 = vpack.c.b16 %v1071, %v1069
        %v1114 = vpack.c.b16 %v1072, %v1070
        %v1115 = vpack.c.b16 %v1075, %v1073
        %v1116 = vpack.c.b16 %v1076, %v1074
        %v1117 = vpack.c.b16 %v1079, %v1077
        %v1118 = vpack.c.b16 %v1080, %v1078
        %v1119 = vpack.c.b16 %v1083, %v1081
        %v1120 = vpack.c.b16 %v1084, %v1082
        %v1121 = vpack.c.b16 %v1087, %v1085
        %v1122 = vpack.c.b16 %v1088, %v1086
        %v1123 = vpack.c.b16 %v1091, %v1089
        %v1124 = vpack.c.b16 %v1092, %v1090
        %1157 = vmatprep.subr.bf16.mxu0 %v1094
        %1158 = vmatpush1.bf16.msra.mxu0 %v1093
        %1159 = vmatprep.subr.bf16.mxu0 %v1096
        %1160 = vmatpush1.bf16.msra.mxu0 %v1095
        %1161 = vmatprep.subr.bf16.mxu0 %v1098
        %1162 = vmatpush1.bf16.msra.mxu0 %v1097
        %1163 = vmatprep.subr.bf16.mxu0 %v1100
        %1164 = vmatpush1.bf16.msra.mxu0 %v1099
        %1165 = vmatprep.subr.bf16.mxu0 %v1102
        %1166 = vmatpush1.bf16.msra.mxu0 %v1101
        %1167 = vmatprep.subr.bf16.mxu0 %v1104
        %1168 = vmatpush1.bf16.msra.mxu0 %v1103
        %1169 = vmatprep.subr.bf16.mxu0 %v1106
        %1170 = vmatpush1.bf16.msra.mxu0 %v1105
        %1171 = vmatprep.subr.bf16.mxu0 %v1108
        %1172 = vmatpush1.bf16.msra.mxu0 %v1107
        %1173 = vmatprep.subr.bf16.mxu0 %v1110
        %1174 = vmatpush1.bf16.msra.mxu0 %v1109
        %1175 = vmatprep.subr.bf16.mxu0 %v1112
        %1176 = vmatpush1.bf16.msra.mxu0 %v1111
        %1177 = vmatprep.subr.bf16.mxu0 %v1114
        %1178 = vmatpush1.bf16.msra.mxu0 %v1113
        %1179 = vmatprep.subr.bf16.mxu0 %v1116
        %1180 = vmatpush1.bf16.msra.mxu0 %v1115
        %1181 = vmatprep.subr.bf16.mxu0 %v1118
        %1182 = vmatpush1.bf16.msra.mxu0 %v1117
        %1183 = vmatprep.subr.bf16.mxu0 %v1120
        %1184 = vmatpush1.bf16.msra.mxu0 %v1119
        %1185 = vmatprep.subr.bf16.mxu0 %v1122
        %1186 = vmatpush1.bf16.msra.mxu0 %v1121
        %1187 = vmatprep.subr.bf16.mxu0 %v1124
        %1188 = vmatpush1.bf16.msra.mxu0 %v1123
        %1189 = vmatprep.mubr.bf16.mxu0 %v934
        %1190 = vmatmul.mubr.bf16.gmra.mrb[0].mxu0 %v933
        %v1191 = vpop.f32.mrb[0].mxu0
        %v1192 = vadd.f32 0.0, %v1191
        %v1193 = vpop.f32.mrb[0].mxu0
        %v1194 = vadd.f32 0.0, %v1193
        %v1195 = vpop.f32.mrb[0].mxu0
        %v1196 = vadd.f32 0.0, %v1195
        %v1197 = vpop.f32.mrb[0].mxu0
        %v1198 = vadd.f32 0.0, %v1197
        %1199 = vmatprep.mubr.bf16.mxu0 %v936
        %1200 = vmatmul.mubr.bf16.gmra.mrb[0].mxu0 %v935
        %v1201 = vpop.f32.mrb[0].mxu0
        %v1202 = vadd.f32 0.0, %v1201
        %v1203 = vpop.f32.mrb[0].mxu0
        %v1204 = vadd.f32 0.0, %v1203
        %v1205 = vpop.f32.mrb[0].mxu0
        %v1206 = vadd.f32 0.0, %v1205
        %v1207 = vpop.f32.mrb[0].mxu0
        %v1208 = vadd.f32 0.0, %v1207
        %1209 = vmatprep.mubr.bf16.mxu0 %v938
        %1210 = vmatmul.mubr.bf16.gmra.mrb[0].mxu0 %v937
        %v1211 = vpop.f32.mrb[0].mxu0
        %v1212 = vadd.f32 0.0, %v1211
        %v1213 = vpop.f32.mrb[0].mxu0
        %v1214 = vadd.f32 0.0, %v1213
        %v1215 = vpop.f32.mrb[0].mxu0
        %v1216 = vadd.f32 0.0, %v1215
        %v1217 = vpop.f32.mrb[0].mxu0
        %v1218 = vadd.f32 0.0, %v1217
        %1219 = vmatprep.mubr.bf16.mxu0 %v940
        %1220 = vmatmul.mubr.bf16.gmra.mrb[0].mxu0 %v939
        %v1221 = vpop.f32.mrb[0].mxu0
        %v1222 = vadd.f32 0.0, %v1221
        %v1223 = vpop.f32.mrb[0].mxu0
        %v1224 = vadd.f32 0.0, %v1223
        %v1225 = vpop.f32.mrb[0].mxu0
        %v1226 = vadd.f32 0.0, %v1225
        %v1227 = vpop.f32.mrb[0].mxu0
        %v1228 = vadd.f32 0.0, %v1227
        %1229 = vmatprep.mubr.bf16.mxu0 %v942
        %1230 = vmatmul.mubr.bf16.gmra.mrb[0].mxu0 %v941
        %v1231 = vpop.f32.mrb[0].mxu0
        %v1232 = vadd.f32 0.0, %v1231
        %v1233 = vpop.f32.mrb[0].mxu0
        %v1234 = vadd.f32 0.0, %v1233
        %v1235 = vpop.f32.mrb[0].mxu0
        %v1236 = vadd.f32 0.0, %v1235
        %v1237 = vpop.f32.mrb[0].mxu0
        %v1238 = vadd.f32 0.0, %v1237
        %1239 = vmatprep.mubr.bf16.mxu0 %v944
        %1240 = vmatmul.mubr.bf16.gmra.mrb[0].mxu0 %v943
        %v1241 = vpop.f32.mrb[0].mxu0
        %v1242 = vadd.f32 0.0, %v1241
        %v1243 = vpop.f32.mrb[0].mxu0
        %v1244 = vadd.f32 0.0, %v1243
        %v1245 = vpop.f32.mrb[0].mxu0
        %v1246 = vadd.f32 0.0, %v1245
        %v1247 = vpop.f32.mrb[0].mxu0
        %v1248 = vadd.f32 0.0, %v1247
        %1249 = vmatprep.mubr.bf16.mxu0 %v946
        %1250 = vmatmul.mubr.bf16.gmra.mrb[0].mxu0 %v945
        %v1251 = vpop.f32.mrb[0].mxu0
        %v1252 = vadd.f32 0.0, %v1251
        %v1253 = vpop.f32.mrb[0].mxu0
        %v1254 = vadd.f32 0.0, %v1253
        %v1255 = vpop.f32.mrb[0].mxu0
        %v1256 = vadd.f32 0.0, %v1255
        %v1257 = vpop.f32.mrb[0].mxu0
        %v1258 = vadd.f32 0.0, %v1257
        %1259 = vmatprep.mubr.bf16.mxu0 %v948
        %1260 = vmatmul.mubr.bf16.gmra.mrb[0].mxu0 %v947
        %v1261 = vpop.f32.mrb[0].mxu0
        %v1262 = vadd.f32 0.0, %v1261
        %v1263 = vpop.f32.mrb[0].mxu0
        %v1264 = vadd.f32 0.0, %v1263
        %v1265 = vpop.f32.mrb[0].mxu0
        %v1266 = vadd.f32 0.0, %v1265
        %v1267 = vpop.f32.mrb[0].mxu0
        %v1268 = vadd.f32 0.0, %v1267
        %1269 = vmatprep.mubr.bf16.mxu0 %v950
        %1270 = vmatmul.mubr.bf16.gmra.mrb[0].mxu0 %v949
        %v1271 = vpop.f32.mrb[0].mxu0
        %v1272 = vadd.f32 0.0, %v1271
        %v1273 = vpop.f32.mrb[0].mxu0
        %v1274 = vadd.f32 0.0, %v1273
        %v1275 = vpop.f32.mrb[0].mxu0
        %v1276 = vadd.f32 0.0, %v1275
        %v1277 = vpop.f32.mrb[0].mxu0
        %v1278 = vadd.f32 0.0, %v1277
        %1279 = vmatprep.mubr.bf16.mxu0 %v952
        %1280 = vmatmul.mubr.bf16.gmra.mrb[0].mxu0 %v951
        %v1281 = vpop.f32.mrb[0].mxu0
        %v1282 = vadd.f32 0.0, %v1281
        %v1283 = vpop.f32.mrb[0].mxu0
        %v1284 = vadd.f32 0.0, %v1283
        %v1285 = vpop.f32.mrb[0].mxu0
        %v1286 = vadd.f32 0.0, %v1285
        %v1287 = vpop.f32.mrb[0].mxu0
        %v1288 = vadd.f32 0.0, %v1287
        %1289 = vmatprep.mubr.bf16.mxu0 %v954
        %1290 = vmatmul.mubr.bf16.gmra.mrb[0].mxu0 %v953
        %v1291 = vpop.f32.mrb[0].mxu0
        %v1292 = vadd.f32 0.0, %v1291
        %v1293 = vpop.f32.mrb[0].mxu0
        %v1294 = vadd.f32 0.0, %v1293
        %v1295 = vpop.f32.mrb[0].mxu0
        %v1296 = vadd.f32 0.0, %v1295
        %v1297 = vpop.f32.mrb[0].mxu0
        %v1298 = vadd.f32 0.0, %v1297
        %1299 = vmatprep.mubr.bf16.mxu0 %v956
        %1300 = vmatmul.mubr.bf16.gmra.mrb[0].mxu0 %v955
        %v1301 = vpop.f32.mrb[0].mxu0
        %v1302 = vadd.f32 0.0, %v1301
        %v1303 = vpop.f32.mrb[0].mxu0
        %v1304 = vadd.f32 0.0, %v1303
        %v1305 = vpop.f32.mrb[0].mxu0
        %v1306 = vadd.f32 0.0, %v1305
        %v1307 = vpop.f32.mrb[0].mxu0
        %v1308 = vadd.f32 0.0, %v1307
        %1309 = vmatprep.mubr.bf16.mxu0 %v958
        %1310 = vmatmul.mubr.bf16.gmra.mrb[0].mxu0 %v957
        %v1311 = vpop.f32.mrb[0].mxu0
        %v1312 = vadd.f32 0.0, %v1311
        %v1313 = vpop.f32.mrb[0].mxu0
        %v1314 = vadd.f32 0.0, %v1313
        %v1315 = vpop.f32.mrb[0].mxu0
        %v1316 = vadd.f32 0.0, %v1315
        %v1317 = vpop.f32.mrb[0].mxu0
        %v1318 = vadd.f32 0.0, %v1317
        %1319 = vmatprep.mubr.bf16.mxu0 %v960
        %1320 = vmatmul.mubr.bf16.gmra.mrb[0].mxu0 %v959
        %v1321 = vpop.f32.mrb[0].mxu0
        %v1322 = vadd.f32 0.0, %v1321
        %v1323 = vpop.f32.mrb[0].mxu0
        %v1324 = vadd.f32 0.0, %v1323
        %v1325 = vpop.f32.mrb[0].mxu0
        %v1326 = vadd.f32 0.0, %v1325
        %v1327 = vpop.f32.mrb[0].mxu0
        %v1328 = vadd.f32 0.0, %v1327
        %1329 = vmatprep.mubr.bf16.mxu0 %v962
        %1330 = vmatmul.mubr.bf16.gmra.mrb[0].mxu0 %v961
        %v1331 = vpop.f32.mrb[0].mxu0
        %v1332 = vadd.f32 0.0, %v1331
        %v1333 = vpop.f32.mrb[0].mxu0
        %v1334 = vadd.f32 0.0, %v1333
        %v1335 = vpop.f32.mrb[0].mxu0
        %v1336 = vadd.f32 0.0, %v1335
        %v1337 = vpop.f32.mrb[0].mxu0
        %v1338 = vadd.f32 0.0, %v1337
        %1339 = vmatprep.mubr.bf16.mxu0 %v964
        %1340 = vmatmul.mubr.bf16.gmra.mrb[0].mxu0 %v963
        %v1341 = vpop.f32.mrb[0].mxu0
        %v1342 = vadd.f32 0.0, %v1341
        %v1343 = vpop.f32.mrb[0].mxu0
        %v1344 = vadd.f32 0.0, %v1343
        %v1345 = vpop.f32.mrb[0].mxu0
        %v1346 = vadd.f32 0.0, %v1345
        %v1347 = vpop.f32.mrb[0].mxu0
        %v1348 = vadd.f32 0.0, %v1347
        %1349 = vdwg.mxu0
        %v1350 = vadd.f32 %v709, %v1192
        %v1351 = vadd.f32 %v710, %v1194
        %v1352 = vadd.f32 %v711, %v1196
        %v1353 = vadd.f32 %v712, %v1198
        %v1354 = vadd.f32 %v713, %v1202
        %v1355 = vadd.f32 %v714, %v1204
        %v1356 = vadd.f32 %v715, %v1206
        %v1357 = vadd.f32 %v716, %v1208
        %v1358 = vadd.f32 %v717, %v1212
        %v1359 = vadd.f32 %v718, %v1214
        %v1360 = vadd.f32 %v719, %v1216
        %v1361 = vadd.f32 %v720, %v1218
        %v1362 = vadd.f32 %v721, %v1222
        %v1363 = vadd.f32 %v722, %v1224
        %v1364 = vadd.f32 %v723, %v1226
        %v1365 = vadd.f32 %v724, %v1228
        %v1366 = vadd.f32 %v725, %v1232
        %v1367 = vadd.f32 %v726, %v1234
        %v1368 = vadd.f32 %v727, %v1236
        %v1369 = vadd.f32 %v728, %v1238
        %v1370 = vadd.f32 %v729, %v1242
        %v1371 = vadd.f32 %v730, %v1244
        %v1372 = vadd.f32 %v731, %v1246
        %v1373 = vadd.f32 %v732, %v1248
        %v1374 = vadd.f32 %v733, %v1252
        %v1375 = vadd.f32 %v734, %v1254
        %v1376 = vadd.f32 %v735, %v1256
        %v1377 = vadd.f32 %v736, %v1258
        %v1378 = vadd.f32 %v737, %v1262
        %v1379 = vadd.f32 %v738, %v1264
        %v1380 = vadd.f32 %v739, %v1266
        %v1381 = vadd.f32 %v740, %v1268
        %v1382 = vadd.f32 %v741, %v1272
        %v1383 = vadd.f32 %v742, %v1274
        %v1384 = vadd.f32 %v743, %v1276
        %v1385 = vadd.f32 %v744, %v1278
        %v1386 = vadd.f32 %v745, %v1282
        %v1387 = vadd.f32 %v746, %v1284
        %v1388 = vadd.f32 %v747, %v1286
        %v1389 = vadd.f32 %v748, %v1288
        %v1390 = vadd.f32 %v749, %v1292
        %v1391 = vadd.f32 %v750, %v1294
        %v1392 = vadd.f32 %v751, %v1296
        %v1393 = vadd.f32 %v752, %v1298
        %v1394 = vadd.f32 %v753, %v1302
        %v1395 = vadd.f32 %v754, %v1304
        %v1396 = vadd.f32 %v755, %v1306
        %v1397 = vadd.f32 %v756, %v1308
        %v1398 = vadd.f32 %v757, %v1312
        %v1399 = vadd.f32 %v758, %v1314
        %v1400 = vadd.f32 %v759, %v1316
        %v1401 = vadd.f32 %v760, %v1318
        %v1402 = vadd.f32 %v761, %v1322
        %v1403 = vadd.f32 %v762, %v1324
        %v1404 = vadd.f32 %v763, %v1326
        %v1405 = vadd.f32 %v764, %v1328
        %v1406 = vadd.f32 %v765, %v1332
        %v1407 = vadd.f32 %v766, %v1334
        %v1408 = vadd.f32 %v767, %v1336
        %v1409 = vadd.f32 %v768, %v1338
        %v1410 = vadd.f32 %v769, %v1342
        %v1411 = vadd.f32 %v770, %v1344
        %v1412 = vadd.f32 %v771, %v1346
        %v1413 = vadd.f32 %v772, %v1348
        %1414 = vst [vmem:[#allocation2] sm:$0xff] %v1350
        %1415 = vst [vmem:[#allocation2 + $0x8] sm:$0xff] %v1351
        %1416 = vst [vmem:[#allocation2 + $0x10] sm:$0xff] %v1352
        %1417 = vst [vmem:[#allocation2 + $0x18] sm:$0xff] %v1353
        %1418 = vst [vmem:[#allocation2 + $0x20] sm:$0xff] %v1354
        %1419 = vst [vmem:[#allocation2 + $0x28] sm:$0xff] %v1355
        %1420 = vst [vmem:[#allocation2 + $0x30] sm:$0xff] %v1356
        %1421 = vst [vmem:[#allocation2 + $0x38] sm:$0xff] %v1357
        %1422 = vst [vmem:[#allocation2 + $0x40] sm:$0xff] %v1358
        %1423 = vst [vmem:[#allocation2 + $0x48] sm:$0xff] %v1359
        %1424 = vst [vmem:[#allocation2 + $0x50] sm:$0xff] %v1360
        %1425 = vst [vmem:[#allocation2 + $0x58] sm:$0xff] %v1361
        %1426 = vst [vmem:[#allocation2 + $0x60] sm:$0xff] %v1362
        %1427 = vst [vmem:[#allocation2 + $0x68] sm:$0xff] %v1363
        %1428 = vst [vmem:[#allocation2 + $0x70] sm:$0xff] %v1364
        %1429 = vst [vmem:[#allocation2 + $0x78] sm:$0xff] %v1365
        %1430 = vst [vmem:[#allocation2 + $0x80] sm:$0xff] %v1366
        %1431 = vst [vmem:[#allocation2 + $0x88] sm:$0xff] %v1367
        %1432 = vst [vmem:[#allocation2 + $0x90] sm:$0xff] %v1368
        %1433 = vst [vmem:[#allocation2 + $0x98] sm:$0xff] %v1369
        %1434 = vst [vmem:[#allocation2 + $0xa0] sm:$0xff] %v1370
        %1435 = vst [vmem:[#allocation2 + $0xa8] sm:$0xff] %v1371
        %1436 = vst [vmem:[#allocation2 + $0xb0] sm:$0xff] %v1372
        %1437 = vst [vmem:[#allocation2 + $0xb8] sm:$0xff] %v1373
        %1438 = vst [vmem:[#allocation2 + $0xc0] sm:$0xff] %v1374
        %1439 = vst [vmem:[#allocation2 + $0xc8] sm:$0xff] %v1375
        %1440 = vst [vmem:[#allocation2 + $0xd0] sm:$0xff] %v1376
        %1441 = vst [vmem:[#allocation2 + $0xd8] sm:$0xff] %v1377
        %1442 = vst [vmem:[#allocation2 + $0xe0] sm:$0xff] %v1378
        %1443 = vst [vmem:[#allocation2 + $0xe8] sm:$0xff] %v1379
        %1444 = vst [vmem:[#allocation2 + $0xf0] sm:$0xff] %v1380
        %1445 = vst [vmem:[#allocation2 + $0xf8] sm:$0xff] %v1381
        %1446 = vst [vmem:[#allocation2 + $0x100] sm:$0xff] %v1382
        %1447 = vst [vmem:[#allocation2 + $0x108] sm:$0xff] %v1383
        %1448 = vst [vmem:[#allocation2 + $0x110] sm:$0xff] %v1384
        %1449 = vst [vmem:[#allocation2 + $0x118] sm:$0xff] %v1385
        %1450 = vst [vmem:[#allocation2 + $0x120] sm:$0xff] %v1386
        %1451 = vst [vmem:[#allocation2 + $0x128] sm:$0xff] %v1387
        %1452 = vst [vmem:[#allocation2 + $0x130] sm:$0xff] %v1388
        %1453 = vst [vmem:[#allocation2 + $0x138] sm:$0xff] %v1389
        %1454 = vst [vmem:[#allocation2 + $0x140] sm:$0xff] %v1390
        %1455 = vst [vmem:[#allocation2 + $0x148] sm:$0xff] %v1391
        %1456 = vst [vmem:[#allocation2 + $0x150] sm:$0xff] %v1392
        %1457 = vst [vmem:[#allocation2 + $0x158] sm:$0xff] %v1393
        %1458 = vst [vmem:[#allocation2 + $0x160] sm:$0xff] %v1394
        %1459 = vst [vmem:[#allocation2 + $0x168] sm:$0xff] %v1395
        %1460 = vst [vmem:[#allocation2 + $0x170] sm:$0xff] %v1396
        %1461 = vst [vmem:[#allocation2 + $0x178] sm:$0xff] %v1397
        %1462 = vst [vmem:[#allocation2 + $0x180] sm:$0xff] %v1398
        %1463 = vst [vmem:[#allocation2 + $0x188] sm:$0xff] %v1399
        %1464 = vst [vmem:[#allocation2 + $0x190] sm:$0xff] %v1400
        %1465 = vst [vmem:[#allocation2 + $0x198] sm:$0xff] %v1401
        %1466 = vst [vmem:[#allocation2 + $0x1a0] sm:$0xff] %v1402
        %1467 = vst [vmem:[#allocation2 + $0x1a8] sm:$0xff] %v1403
        %1468 = vst [vmem:[#allocation2 + $0x1b0] sm:$0xff] %v1404
        %1469 = vst [vmem:[#allocation2 + $0x1b8] sm:$0xff] %v1405
        %1470 = vst [vmem:[#allocation2 + $0x1c0] sm:$0xff] %v1406
        %1471 = vst [vmem:[#allocation2 + $0x1c8] sm:$0xff] %v1407
        %1472 = vst [vmem:[#allocation2 + $0x1d0] sm:$0xff] %v1408
        %1473 = vst [vmem:[#allocation2 + $0x1d8] sm:$0xff] %v1409
        %1474 = vst [vmem:[#allocation2 + $0x1e0] sm:$0xff] %v1410
        %1475 = vst [vmem:[#allocation2 + $0x1e8] sm:$0xff] %v1411
        %1476 = vst [vmem:[#allocation2 + $0x1f0] sm:$0xff] %v1412
        %1477 = vst [vmem:[#allocation2 + $0x1f8] sm:$0xff] %v1413
        %p1478 = scmp.eq.s32.totalorder %s40, 1
        // Predicated region
        $region105: #{tpu_custom_call.1} parent=71 // pred_check
          %p1479 = pneg %p1478
        $region106: #{tpu_custom_call.1} parent=71 // pred_check_branch
          %1481 = sbr.rel (%p1479) target = $region108
        $region107: #{tpu_custom_call.1} parent=71 // pred_region
          %v1482 = vld [vmem:[%s544] sm:$0xff]
          %v1483 = vld [vmem:[%s544 + $0x8] sm:$0xff]
          %v1484 = vld [vmem:[%s544 + $0x10] sm:$0xff]
          %v1485 = vld [vmem:[%s544 + $0x18] sm:$0xff]
          %v1486 = vld [vmem:[%s544 + $0x20] sm:$0xff]
          %v1487 = vld [vmem:[%s544 + $0x28] sm:$0xff]
          %v1488 = vld [vmem:[%s544 + $0x30] sm:$0xff]
          %v1489 = vld [vmem:[%s544 + $0x38] sm:$0xff]
          %v1490 = vld [vmem:[%s544 + $0x40] sm:$0xff]
          %v1491 = vld [vmem:[%s544 + $0x48] sm:$0xff]
          %v1492 = vld [vmem:[%s544 + $0x50] sm:$0xff]
          %v1493 = vld [vmem:[%s544 + $0x58] sm:$0xff]
          %v1494 = vld [vmem:[%s544 + $0x60] sm:$0xff]
          %v1495 = vld [vmem:[%s544 + $0x68] sm:$0xff]
          %v1496 = vld [vmem:[%s544 + $0x70] sm:$0xff]
          %v1497 = vld [vmem:[%s544 + $0x78] sm:$0xff]
          %v1498 = vld [vmem:[%s544 + $0x80] sm:$0xff]
          %v1499 = vld [vmem:[%s544 + $0x88] sm:$0xff]
          %v1500 = vld [vmem:[%s544 + $0x90] sm:$0xff]
          %v1501 = vld [vmem:[%s544 + $0x98] sm:$0xff]
          %v1502 = vld [vmem:[%s544 + $0xa0] sm:$0xff]
          %v1503 = vld [vmem:[%s544 + $0xa8] sm:$0xff]
          %v1504 = vld [vmem:[%s544 + $0xb0] sm:$0xff]
          %v1505 = vld [vmem:[%s544 + $0xb8] sm:$0xff]
          %v1506 = vld [vmem:[%s544 + $0xc0] sm:$0xff]
          %v1507 = vld [vmem:[%s544 + $0xc8] sm:$0xff]
          %v1508 = vld [vmem:[%s544 + $0xd0] sm:$0xff]
          %v1509 = vld [vmem:[%s544 + $0xd8] sm:$0xff]
          %v1510 = vld [vmem:[%s544 + $0xe0] sm:$0xff]
          %v1511 = vld [vmem:[%s544 + $0xe8] sm:$0xff]
          %v1512 = vld [vmem:[%s544 + $0xf0] sm:$0xff]
          %v1513 = vld [vmem:[%s544 + $0xf8] sm:$0xff]
          %v1514 = vld [vmem:[%s544 + $0x100] sm:$0xff]
          %v1515 = vld [vmem:[%s544 + $0x108] sm:$0xff]
          %v1516 = vld [vmem:[%s544 + $0x110] sm:$0xff]
          %v1517 = vld [vmem:[%s544 + $0x118] sm:$0xff]
          %v1518 = vld [vmem:[%s544 + $0x120] sm:$0xff]
          %v1519 = vld [vmem:[%s544 + $0x128] sm:$0xff]
          %v1520 = vld [vmem:[%s544 + $0x130] sm:$0xff]
          %v1521 = vld [vmem:[%s544 + $0x138] sm:$0xff]
          %v1522 = vld [vmem:[%s544 + $0x140] sm:$0xff]
          %v1523 = vld [vmem:[%s544 + $0x148] sm:$0xff]
          %v1524 = vld [vmem:[%s544 + $0x150] sm:$0xff]
          %v1525 = vld [vmem:[%s544 + $0x158] sm:$0xff]
          %v1526 = vld [vmem:[%s544 + $0x160] sm:$0xff]
          %v1527 = vld [vmem:[%s544 + $0x168] sm:$0xff]
          %v1528 = vld [vmem:[%s544 + $0x170] sm:$0xff]
          %v1529 = vld [vmem:[%s544 + $0x178] sm:$0xff]
          %v1530 = vld [vmem:[%s544 + $0x180] sm:$0xff]
          %v1531 = vld [vmem:[%s544 + $0x188] sm:$0xff]
          %v1532 = vld [vmem:[%s544 + $0x190] sm:$0xff]
          %v1533 = vld [vmem:[%s544 + $0x198] sm:$0xff]
          %v1534 = vld [vmem:[%s544 + $0x1a0] sm:$0xff]
          %v1535 = vld [vmem:[%s544 + $0x1a8] sm:$0xff]
          %v1536 = vld [vmem:[%s544 + $0x1b0] sm:$0xff]
          %v1537 = vld [vmem:[%s544 + $0x1b8] sm:$0xff]
          %v1538 = vld [vmem:[%s544 + $0x1c0] sm:$0xff]
          %v1539 = vld [vmem:[%s544 + $0x1c8] sm:$0xff]
          %v1540 = vld [vmem:[%s544 + $0x1d0] sm:$0xff]
          %v1541 = vld [vmem:[%s544 + $0x1d8] sm:$0xff]
          %v1542 = vld [vmem:[%s544 + $0x1e0] sm:$0xff]
          %v1543 = vld [vmem:[%s544 + $0x1e8] sm:$0xff]
          %v1544 = vld [vmem:[%s544 + $0x1f0] sm:$0xff]
          %v1545 = vld [vmem:[%s544 + $0x1f8] sm:$0xff]
          %v1546 = vld [vmem:[#allocation2] sm:$0xff]
          %v1547 = vld [vmem:[#allocation2 + $0x8] sm:$0xff]
          %v1548 = vld [vmem:[#allocation2 + $0x10] sm:$0xff]
          %v1549 = vld [vmem:[#allocation2 + $0x18] sm:$0xff]
          %v1550 = vld [vmem:[#allocation2 + $0x20] sm:$0xff]
          %v1551 = vld [vmem:[#allocation2 + $0x28] sm:$0xff]
          %v1552 = vld [vmem:[#allocation2 + $0x30] sm:$0xff]
          %v1553 = vld [vmem:[#allocation2 + $0x38] sm:$0xff]
          %v1554 = vld [vmem:[#allocation2 + $0x40] sm:$0xff]
          %v1555 = vld [vmem:[#allocation2 + $0x48] sm:$0xff]
          %v1556 = vld [vmem:[#allocation2 + $0x50] sm:$0xff]
          %v1557 = vld [vmem:[#allocation2 + $0x58] sm:$0xff]
          %v1558 = vld [vmem:[#allocation2 + $0x60] sm:$0xff]
          %v1559 = vld [vmem:[#allocation2 + $0x68] sm:$0xff]
          %v1560 = vld [vmem:[#allocation2 + $0x70] sm:$0xff]
          %v1561 = vld [vmem:[#allocation2 + $0x78] sm:$0xff]
          %v1562 = vld [vmem:[#allocation2 + $0x80] sm:$0xff]
          %v1563 = vld [vmem:[#allocation2 + $0x88] sm:$0xff]
          %v1564 = vld [vmem:[#allocation2 + $0x90] sm:$0xff]
          %v1565 = vld [vmem:[#allocation2 + $0x98] sm:$0xff]
          %v1566 = vld [vmem:[#allocation2 + $0xa0] sm:$0xff]
          %v1567 = vld [vmem:[#allocation2 + $0xa8] sm:$0xff]
          %v1568 = vld [vmem:[#allocation2 + $0xb0] sm:$0xff]
          %v1569 = vld [vmem:[#allocation2 + $0xb8] sm:$0xff]
          %v1570 = vld [vmem:[#allocation2 + $0xc0] sm:$0xff]
          %v1571 = vld [vmem:[#allocation2 + $0xc8] sm:$0xff]
          %v1572 = vld [vmem:[#allocation2 + $0xd0] sm:$0xff]
          %v1573 = vld [vmem:[#allocation2 + $0xd8] sm:$0xff]
          %v1574 = vld [vmem:[#allocation2 + $0xe0] sm:$0xff]
          %v1575 = vld [vmem:[#allocation2 + $0xe8] sm:$0xff]
          %v1576 = vld [vmem:[#allocation2 + $0xf0] sm:$0xff]
          %v1577 = vld [vmem:[#allocation2 + $0xf8] sm:$0xff]
          %v1578 = vld [vmem:[#allocation2 + $0x100] sm:$0xff]
          %v1579 = vld [vmem:[#allocation2 + $0x108] sm:$0xff]
          %v1580 = vld [vmem:[#allocation2 + $0x110] sm:$0xff]
          %v1581 = vld [vmem:[#allocation2 + $0x118] sm:$0xff]
          %v1582 = vld [vmem:[#allocation2 + $0x120] sm:$0xff]
          %v1583 = vld [vmem:[#allocation2 + $0x128] sm:$0xff]
          %v1584 = vld [vmem:[#allocation2 + $0x130] sm:$0xff]
          %v1585 = vld [vmem:[#allocation2 + $0x138] sm:$0xff]
          %v1586 = vld [vmem:[#allocation2 + $0x140] sm:$0xff]
          %v1587 = vld [vmem:[#allocation2 + $0x148] sm:$0xff]
          %v1588 = vld [vmem:[#allocation2 + $0x150] sm:$0xff]
          %v1589 = vld [vmem:[#allocation2 + $0x158] sm:$0xff]
          %v1590 = vld [vmem:[#allocation2 + $0x160] sm:$0xff]
          %v1591 = vld [vmem:[#allocation2 + $0x168] sm:$0xff]
          %v1592 = vld [vmem:[#allocation2 + $0x170] sm:$0xff]
          %v1593 = vld [vmem:[#allocation2 + $0x178] sm:$0xff]
          %v1594 = vld [vmem:[#allocation2 + $0x180] sm:$0xff]
          %v1595 = vld [vmem:[#allocation2 + $0x188] sm:$0xff]
          %v1596 = vld [vmem:[#allocation2 + $0x190] sm:$0xff]
          %v1597 = vld [vmem:[#allocation2 + $0x198] sm:$0xff]
          %v1598 = vld [vmem:[#allocation2 + $0x1a0] sm:$0xff]
          %v1599 = vld [vmem:[#allocation2 + $0x1a8] sm:$0xff]
          %v1600 = vld [vmem:[#allocation2 + $0x1b0] sm:$0xff]
          %v1601 = vld [vmem:[#allocation2 + $0x1b8] sm:$0xff]
          %v1602 = vld [vmem:[#allocation2 + $0x1c0] sm:$0xff]
          %v1603 = vld [vmem:[#allocation2 + $0x1c8] sm:$0xff]
          %v1604 = vld [vmem:[#allocation2 + $0x1d0] sm:$0xff]
          %v1605 = vld [vmem:[#allocation2 + $0x1d8] sm:$0xff]
          %v1606 = vld [vmem:[#allocation2 + $0x1e0] sm:$0xff]
          %v1607 = vld [vmem:[#allocation2 + $0x1e8] sm:$0xff]
          %v1608 = vld [vmem:[#allocation2 + $0x1f0] sm:$0xff]
          %v1609 = vld [vmem:[#allocation2 + $0x1f8] sm:$0xff]
          %v1610 = vld [vmem:[%s637] sm:$0xff]
          %v1611 = vld [vmem:[%s637 + $0x8] sm:$0xff]
          %v1612 = vld [vmem:[%s637 + $0x10] sm:$0xff]
          %v1613 = vld [vmem:[%s637 + $0x18] sm:$0xff]
          %v1614 = vld [vmem:[%s637 + $0x20] sm:$0xff]
          %v1615 = vld [vmem:[%s637 + $0x28] sm:$0xff]
          %v1616 = vld [vmem:[%s637 + $0x30] sm:$0xff]
          %v1617 = vld [vmem:[%s637 + $0x38] sm:$0xff]
          %v1618 = vld [vmem:[%s637 + $0x40] sm:$0xff]
          %v1619 = vld [vmem:[%s637 + $0x48] sm:$0xff]
          %v1620 = vld [vmem:[%s637 + $0x50] sm:$0xff]
          %v1621 = vld [vmem:[%s637 + $0x58] sm:$0xff]
          %v1622 = vld [vmem:[%s637 + $0x60] sm:$0xff]
          %v1623 = vld [vmem:[%s637 + $0x68] sm:$0xff]
          %v1624 = vld [vmem:[%s637 + $0x70] sm:$0xff]
          %v1625 = vld [vmem:[%s637 + $0x78] sm:$0xff]
          %v1626 = vld [vmem:[%s637 + $0x80] sm:$0xff]
          %v1627 = vld [vmem:[%s637 + $0x88] sm:$0xff]
          %v1628 = vld [vmem:[%s637 + $0x90] sm:$0xff]
          %v1629 = vld [vmem:[%s637 + $0x98] sm:$0xff]
          %v1630 = vld [vmem:[%s637 + $0xa0] sm:$0xff]
          %v1631 = vld [vmem:[%s637 + $0xa8] sm:$0xff]
          %v1632 = vld [vmem:[%s637 + $0xb0] sm:$0xff]
          %v1633 = vld [vmem:[%s637 + $0xb8] sm:$0xff]
          %v1634 = vld [vmem:[%s637 + $0xc0] sm:$0xff]
          %v1635 = vld [vmem:[%s637 + $0xc8] sm:$0xff]
          %v1636 = vld [vmem:[%s637 + $0xd0] sm:$0xff]
          %v1637 = vld [vmem:[%s637 + $0xd8] sm:$0xff]
          %v1638 = vld [vmem:[%s637 + $0xe0] sm:$0xff]
          %v1639 = vld [vmem:[%s637 + $0xe8] sm:$0xff]
          %v1640 = vld [vmem:[%s637 + $0xf0] sm:$0xff]
          %v1641 = vld [vmem:[%s637 + $0xf8] sm:$0xff]
          %1643 = vset.pattern.permute.xlu0 0
          %1644 = vperm.xlu0 %1643, %v1610
          %v1645 = vpop.permute.xlu0 %1644
          %1648 = vset.pattern.permute.xlu0 0
          %1649 = vperm.xlu0 %1648, %v1611
          %v1650 = vpop.permute.xlu0 %1649
          %1653 = vset.pattern.permute.xlu0 0
          %1654 = vperm.xlu0 %1653, %v1612
          %v1655 = vpop.permute.xlu0 %1654
          %1658 = vset.pattern.permute.xlu0 0
          %1659 = vperm.xlu0 %1658, %v1613
          %v1660 = vpop.permute.xlu0 %1659
          %1663 = vset.pattern.permute.xlu0 0
          %1664 = vperm.xlu0 %1663, %v1614
          %v1665 = vpop.permute.xlu0 %1664
          %1668 = vset.pattern.permute.xlu0 0
          %1669 = vperm.xlu0 %1668, %v1615
          %v1670 = vpop.permute.xlu0 %1669
          %1673 = vset.pattern.permute.xlu0 0
          %1674 = vperm.xlu0 %1673, %v1616
          %v1675 = vpop.permute.xlu0 %1674
          %1678 = vset.pattern.permute.xlu0 0
          %1679 = vperm.xlu0 %1678, %v1617
          %v1680 = vpop.permute.xlu0 %1679
          %1683 = vset.pattern.permute.xlu0 0
          %1684 = vperm.xlu0 %1683, %v1618
          %v1685 = vpop.permute.xlu0 %1684
          %1688 = vset.pattern.permute.xlu0 0
          %1689 = vperm.xlu0 %1688, %v1619
          %v1690 = vpop.permute.xlu0 %1689
          %1693 = vset.pattern.permute.xlu0 0
          %1694 = vperm.xlu0 %1693, %v1620
          %v1695 = vpop.permute.xlu0 %1694
          %1698 = vset.pattern.permute.xlu0 0
          %1699 = vperm.xlu0 %1698, %v1621
          %v1700 = vpop.permute.xlu0 %1699
          %1703 = vset.pattern.permute.xlu0 0
          %1704 = vperm.xlu0 %1703, %v1622
          %v1705 = vpop.permute.xlu0 %1704
          %1708 = vset.pattern.permute.xlu0 0
          %1709 = vperm.xlu0 %1708, %v1623
          %v1710 = vpop.permute.xlu0 %1709
          %1713 = vset.pattern.permute.xlu0 0
          %1714 = vperm.xlu0 %1713, %v1624
          %v1715 = vpop.permute.xlu0 %1714
          %1718 = vset.pattern.permute.xlu0 0
          %1719 = vperm.xlu0 %1718, %v1625
          %v1720 = vpop.permute.xlu0 %1719
          %1723 = vset.pattern.permute.xlu0 0
          %1724 = vperm.xlu0 %1723, %v1626
          %v1725 = vpop.permute.xlu0 %1724
          %1728 = vset.pattern.permute.xlu0 0
          %1729 = vperm.xlu0 %1728, %v1627
          %v1730 = vpop.permute.xlu0 %1729
          %1733 = vset.pattern.permute.xlu0 0
          %1734 = vperm.xlu0 %1733, %v1628
          %v1735 = vpop.permute.xlu0 %1734
          %1738 = vset.pattern.permute.xlu0 0
          %1739 = vperm.xlu0 %1738, %v1629
          %v1740 = vpop.permute.xlu0 %1739
          %1743 = vset.pattern.permute.xlu0 0
          %1744 = vperm.xlu0 %1743, %v1630
          %v1745 = vpop.permute.xlu0 %1744
          %1748 = vset.pattern.permute.xlu0 0
          %1749 = vperm.xlu0 %1748, %v1631
          %v1750 = vpop.permute.xlu0 %1749
          %1753 = vset.pattern.permute.xlu0 0
          %1754 = vperm.xlu0 %1753, %v1632
          %v1755 = vpop.permute.xlu0 %1754
          %1758 = vset.pattern.permute.xlu0 0
          %1759 = vperm.xlu0 %1758, %v1633
          %v1760 = vpop.permute.xlu0 %1759
          %1763 = vset.pattern.permute.xlu0 0
          %1764 = vperm.xlu0 %1763, %v1634
          %v1765 = vpop.permute.xlu0 %1764
          %1768 = vset.pattern.permute.xlu0 0
          %1769 = vperm.xlu0 %1768, %v1635
          %v1770 = vpop.permute.xlu0 %1769
          %1773 = vset.pattern.permute.xlu0 0
          %1774 = vperm.xlu0 %1773, %v1636
          %v1775 = vpop.permute.xlu0 %1774
          %1778 = vset.pattern.permute.xlu0 0
          %1779 = vperm.xlu0 %1778, %v1637
          %v1780 = vpop.permute.xlu0 %1779
          %1783 = vset.pattern.permute.xlu0 0
          %1784 = vperm.xlu0 %1783, %v1638
          %v1785 = vpop.permute.xlu0 %1784
          %1788 = vset.pattern.permute.xlu0 0
          %1789 = vperm.xlu0 %1788, %v1639
          %v1790 = vpop.permute.xlu0 %1789
          %1793 = vset.pattern.permute.xlu0 0
          %1794 = vperm.xlu0 %1793, %v1640
          %v1795 = vpop.permute.xlu0 %1794
          %1798 = vset.pattern.permute.xlu0 0
          %1799 = vperm.xlu0 %1798, %v1641
          %v1800 = vpop.permute.xlu0 %1799
          %v1802 = vmul.f32 %v1546, %v1645
          %v1803 = vmul.f32 %v1547, %v1645
          %v1804 = vmul.f32 %v1548, %v1650
          %v1805 = vmul.f32 %v1549, %v1650
          %v1806 = vmul.f32 %v1550, %v1655
          %v1807 = vmul.f32 %v1551, %v1655
          %v1808 = vmul.f32 %v1552, %v1660
          %v1809 = vmul.f32 %v1553, %v1660
          %v1810 = vmul.f32 %v1554, %v1665
          %v1811 = vmul.f32 %v1555, %v1665
          %v1812 = vmul.f32 %v1556, %v1670
          %v1813 = vmul.f32 %v1557, %v1670
          %v1814 = vmul.f32 %v1558, %v1675
          %v1815 = vmul.f32 %v1559, %v1675
          %v1816 = vmul.f32 %v1560, %v1680
          %v1817 = vmul.f32 %v1561, %v1680
          %v1818 = vmul.f32 %v1562, %v1685
          %v1819 = vmul.f32 %v1563, %v1685
          %v1820 = vmul.f32 %v1564, %v1690
          %v1821 = vmul.f32 %v1565, %v1690
          %v1822 = vmul.f32 %v1566, %v1695
          %v1823 = vmul.f32 %v1567, %v1695
          %v1824 = vmul.f32 %v1568, %v1700
          %v1825 = vmul.f32 %v1569, %v1700
          %v1826 = vmul.f32 %v1570, %v1705
          %v1827 = vmul.f32 %v1571, %v1705
          %v1828 = vmul.f32 %v1572, %v1710
          %v1829 = vmul.f32 %v1573, %v1710
          %v1830 = vmul.f32 %v1574, %v1715
          %v1831 = vmul.f32 %v1575, %v1715
          %v1832 = vmul.f32 %v1576, %v1720
          %v1833 = vmul.f32 %v1577, %v1720
          %v1834 = vmul.f32 %v1578, %v1725
          %v1835 = vmul.f32 %v1579, %v1725
          %v1836 = vmul.f32 %v1580, %v1730
          %v1837 = vmul.f32 %v1581, %v1730
          %v1838 = vmul.f32 %v1582, %v1735
          %v1839 = vmul.f32 %v1583, %v1735
          %v1840 = vmul.f32 %v1584, %v1740
          %v1841 = vmul.f32 %v1585, %v1740
          %v1842 = vmul.f32 %v1586, %v1745
          %v1843 = vmul.f32 %v1587, %v1745
          %v1844 = vmul.f32 %v1588, %v1750
          %v1845 = vmul.f32 %v1589, %v1750
          %v1846 = vmul.f32 %v1590, %v1755
          %v1847 = vmul.f32 %v1591, %v1755
          %v1848 = vmul.f32 %v1592, %v1760
          %v1849 = vmul.f32 %v1593, %v1760
          %v1850 = vmul.f32 %v1594, %v1765
          %v1851 = vmul.f32 %v1595, %v1765
          %v1852 = vmul.f32 %v1596, %v1770
          %v1853 = vmul.f32 %v1597, %v1770
          %v1854 = vmul.f32 %v1598, %v1775
          %v1855 = vmul.f32 %v1599, %v1775
          %v1856 = vmul.f32 %v1600, %v1780
          %v1857 = vmul.f32 %v1601, %v1780
          %v1858 = vmul.f32 %v1602, %v1785
          %v1859 = vmul.f32 %v1603, %v1785
          %v1860 = vmul.f32 %v1604, %v1790
          %v1861 = vmul.f32 %v1605, %v1790
          %v1862 = vmul.f32 %v1606, %v1795
          %v1863 = vmul.f32 %v1607, %v1795
          %v1864 = vmul.f32 %v1608, %v1800
          %v1865 = vmul.f32 %v1609, %v1800
          %v1866 = vpack.c.bf16 %v1804, %v1802
          %v1867 = vpack.c.bf16 %v1805, %v1803
          %v1868 = vpack.c.bf16 %v1808, %v1806
          %v1869 = vpack.c.bf16 %v1809, %v1807
          %v1870 = vpack.c.bf16 %v1812, %v1810
          %v1871 = vpack.c.bf16 %v1813, %v1811
          %v1872 = vpack.c.bf16 %v1816, %v1814
          %v1873 = vpack.c.bf16 %v1817, %v1815
          %v1874 = vpack.c.bf16 %v1820, %v1818
          %v1875 = vpack.c.bf16 %v1821, %v1819
          %v1876 = vpack.c.bf16 %v1824, %v1822
          %v1877 = vpack.c.bf16 %v1825, %v1823
          %v1878 = vpack.c.bf16 %v1828, %v1826
          %v1879 = vpack.c.bf16 %v1829, %v1827
          %v1880 = vpack.c.bf16 %v1832, %v1830
          %v1881 = vpack.c.bf16 %v1833, %v1831
          %v1882 = vpack.c.bf16 %v1836, %v1834
          %v1883 = vpack.c.bf16 %v1837, %v1835
          %v1884 = vpack.c.bf16 %v1840, %v1838
          %v1885 = vpack.c.bf16 %v1841, %v1839
          %v1886 = vpack.c.bf16 %v1844, %v1842
          %v1887 = vpack.c.bf16 %v1845, %v1843
          %v1888 = vpack.c.bf16 %v1848, %v1846
          %v1889 = vpack.c.bf16 %v1849, %v1847
          %v1890 = vpack.c.bf16 %v1852, %v1850
          %v1891 = vpack.c.bf16 %v1853, %v1851
          %v1892 = vpack.c.bf16 %v1856, %v1854
          %v1893 = vpack.c.bf16 %v1857, %v1855
          %v1894 = vpack.c.bf16 %v1860, %v1858
          %v1895 = vpack.c.bf16 %v1861, %v1859
          %v1896 = vpack.c.bf16 %v1864, %v1862
          %v1897 = vpack.c.bf16 %v1865, %v1863
          %v1898 = vld [vmem:[#allocation8] sm:$0xff]
          %v1899 = vld [vmem:[#allocation8 + $0x8] sm:$0xff]
          %v1900 = vld [vmem:[#allocation8 + $0x10] sm:$0xff]
          %v1901 = vld [vmem:[#allocation8 + $0x18] sm:$0xff]
          %v1902 = vld [vmem:[#allocation8 + $0x20] sm:$0xff]
          %v1903 = vld [vmem:[#allocation8 + $0x28] sm:$0xff]
          %v1904 = vld [vmem:[#allocation8 + $0x30] sm:$0xff]
          %v1905 = vld [vmem:[#allocation8 + $0x38] sm:$0xff]
          %v1906 = vld [vmem:[#allocation8 + $0x40] sm:$0xff]
          %v1907 = vld [vmem:[#allocation8 + $0x48] sm:$0xff]
          %v1908 = vld [vmem:[#allocation8 + $0x50] sm:$0xff]
          %v1909 = vld [vmem:[#allocation8 + $0x58] sm:$0xff]
          %v1910 = vld [vmem:[#allocation8 + $0x60] sm:$0xff]
          %v1911 = vld [vmem:[#allocation8 + $0x68] sm:$0xff]
          %v1912 = vld [vmem:[#allocation8 + $0x70] sm:$0xff]
          %v1913 = vld [vmem:[#allocation8 + $0x78] sm:$0xff]
          %v1914 = vld [vmem:[#allocation8 + $0x80] sm:$0xff]
          %v1915 = vld [vmem:[#allocation8 + $0x88] sm:$0xff]
          %v1916 = vld [vmem:[#allocation8 + $0x90] sm:$0xff]
          %v1917 = vld [vmem:[#allocation8 + $0x98] sm:$0xff]
          %v1918 = vld [vmem:[#allocation8 + $0xa0] sm:$0xff]
          %v1919 = vld [vmem:[#allocation8 + $0xa8] sm:$0xff]
          %v1920 = vld [vmem:[#allocation8 + $0xb0] sm:$0xff]
          %v1921 = vld [vmem:[#allocation8 + $0xb8] sm:$0xff]
          %v1922 = vld [vmem:[#allocation8 + $0xc0] sm:$0xff]
          %v1923 = vld [vmem:[#allocation8 + $0xc8] sm:$0xff]
          %v1924 = vld [vmem:[#allocation8 + $0xd0] sm:$0xff]
          %v1925 = vld [vmem:[#allocation8 + $0xd8] sm:$0xff]
          %v1926 = vld [vmem:[#allocation8 + $0xe0] sm:$0xff]
          %v1927 = vld [vmem:[#allocation8 + $0xe8] sm:$0xff]
          %v1928 = vld [vmem:[#allocation8 + $0xf0] sm:$0xff]
          %v1929 = vld [vmem:[#allocation8 + $0xf8] sm:$0xff]
          %v1930 = vpack.c.bf16 %v1484, %v1482
          %v1931 = vpack.c.bf16 %v1485, %v1483
          %v1932 = vpack.c.bf16 %v1488, %v1486
          %v1933 = vpack.c.bf16 %v1489, %v1487
          %v1934 = vpack.c.bf16 %v1492, %v1490
          %v1935 = vpack.c.bf16 %v1493, %v1491
          %v1936 = vpack.c.bf16 %v1496, %v1494
          %v1937 = vpack.c.bf16 %v1497, %v1495
          %v1938 = vpack.c.bf16 %v1500, %v1498
          %v1939 = vpack.c.bf16 %v1501, %v1499
          %v1940 = vpack.c.bf16 %v1504, %v1502
          %v1941 = vpack.c.bf16 %v1505, %v1503
          %v1942 = vpack.c.bf16 %v1508, %v1506
          %v1943 = vpack.c.bf16 %v1509, %v1507
          %v1944 = vpack.c.bf16 %v1512, %v1510
          %v1945 = vpack.c.bf16 %v1513, %v1511
          %v1946 = vpack.c.bf16 %v1516, %v1514
          %v1947 = vpack.c.bf16 %v1517, %v1515
          %v1948 = vpack.c.bf16 %v1520, %v1518
          %v1949 = vpack.c.bf16 %v1521, %v1519
          %v1950 = vpack.c.bf16 %v1524, %v1522
          %v1951 = vpack.c.bf16 %v1525, %v1523
          %v1952 = vpack.c.bf16 %v1528, %v1526
          %v1953 = vpack.c.bf16 %v1529, %v1527
          %v1954 = vpack.c.bf16 %v1532, %v1530
          %v1955 = vpack.c.bf16 %v1533, %v1531
          %v1956 = vpack.c.bf16 %v1536, %v1534
          %v1957 = vpack.c.bf16 %v1537, %v1535
          %v1958 = vpack.c.bf16 %v1540, %v1538
          %v1959 = vpack.c.bf16 %v1541, %v1539
          %v1960 = vpack.c.bf16 %v1544, %v1542
          %v1961 = vpack.c.bf16 %v1545, %v1543
          %v1962 = vld [vmem:[#allocation9] sm:$0xff]
          %v1963 = vld [vmem:[#allocation9 + $0x8] sm:$0xff]
          %v1964 = vld [vmem:[#allocation9 + $0x10] sm:$0xff]
          %v1965 = vld [vmem:[#allocation9 + $0x18] sm:$0xff]
          %v1966 = vld [vmem:[#allocation9 + $0x20] sm:$0xff]
          %v1967 = vld [vmem:[#allocation9 + $0x28] sm:$0xff]
          %v1968 = vld [vmem:[#allocation9 + $0x30] sm:$0xff]
          %v1969 = vld [vmem:[#allocation9 + $0x38] sm:$0xff]
          %v1970 = vld [vmem:[#allocation9 + $0x40] sm:$0xff]
          %v1971 = vld [vmem:[#allocation9 + $0x48] sm:$0xff]
          %v1972 = vld [vmem:[#allocation9 + $0x50] sm:$0xff]
          %v1973 = vld [vmem:[#allocation9 + $0x58] sm:$0xff]
          %v1974 = vld [vmem:[#allocation9 + $0x60] sm:$0xff]
          %v1975 = vld [vmem:[#allocation9 + $0x68] sm:$0xff]
          %v1976 = vld [vmem:[#allocation9 + $0x70] sm:$0xff]
          %v1977 = vld [vmem:[#allocation9 + $0x78] sm:$0xff]
          %v1978 = vld [vmem:[#allocation9 + $0x80] sm:$0xff]
          %v1979 = vld [vmem:[#allocation9 + $0x88] sm:$0xff]
          %v1980 = vld [vmem:[#allocation9 + $0x90] sm:$0xff]
          %v1981 = vld [vmem:[#allocation9 + $0x98] sm:$0xff]
          %v1982 = vld [vmem:[#allocation9 + $0xa0] sm:$0xff]
          %v1983 = vld [vmem:[#allocation9 + $0xa8] sm:$0xff]
          %v1984 = vld [vmem:[#allocation9 + $0xb0] sm:$0xff]
          %v1985 = vld [vmem:[#allocation9 + $0xb8] sm:$0xff]
          %v1986 = vld [vmem:[#allocation9 + $0xc0] sm:$0xff]
          %v1987 = vld [vmem:[#allocation9 + $0xc8] sm:$0xff]
          %v1988 = vld [vmem:[#allocation9 + $0xd0] sm:$0xff]
          %v1989 = vld [vmem:[#allocation9 + $0xd8] sm:$0xff]
          %v1990 = vld [vmem:[#allocation9 + $0xe0] sm:$0xff]
          %v1991 = vld [vmem:[#allocation9 + $0xe8] sm:$0xff]
          %v1992 = vld [vmem:[#allocation9 + $0xf0] sm:$0xff]
          %v1993 = vld [vmem:[#allocation9 + $0xf8] sm:$0xff]
          %v2026 = vunpack.c.l.b16 %v1962
          %v2027 = vunpack.c.h.b16 %v1962
          %v2028 = vunpack.c.l.b16 %v1963
          %v2029 = vunpack.c.h.b16 %v1963
          %v2030 = vunpack.c.l.b16 %v1964
          %v2031 = vunpack.c.h.b16 %v1964
          %v2032 = vunpack.c.l.b16 %v1965
          %v2033 = vunpack.c.h.b16 %v1965
          %v2034 = vunpack.c.l.b16 %v1966
          %v2035 = vunpack.c.h.b16 %v1966
          %v2036 = vunpack.c.l.b16 %v1967
          %v2037 = vunpack.c.h.b16 %v1967
          %v2038 = vunpack.c.l.b16 %v1968
          %v2039 = vunpack.c.h.b16 %v1968
          %v2040 = vunpack.c.l.b16 %v1969
          %v2041 = vunpack.c.h.b16 %v1969
          %v2042 = vunpack.c.l.b16 %v1970
          %v2043 = vunpack.c.h.b16 %v1970
          %v2044 = vunpack.c.l.b16 %v1971
          %v2045 = vunpack.c.h.b16 %v1971
          %v2046 = vunpack.c.l.b16 %v1972
          %v2047 = vunpack.c.h.b16 %v1972
          %v2048 = vunpack.c.l.b16 %v1973
          %v2049 = vunpack.c.h.b16 %v1973
          %v2050 = vunpack.c.l.b16 %v1974
          %v2051 = vunpack.c.h.b16 %v1974
          %v2052 = vunpack.c.l.b16 %v1975
          %v2053 = vunpack.c.h.b16 %v1975
          %v2054 = vunpack.c.l.b16 %v1976
          %v2055 = vunpack.c.h.b16 %v1976
          %v2056 = vunpack.c.l.b16 %v1977
          %v2057 = vunpack.c.h.b16 %v1977
          %v2058 = vunpack.c.l.b16 %v1978
          %v2059 = vunpack.c.h.b16 %v1978
          %v2060 = vunpack.c.l.b16 %v1979
          %v2061 = vunpack.c.h.b16 %v1979
          %v2062 = vunpack.c.l.b16 %v1980
          %v2063 = vunpack.c.h.b16 %v1980
          %v2064 = vunpack.c.l.b16 %v1981
          %v2065 = vunpack.c.h.b16 %v1981
          %v2066 = vunpack.c.l.b16 %v1982
          %v2067 = vunpack.c.h.b16 %v1982
          %v2068 = vunpack.c.l.b16 %v1983
          %v2069 = vunpack.c.h.b16 %v1983
          %v2070 = vunpack.c.l.b16 %v1984
          %v2071 = vunpack.c.h.b16 %v1984
          %v2072 = vunpack.c.l.b16 %v1985
          %v2073 = vunpack.c.h.b16 %v1985
          %v2074 = vunpack.c.l.b16 %v1986
          %v2075 = vunpack.c.h.b16 %v1986
          %v2076 = vunpack.c.l.b16 %v1987
          %v2077 = vunpack.c.h.b16 %v1987
          %v2078 = vunpack.c.l.b16 %v1988
          %v2079 = vunpack.c.h.b16 %v1988
          %v2080 = vunpack.c.l.b16 %v1989
          %v2081 = vunpack.c.h.b16 %v1989
          %v2082 = vunpack.c.l.b16 %v1990
          %v2083 = vunpack.c.h.b16 %v1990
          %v2084 = vunpack.c.l.b16 %v1991
          %v2085 = vunpack.c.h.b16 %v1991
          %v2086 = vunpack.c.l.b16 %v1992
          %v2087 = vunpack.c.h.b16 %v1992
          %v2088 = vunpack.c.l.b16 %v1993
          %v2089 = vunpack.c.h.b16 %v1993
          %v2090 = vpack.c.b16 %v2028, %v2026
          %v2091 = vpack.c.b16 %v2029, %v2027
          %v2092 = vpack.c.b16 %v2032, %v2030
          %v2093 = vpack.c.b16 %v2033, %v2031
          %v2094 = vpack.c.b16 %v2036, %v2034
          %v2095 = vpack.c.b16 %v2037, %v2035
          %v2096 = vpack.c.b16 %v2040, %v2038
          %v2097 = vpack.c.b16 %v2041, %v2039
          %v2098 = vpack.c.b16 %v2044, %v2042
          %v2099 = vpack.c.b16 %v2045, %v2043
          %v2100 = vpack.c.b16 %v2048, %v2046
          %v2101 = vpack.c.b16 %v2049, %v2047
          %v2102 = vpack.c.b16 %v2052, %v2050
          %v2103 = vpack.c.b16 %v2053, %v2051
          %v2104 = vpack.c.b16 %v2056, %v2054
          %v2105 = vpack.c.b16 %v2057, %v2055
          %v2106 = vpack.c.b16 %v2060, %v2058
          %v2107 = vpack.c.b16 %v2061, %v2059
          %v2108 = vpack.c.b16 %v2064, %v2062
          %v2109 = vpack.c.b16 %v2065, %v2063
          %v2110 = vpack.c.b16 %v2068, %v2066
          %v2111 = vpack.c.b16 %v2069, %v2067
          %v2112 = vpack.c.b16 %v2072, %v2070
          %v2113 = vpack.c.b16 %v2073, %v2071
          %v2114 = vpack.c.b16 %v2076, %v2074
          %v2115 = vpack.c.b16 %v2077, %v2075
          %v2116 = vpack.c.b16 %v2080, %v2078
          %v2117 = vpack.c.b16 %v2081, %v2079
          %v2118 = vpack.c.b16 %v2084, %v2082
          %v2119 = vpack.c.b16 %v2085, %v2083
          %v2120 = vpack.c.b16 %v2088, %v2086
          %v2121 = vpack.c.b16 %v2089, %v2087
          %2154 = vmatprep.subr.bf16.mxu0 %v2091
          %2155 = vmatpush1.bf16.msra.mxu0 %v2090
          %2156 = vmatprep.subr.bf16.mxu0 %v2093
          %2157 = vmatpush1.bf16.msra.mxu0 %v2092
          %2158 = vmatprep.subr.bf16.mxu0 %v2095
          %2159 = vmatpush1.bf16.msra.mxu0 %v2094
          %2160 = vmatprep.subr.bf16.mxu0 %v2097
          %2161 = vmatpush1.bf16.msra.mxu0 %v2096
          %2162 = vmatprep.subr.bf16.mxu0 %v2099
          %2163 = vmatpush1.bf16.msra.mxu0 %v2098
          %2164 = vmatprep.subr.bf16.mxu0 %v2101
          %2165 = vmatpush1.bf16.msra.mxu0 %v2100
          %2166 = vmatprep.subr.bf16.mxu0 %v2103
          %2167 = vmatpush1.bf16.msra.mxu0 %v2102
          %2168 = vmatprep.subr.bf16.mxu0 %v2105
          %2169 = vmatpush1.bf16.msra.mxu0 %v2104
          %2170 = vmatprep.subr.bf16.mxu0 %v2107
          %2171 = vmatpush1.bf16.msra.mxu0 %v2106
          %2172 = vmatprep.subr.bf16.mxu0 %v2109
          %2173 = vmatpush1.bf16.msra.mxu0 %v2108
          %2174 = vmatprep.subr.bf16.mxu0 %v2111
          %2175 = vmatpush1.bf16.msra.mxu0 %v2110
          %2176 = vmatprep.subr.bf16.mxu0 %v2113
          %2177 = vmatpush1.bf16.msra.mxu0 %v2112
          %2178 = vmatprep.subr.bf16.mxu0 %v2115
          %2179 = vmatpush1.bf16.msra.mxu0 %v2114
          %2180 = vmatprep.subr.bf16.mxu0 %v2117
          %2181 = vmatpush1.bf16.msra.mxu0 %v2116
          %2182 = vmatprep.subr.bf16.mxu0 %v2119
          %2183 = vmatpush1.bf16.msra.mxu0 %v2118
          %2184 = vmatprep.subr.bf16.mxu0 %v2121
          %2185 = vmatpush1.bf16.msra.mxu0 %v2120
          %2186 = vmatprep.mubr.bf16.mxu0 %v1931
          %2187 = vmatmul.mubr.bf16.gmra.mrb[0].mxu0 %v1930
          %v2188 = vpop.f32.mrb[0].mxu0
          %v2189 = vadd.f32 0.0, %v2188
          %v2190 = vpop.f32.mrb[0].mxu0
          %v2191 = vadd.f32 0.0, %v2190
          %v2192 = vpop.f32.mrb[0].mxu0
          %v2193 = vadd.f32 0.0, %v2192
          %v2194 = vpop.f32.mrb[0].mxu0
          %v2195 = vadd.f32 0.0, %v2194
          %2196 = vmatprep.mubr.bf16.mxu0 %v1933
          %2197 = vmatmul.mubr.bf16.gmra.mrb[0].mxu0 %v1932
          %v2198 = vpop.f32.mrb[0].mxu0
          %v2199 = vadd.f32 0.0, %v2198
          %v2200 = vpop.f32.mrb[0].mxu0
          %v2201 = vadd.f32 0.0, %v2200
          %v2202 = vpop.f32.mrb[0].mxu0
          %v2203 = vadd.f32 0.0, %v2202
          %v2204 = vpop.f32.mrb[0].mxu0
          %v2205 = vadd.f32 0.0, %v2204
          %2206 = vmatprep.mubr.bf16.mxu0 %v1935
          %2207 = vmatmul.mubr.bf16.gmra.mrb[0].mxu0 %v1934
          %v2208 = vpop.f32.mrb[0].mxu0
          %v2209 = vadd.f32 0.0, %v2208
          %v2210 = vpop.f32.mrb[0].mxu0
          %v2211 = vadd.f32 0.0, %v2210
          %v2212 = vpop.f32.mrb[0].mxu0
          %v2213 = vadd.f32 0.0, %v2212
          %v2214 = vpop.f32.mrb[0].mxu0
          %v2215 = vadd.f32 0.0, %v2214
          %2216 = vmatprep.mubr.bf16.mxu0 %v1937
          %2217 = vmatmul.mubr.bf16.gmra.mrb[0].mxu0 %v1936
          %v2218 = vpop.f32.mrb[0].mxu0
          %v2219 = vadd.f32 0.0, %v2218
          %v2220 = vpop.f32.mrb[0].mxu0
          %v2221 = vadd.f32 0.0, %v2220
          %v2222 = vpop.f32.mrb[0].mxu0
          %v2223 = vadd.f32 0.0, %v2222
          %v2224 = vpop.f32.mrb[0].mxu0
          %v2225 = vadd.f32 0.0, %v2224
          %2226 = vmatprep.mubr.bf16.mxu0 %v1939
          %2227 = vmatmul.mubr.bf16.gmra.mrb[0].mxu0 %v1938
          %v2228 = vpop.f32.mrb[0].mxu0
          %v2229 = vadd.f32 0.0, %v2228
          %v2230 = vpop.f32.mrb[0].mxu0
          %v2231 = vadd.f32 0.0, %v2230
          %v2232 = vpop.f32.mrb[0].mxu0
          %v2233 = vadd.f32 0.0, %v2232
          %v2234 = vpop.f32.mrb[0].mxu0
          %v2235 = vadd.f32 0.0, %v2234
          %2236 = vmatprep.mubr.bf16.mxu0 %v1941
          %2237 = vmatmul.mubr.bf16.gmra.mrb[0].mxu0 %v1940
          %v2238 = vpop.f32.mrb[0].mxu0
          %v2239 = vadd.f32 0.0, %v2238
          %v2240 = vpop.f32.mrb[0].mxu0
          %v2241 = vadd.f32 0.0, %v2240
          %v2242 = vpop.f32.mrb[0].mxu0
          %v2243 = vadd.f32 0.0, %v2242
          %v2244 = vpop.f32.mrb[0].mxu0
          %v2245 = vadd.f32 0.0, %v2244
          %2246 = vmatprep.mubr.bf16.mxu0 %v1943
          %2247 = vmatmul.mubr.bf16.gmra.mrb[0].mxu0 %v1942
          %v2248 = vpop.f32.mrb[0].mxu0
          %v2249 = vadd.f32 0.0, %v2248
          %v2250 = vpop.f32.mrb[0].mxu0
          %v2251 = vadd.f32 0.0, %v2250
          %v2252 = vpop.f32.mrb[0].mxu0
          %v2253 = vadd.f32 0.0, %v2252
          %v2254 = vpop.f32.mrb[0].mxu0
          %v2255 = vadd.f32 0.0, %v2254
          %2256 = vmatprep.mubr.bf16.mxu0 %v1945
          %2257 = vmatmul.mubr.bf16.gmra.mrb[0].mxu0 %v1944
          %v2258 = vpop.f32.mrb[0].mxu0
          %v2259 = vadd.f32 0.0, %v2258
          %v2260 = vpop.f32.mrb[0].mxu0
          %v2261 = vadd.f32 0.0, %v2260
          %v2262 = vpop.f32.mrb[0].mxu0
          %v2263 = vadd.f32 0.0, %v2262
          %v2264 = vpop.f32.mrb[0].mxu0
          %v2265 = vadd.f32 0.0, %v2264
          %2266 = vmatprep.mubr.bf16.mxu0 %v1947
          %2267 = vmatmul.mubr.bf16.gmra.mrb[0].mxu0 %v1946
          %v2268 = vpop.f32.mrb[0].mxu0
          %v2269 = vadd.f32 0.0, %v2268
          %v2270 = vpop.f32.mrb[0].mxu0
          %v2271 = vadd.f32 0.0, %v2270
          %v2272 = vpop.f32.mrb[0].mxu0
          %v2273 = vadd.f32 0.0, %v2272
          %v2274 = vpop.f32.mrb[0].mxu0
          %v2275 = vadd.f32 0.0, %v2274
          %2276 = vmatprep.mubr.bf16.mxu0 %v1949
          %2277 = vmatmul.mubr.bf16.gmra.mrb[0].mxu0 %v1948
          %v2278 = vpop.f32.mrb[0].mxu0
          %v2279 = vadd.f32 0.0, %v2278
          %v2280 = vpop.f32.mrb[0].mxu0
          %v2281 = vadd.f32 0.0, %v2280
          %v2282 = vpop.f32.mrb[0].mxu0
          %v2283 = vadd.f32 0.0, %v2282
          %v2284 = vpop.f32.mrb[0].mxu0
          %v2285 = vadd.f32 0.0, %v2284
          %2286 = vmatprep.mubr.bf16.mxu0 %v1951
          %2287 = vmatmul.mubr.bf16.gmra.mrb[0].mxu0 %v1950
          %v2288 = vpop.f32.mrb[0].mxu0
          %v2289 = vadd.f32 0.0, %v2288
          %v2290 = vpop.f32.mrb[0].mxu0
          %v2291 = vadd.f32 0.0, %v2290
          %v2292 = vpop.f32.mrb[0].mxu0
          %v2293 = vadd.f32 0.0, %v2292
          %v2294 = vpop.f32.mrb[0].mxu0
          %v2295 = vadd.f32 0.0, %v2294
          %2296 = vmatprep.mubr.bf16.mxu0 %v1953
          %2297 = vmatmul.mubr.bf16.gmra.mrb[0].mxu0 %v1952
          %v2298 = vpop.f32.mrb[0].mxu0
          %v2299 = vadd.f32 0.0, %v2298
          %v2300 = vpop.f32.mrb[0].mxu0
          %v2301 = vadd.f32 0.0, %v2300
          %v2302 = vpop.f32.mrb[0].mxu0
          %v2303 = vadd.f32 0.0, %v2302
          %v2304 = vpop.f32.mrb[0].mxu0
          %v2305 = vadd.f32 0.0, %v2304
          %2306 = vmatprep.mubr.bf16.mxu0 %v1955
          %2307 = vmatmul.mubr.bf16.gmra.mrb[0].mxu0 %v1954
          %v2308 = vpop.f32.mrb[0].mxu0
          %v2309 = vadd.f32 0.0, %v2308
          %v2310 = vpop.f32.mrb[0].mxu0
          %v2311 = vadd.f32 0.0, %v2310
          %v2312 = vpop.f32.mrb[0].mxu0
          %v2313 = vadd.f32 0.0, %v2312
          %v2314 = vpop.f32.mrb[0].mxu0
          %v2315 = vadd.f32 0.0, %v2314
          %2316 = vmatprep.mubr.bf16.mxu0 %v1957
          %2317 = vmatmul.mubr.bf16.gmra.mrb[0].mxu0 %v1956
          %v2318 = vpop.f32.mrb[0].mxu0
          %v2319 = vadd.f32 0.0, %v2318
          %v2320 = vpop.f32.mrb[0].mxu0
          %v2321 = vadd.f32 0.0, %v2320
          %v2322 = vpop.f32.mrb[0].mxu0
          %v2323 = vadd.f32 0.0, %v2322
          %v2324 = vpop.f32.mrb[0].mxu0
          %v2325 = vadd.f32 0.0, %v2324
          %2326 = vmatprep.mubr.bf16.mxu0 %v1959
          %2327 = vmatmul.mubr.bf16.gmra.mrb[0].mxu0 %v1958
          %v2328 = vpop.f32.mrb[0].mxu0
          %v2329 = vadd.f32 0.0, %v2328
          %v2330 = vpop.f32.mrb[0].mxu0
          %v2331 = vadd.f32 0.0, %v2330
          %v2332 = vpop.f32.mrb[0].mxu0
          %v2333 = vadd.f32 0.0, %v2332
          %v2334 = vpop.f32.mrb[0].mxu0
          %v2335 = vadd.f32 0.0, %v2334
          %2336 = vmatprep.mubr.bf16.mxu0 %v1961
          %2337 = vmatmul.mubr.bf16.gmra.mrb[0].mxu0 %v1960
          %v2338 = vpop.f32.mrb[0].mxu0
          %v2339 = vadd.f32 0.0, %v2338
          %v2340 = vpop.f32.mrb[0].mxu0
          %v2341 = vadd.f32 0.0, %v2340
          %v2342 = vpop.f32.mrb[0].mxu0
          %v2343 = vadd.f32 0.0, %v2342
          %v2344 = vpop.f32.mrb[0].mxu0
          %v2345 = vadd.f32 0.0, %v2344
          %2346 = vdwg.mxu0
          %v2379 = vunpack.c.l.b16 %v1898
          %v2380 = vunpack.c.h.b16 %v1898
          %v2381 = vunpack.c.l.b16 %v1899
          %v2382 = vunpack.c.h.b16 %v1899
          %v2383 = vunpack.c.l.b16 %v1900
          %v2384 = vunpack.c.h.b16 %v1900
          %v2385 = vunpack.c.l.b16 %v1901
          %v2386 = vunpack.c.h.b16 %v1901
          %v2387 = vunpack.c.l.b16 %v1902
          %v2388 = vunpack.c.h.b16 %v1902
          %v2389 = vunpack.c.l.b16 %v1903
          %v2390 = vunpack.c.h.b16 %v1903
          %v2391 = vunpack.c.l.b16 %v1904
          %v2392 = vunpack.c.h.b16 %v1904
          %v2393 = vunpack.c.l.b16 %v1905
          %v2394 = vunpack.c.h.b16 %v1905
          %v2395 = vunpack.c.l.b16 %v1906
          %v2396 = vunpack.c.h.b16 %v1906
          %v2397 = vunpack.c.l.b16 %v1907
          %v2398 = vunpack.c.h.b16 %v1907
          %v2399 = vunpack.c.l.b16 %v1908
          %v2400 = vunpack.c.h.b16 %v1908
          %v2401 = vunpack.c.l.b16 %v1909
          %v2402 = vunpack.c.h.b16 %v1909
          %v2403 = vunpack.c.l.b16 %v1910
          %v2404 = vunpack.c.h.b16 %v1910
          %v2405 = vunpack.c.l.b16 %v1911
          %v2406 = vunpack.c.h.b16 %v1911
          %v2407 = vunpack.c.l.b16 %v1912
          %v2408 = vunpack.c.h.b16 %v1912
          %v2409 = vunpack.c.l.b16 %v1913
          %v2410 = vunpack.c.h.b16 %v1913
          %v2411 = vunpack.c.l.b16 %v1914
          %v2412 = vunpack.c.h.b16 %v1914
          %v2413 = vunpack.c.l.b16 %v1915
          %v2414 = vunpack.c.h.b16 %v1915
          %v2415 = vunpack.c.l.b16 %v1916
          %v2416 = vunpack.c.h.b16 %v1916
          %v2417 = vunpack.c.l.b16 %v1917
          %v2418 = vunpack.c.h.b16 %v1917
          %v2419 = vunpack.c.l.b16 %v1918
          %v2420 = vunpack.c.h.b16 %v1918
          %v2421 = vunpack.c.l.b16 %v1919
          %v2422 = vunpack.c.h.b16 %v1919
          %v2423 = vunpack.c.l.b16 %v1920
          %v2424 = vunpack.c.h.b16 %v1920
          %v2425 = vunpack.c.l.b16 %v1921
          %v2426 = vunpack.c.h.b16 %v1921
          %v2427 = vunpack.c.l.b16 %v1922
          %v2428 = vunpack.c.h.b16 %v1922
          %v2429 = vunpack.c.l.b16 %v1923
          %v2430 = vunpack.c.h.b16 %v1923
          %v2431 = vunpack.c.l.b16 %v1924
          %v2432 = vunpack.c.h.b16 %v1924
          %v2433 = vunpack.c.l.b16 %v1925
          %v2434 = vunpack.c.h.b16 %v1925
          %v2435 = vunpack.c.l.b16 %v1926
          %v2436 = vunpack.c.h.b16 %v1926
          %v2437 = vunpack.c.l.b16 %v1927
          %v2438 = vunpack.c.h.b16 %v1927
          %v2439 = vunpack.c.l.b16 %v1928
          %v2440 = vunpack.c.h.b16 %v1928
          %v2441 = vunpack.c.l.b16 %v1929
          %v2442 = vunpack.c.h.b16 %v1929
          %v2443 = vpack.c.b16 %v2381, %v2379
          %v2444 = vpack.c.b16 %v2382, %v2380
          %v2445 = vpack.c.b16 %v2385, %v2383
          %v2446 = vpack.c.b16 %v2386, %v2384
          %v2447 = vpack.c.b16 %v2389, %v2387
          %v2448 = vpack.c.b16 %v2390, %v2388
          %v2449 = vpack.c.b16 %v2393, %v2391
          %v2450 = vpack.c.b16 %v2394, %v2392
          %v2451 = vpack.c.b16 %v2397, %v2395
          %v2452 = vpack.c.b16 %v2398, %v2396
          %v2453 = vpack.c.b16 %v2401, %v2399
          %v2454 = vpack.c.b16 %v2402, %v2400
          %v2455 = vpack.c.b16 %v2405, %v2403
          %v2456 = vpack.c.b16 %v2406, %v2404
          %v2457 = vpack.c.b16 %v2409, %v2407
          %v2458 = vpack.c.b16 %v2410, %v2408
          %v2459 = vpack.c.b16 %v2413, %v2411
          %v2460 = vpack.c.b16 %v2414, %v2412
          %v2461 = vpack.c.b16 %v2417, %v2415
          %v2462 = vpack.c.b16 %v2418, %v2416
          %v2463 = vpack.c.b16 %v2421, %v2419
          %v2464 = vpack.c.b16 %v2422, %v2420
          %v2465 = vpack.c.b16 %v2425, %v2423
          %v2466 = vpack.c.b16 %v2426, %v2424
          %v2467 = vpack.c.b16 %v2429, %v2427
          %v2468 = vpack.c.b16 %v2430, %v2428
          %v2469 = vpack.c.b16 %v2433, %v2431
          %v2470 = vpack.c.b16 %v2434, %v2432
          %v2471 = vpack.c.b16 %v2437, %v2435
          %v2472 = vpack.c.b16 %v2438, %v2436
          %v2473 = vpack.c.b16 %v2441, %v2439
          %v2474 = vpack.c.b16 %v2442, %v2440
          %2507 = vmatprep.subr.bf16.mxu0 %v2444
          %2508 = vmatpush1.bf16.msra.mxu0 %v2443
          %2509 = vmatprep.subr.bf16.mxu0 %v2446
          %2510 = vmatpush1.bf16.msra.mxu0 %v2445
          %2511 = vmatprep.subr.bf16.mxu0 %v2448
          %2512 = vmatpush1.bf16.msra.mxu0 %v2447
          %2513 = vmatprep.subr.bf16.mxu0 %v2450
          %2514 = vmatpush1.bf16.msra.mxu0 %v2449
          %2515 = vmatprep.subr.bf16.mxu0 %v2452
          %2516 = vmatpush1.bf16.msra.mxu0 %v2451
          %2517 = vmatprep.subr.bf16.mxu0 %v2454
          %2518 = vmatpush1.bf16.msra.mxu0 %v2453
          %2519 = vmatprep.subr.bf16.mxu0 %v2456
          %2520 = vmatpush1.bf16.msra.mxu0 %v2455
          %2521 = vmatprep.subr.bf16.mxu0 %v2458
          %2522 = vmatpush1.bf16.msra.mxu0 %v2457
          %2523 = vmatprep.subr.bf16.mxu0 %v2460
          %2524 = vmatpush1.bf16.msra.mxu0 %v2459
          %2525 = vmatprep.subr.bf16.mxu0 %v2462
          %2526 = vmatpush1.bf16.msra.mxu0 %v2461
          %2527 = vmatprep.subr.bf16.mxu0 %v2464
          %2528 = vmatpush1.bf16.msra.mxu0 %v2463
          %2529 = vmatprep.subr.bf16.mxu0 %v2466
          %2530 = vmatpush1.bf16.msra.mxu0 %v2465
          %2531 = vmatprep.subr.bf16.mxu0 %v2468
          %2532 = vmatpush1.bf16.msra.mxu0 %v2467
          %2533 = vmatprep.subr.bf16.mxu0 %v2470
          %2534 = vmatpush1.bf16.msra.mxu0 %v2469
          %2535 = vmatprep.subr.bf16.mxu0 %v2472
          %2536 = vmatpush1.bf16.msra.mxu0 %v2471
          %2537 = vmatprep.subr.bf16.mxu0 %v2474
          %2538 = vmatpush1.bf16.msra.mxu0 %v2473
          %2539 = vmatprep.mubr.bf16.mxu0 %v1867
          %2540 = vmatmul.mubr.bf16.gmra.mrb[0].mxu0 %v1866
          %v2541 = vpop.f32.mrb[0].mxu0
          %v2542 = vadd.f32 %v2189, %v2541
          %v2543 = vpop.f32.mrb[0].mxu0
          %v2544 = vadd.f32 %v2191, %v2543
          %v2545 = vpop.f32.mrb[0].mxu0
          %v2546 = vadd.f32 %v2193, %v2545
          %v2547 = vpop.f32.mrb[0].mxu0
          %v2548 = vadd.f32 %v2195, %v2547
          %2549 = vmatprep.mubr.bf16.mxu0 %v1869
          %2550 = vmatmul.mubr.bf16.gmra.mrb[0].mxu0 %v1868
          %v2551 = vpop.f32.mrb[0].mxu0
          %v2552 = vadd.f32 %v2199, %v2551
          %v2553 = vpop.f32.mrb[0].mxu0
          %v2554 = vadd.f32 %v2201, %v2553
          %v2555 = vpop.f32.mrb[0].mxu0
          %v2556 = vadd.f32 %v2203, %v2555
          %v2557 = vpop.f32.mrb[0].mxu0
          %v2558 = vadd.f32 %v2205, %v2557
          %2559 = vmatprep.mubr.bf16.mxu0 %v1871
          %2560 = vmatmul.mubr.bf16.gmra.mrb[0].mxu0 %v1870
          %v2561 = vpop.f32.mrb[0].mxu0
          %v2562 = vadd.f32 %v2209, %v2561
          %v2563 = vpop.f32.mrb[0].mxu0
          %v2564 = vadd.f32 %v2211, %v2563
          %v2565 = vpop.f32.mrb[0].mxu0
          %v2566 = vadd.f32 %v2213, %v2565
          %v2567 = vpop.f32.mrb[0].mxu0
          %v2568 = vadd.f32 %v2215, %v2567
          %2569 = vmatprep.mubr.bf16.mxu0 %v1873
          %2570 = vmatmul.mubr.bf16.gmra.mrb[0].mxu0 %v1872
          %v2571 = vpop.f32.mrb[0].mxu0
          %v2572 = vadd.f32 %v2219, %v2571
          %v2573 = vpop.f32.mrb[0].mxu0
          %v2574 = vadd.f32 %v2221, %v2573
          %v2575 = vpop.f32.mrb[0].mxu0
          %v2576 = vadd.f32 %v2223, %v2575
          %v2577 = vpop.f32.mrb[0].mxu0
          %v2578 = vadd.f32 %v2225, %v2577
          %2579 = vmatprep.mubr.bf16.mxu0 %v1875
          %2580 = vmatmul.mubr.bf16.gmra.mrb[0].mxu0 %v1874
          %v2581 = vpop.f32.mrb[0].mxu0
          %v2582 = vadd.f32 %v2229, %v2581
          %v2583 = vpop.f32.mrb[0].mxu0
          %v2584 = vadd.f32 %v2231, %v2583
          %v2585 = vpop.f32.mrb[0].mxu0
          %v2586 = vadd.f32 %v2233, %v2585
          %v2587 = vpop.f32.mrb[0].mxu0
          %v2588 = vadd.f32 %v2235, %v2587
          %2589 = vmatprep.mubr.bf16.mxu0 %v1877
          %2590 = vmatmul.mubr.bf16.gmra.mrb[0].mxu0 %v1876
          %v2591 = vpop.f32.mrb[0].mxu0
          %v2592 = vadd.f32 %v2239, %v2591
          %v2593 = vpop.f32.mrb[0].mxu0
          %v2594 = vadd.f32 %v2241, %v2593
          %v2595 = vpop.f32.mrb[0].mxu0
          %v2596 = vadd.f32 %v2243, %v2595
          %v2597 = vpop.f32.mrb[0].mxu0
          %v2598 = vadd.f32 %v2245, %v2597
          %2599 = vmatprep.mubr.bf16.mxu0 %v1879
          %2600 = vmatmul.mubr.bf16.gmra.mrb[0].mxu0 %v1878
          %v2601 = vpop.f32.mrb[0].mxu0
          %v2602 = vadd.f32 %v2249, %v2601
          %v2603 = vpop.f32.mrb[0].mxu0
          %v2604 = vadd.f32 %v2251, %v2603
          %v2605 = vpop.f32.mrb[0].mxu0
          %v2606 = vadd.f32 %v2253, %v2605
          %v2607 = vpop.f32.mrb[0].mxu0
          %v2608 = vadd.f32 %v2255, %v2607
          %2609 = vmatprep.mubr.bf16.mxu0 %v1881
          %2610 = vmatmul.mubr.bf16.gmra.mrb[0].mxu0 %v1880
          %v2611 = vpop.f32.mrb[0].mxu0
          %v2612 = vadd.f32 %v2259, %v2611
          %v2613 = vpop.f32.mrb[0].mxu0
          %v2614 = vadd.f32 %v2261, %v2613
          %v2615 = vpop.f32.mrb[0].mxu0
          %v2616 = vadd.f32 %v2263, %v2615
          %v2617 = vpop.f32.mrb[0].mxu0
          %v2618 = vadd.f32 %v2265, %v2617
          %2619 = vmatprep.mubr.bf16.mxu0 %v1883
          %2620 = vmatmul.mubr.bf16.gmra.mrb[0].mxu0 %v1882
          %v2621 = vpop.f32.mrb[0].mxu0
          %v2622 = vadd.f32 %v2269, %v2621
          %v2623 = vpop.f32.mrb[0].mxu0
          %v2624 = vadd.f32 %v2271, %v2623
          %v2625 = vpop.f32.mrb[0].mxu0
          %v2626 = vadd.f32 %v2273, %v2625
          %v2627 = vpop.f32.mrb[0].mxu0
          %v2628 = vadd.f32 %v2275, %v2627
          %2629 = vmatprep.mubr.bf16.mxu0 %v1885
          %2630 = vmatmul.mubr.bf16.gmra.mrb[0].mxu0 %v1884
          %v2631 = vpop.f32.mrb[0].mxu0
          %v2632 = vadd.f32 %v2279, %v2631
          %v2633 = vpop.f32.mrb[0].mxu0
          %v2634 = vadd.f32 %v2281, %v2633
          %v2635 = vpop.f32.mrb[0].mxu0
          %v2636 = vadd.f32 %v2283, %v2635
          %v2637 = vpop.f32.mrb[0].mxu0
          %v2638 = vadd.f32 %v2285, %v2637
          %2639 = vmatprep.mubr.bf16.mxu0 %v1887
          %2640 = vmatmul.mubr.bf16.gmra.mrb[0].mxu0 %v1886
          %v2641 = vpop.f32.mrb[0].mxu0
          %v2642 = vadd.f32 %v2289, %v2641
          %v2643 = vpop.f32.mrb[0].mxu0
          %v2644 = vadd.f32 %v2291, %v2643
          %v2645 = vpop.f32.mrb[0].mxu0
          %v2646 = vadd.f32 %v2293, %v2645
          %v2647 = vpop.f32.mrb[0].mxu0
          %v2648 = vadd.f32 %v2295, %v2647
          %2649 = vmatprep.mubr.bf16.mxu0 %v1889
          %2650 = vmatmul.mubr.bf16.gmra.mrb[0].mxu0 %v1888
          %v2651 = vpop.f32.mrb[0].mxu0
          %v2652 = vadd.f32 %v2299, %v2651
          %v2653 = vpop.f32.mrb[0].mxu0
          %v2654 = vadd.f32 %v2301, %v2653
          %v2655 = vpop.f32.mrb[0].mxu0
          %v2656 = vadd.f32 %v2303, %v2655
          %v2657 = vpop.f32.mrb[0].mxu0
          %v2658 = vadd.f32 %v2305, %v2657
          %2659 = vmatprep.mubr.bf16.mxu0 %v1891
          %2660 = vmatmul.mubr.bf16.gmra.mrb[0].mxu0 %v1890
          %v2661 = vpop.f32.mrb[0].mxu0
          %v2662 = vadd.f32 %v2309, %v2661
          %v2663 = vpop.f32.mrb[0].mxu0
          %v2664 = vadd.f32 %v2311, %v2663
          %v2665 = vpop.f32.mrb[0].mxu0
          %v2666 = vadd.f32 %v2313, %v2665
          %v2667 = vpop.f32.mrb[0].mxu0
          %v2668 = vadd.f32 %v2315, %v2667
          %2669 = vmatprep.mubr.bf16.mxu0 %v1893
          %2670 = vmatmul.mubr.bf16.gmra.mrb[0].mxu0 %v1892
          %v2671 = vpop.f32.mrb[0].mxu0
          %v2672 = vadd.f32 %v2319, %v2671
          %v2673 = vpop.f32.mrb[0].mxu0
          %v2674 = vadd.f32 %v2321, %v2673
          %v2675 = vpop.f32.mrb[0].mxu0
          %v2676 = vadd.f32 %v2323, %v2675
          %v2677 = vpop.f32.mrb[0].mxu0
          %v2678 = vadd.f32 %v2325, %v2677
          %2679 = vmatprep.mubr.bf16.mxu0 %v1895
          %2680 = vmatmul.mubr.bf16.gmra.mrb[0].mxu0 %v1894
          %v2681 = vpop.f32.mrb[0].mxu0
          %v2682 = vadd.f32 %v2329, %v2681
          %v2683 = vpop.f32.mrb[0].mxu0
          %v2684 = vadd.f32 %v2331, %v2683
          %v2685 = vpop.f32.mrb[0].mxu0
          %v2686 = vadd.f32 %v2333, %v2685
          %v2687 = vpop.f32.mrb[0].mxu0
          %v2688 = vadd.f32 %v2335, %v2687
          %2689 = vmatprep.mubr.bf16.mxu0 %v1897
          %2690 = vmatmul.mubr.bf16.gmra.mrb[0].mxu0 %v1896
          %v2691 = vpop.f32.mrb[0].mxu0
          %v2692 = vadd.f32 %v2339, %v2691
          %v2693 = vpop.f32.mrb[0].mxu0
          %v2694 = vadd.f32 %v2341, %v2693
          %v2695 = vpop.f32.mrb[0].mxu0
          %v2696 = vadd.f32 %v2343, %v2695
          %v2697 = vpop.f32.mrb[0].mxu0
          %v2698 = vadd.f32 %v2345, %v2697
          %2699 = vdwg.mxu0
          %v2700 = vld [vmem:[%s6] sm:$0x3]
          %v2702 = vlaneseq
          %v2703 = vshrl.u32 %v2702, 7
          %v2704 = vsub.s32 0, %v2703
          %v2705 = vrot.slane %v2700, %v2704
          %v2706 = vlaneseq
          %v2707 = vshrl.u32 %v2706, 7
          %v2708 = vsub.s32 1, %v2707
          %v2709 = vrot.slane %v2700, %v2708
          %v2712 = vadd.f32 %v2542, %v2705
          %v2713 = vadd.f32 %v2544, %v2709
          %v2714 = vadd.f32 %v2546, %v2705
          %v2715 = vadd.f32 %v2548, %v2709
          %v2716 = vadd.f32 %v2552, %v2705
          %v2717 = vadd.f32 %v2554, %v2709
          %v2718 = vadd.f32 %v2556, %v2705
          %v2719 = vadd.f32 %v2558, %v2709
          %v2720 = vadd.f32 %v2562, %v2705
          %v2721 = vadd.f32 %v2564, %v2709
          %v2722 = vadd.f32 %v2566, %v2705
          %v2723 = vadd.f32 %v2568, %v2709
          %v2724 = vadd.f32 %v2572, %v2705
          %v2725 = vadd.f32 %v2574, %v2709
          %v2726 = vadd.f32 %v2576, %v2705
          %v2727 = vadd.f32 %v2578, %v2709
          %v2728 = vadd.f32 %v2582, %v2705
          %v2729 = vadd.f32 %v2584, %v2709
          %v2730 = vadd.f32 %v2586, %v2705
          %v2731 = vadd.f32 %v2588, %v2709
          %v2732 = vadd.f32 %v2592, %v2705
          %v2733 = vadd.f32 %v2594, %v2709
          %v2734 = vadd.f32 %v2596, %v2705
          %v2735 = vadd.f32 %v2598, %v2709
          %v2736 = vadd.f32 %v2602, %v2705
          %v2737 = vadd.f32 %v2604, %v2709
          %v2738 = vadd.f32 %v2606, %v2705
          %v2739 = vadd.f32 %v2608, %v2709
          %v2740 = vadd.f32 %v2612, %v2705
          %v2741 = vadd.f32 %v2614, %v2709
          %v2742 = vadd.f32 %v2616, %v2705
          %v2743 = vadd.f32 %v2618, %v2709
          %v2744 = vadd.f32 %v2622, %v2705
          %v2745 = vadd.f32 %v2624, %v2709
          %v2746 = vadd.f32 %v2626, %v2705
          %v2747 = vadd.f32 %v2628, %v2709
          %v2748 = vadd.f32 %v2632, %v2705
          %v2749 = vadd.f32 %v2634, %v2709
          %v2750 = vadd.f32 %v2636, %v2705
          %v2751 = vadd.f32 %v2638, %v2709
          %v2752 = vadd.f32 %v2642, %v2705
          %v2753 = vadd.f32 %v2644, %v2709
          %v2754 = vadd.f32 %v2646, %v2705
          %v2755 = vadd.f32 %v2648, %v2709
          %v2756 = vadd.f32 %v2652, %v2705
          %v2757 = vadd.f32 %v2654, %v2709
          %v2758 = vadd.f32 %v2656, %v2705
          %v2759 = vadd.f32 %v2658, %v2709
          %v2760 = vadd.f32 %v2662, %v2705
          %v2761 = vadd.f32 %v2664, %v2709
          %v2762 = vadd.f32 %v2666, %v2705
          %v2763 = vadd.f32 %v2668, %v2709
          %v2764 = vadd.f32 %v2672, %v2705
          %v2765 = vadd.f32 %v2674, %v2709
          %v2766 = vadd.f32 %v2676, %v2705
          %v2767 = vadd.f32 %v2678, %v2709
          %v2768 = vadd.f32 %v2682, %v2705
          %v2769 = vadd.f32 %v2684, %v2709
          %v2770 = vadd.f32 %v2686, %v2705
          %v2771 = vadd.f32 %v2688, %v2709
          %v2772 = vadd.f32 %v2692, %v2705
          %v2773 = vadd.f32 %v2694, %v2709
          %v2774 = vadd.f32 %v2696, %v2705
          %v2775 = vadd.f32 %v2698, %v2709
          %v2776 = vmax.f32 %v2712, 0.0
          %v2777 = vmax.f32 %v2713, 0.0
          %v2778 = vmax.f32 %v2714, 0.0
          %v2779 = vmax.f32 %v2715, 0.0
          %v2780 = vmax.f32 %v2716, 0.0
          %v2781 = vmax.f32 %v2717, 0.0
          %v2782 = vmax.f32 %v2718, 0.0
          %v2783 = vmax.f32 %v2719, 0.0
          %v2784 = vmax.f32 %v2720, 0.0
          %v2785 = vmax.f32 %v2721, 0.0
          %v2786 = vmax.f32 %v2722, 0.0
          %v2787 = vmax.f32 %v2723, 0.0
          %v2788 = vmax.f32 %v2724, 0.0
          %v2789 = vmax.f32 %v2725, 0.0
          %v2790 = vmax.f32 %v2726, 0.0
          %v2791 = vmax.f32 %v2727, 0.0
          %v2792 = vmax.f32 %v2728, 0.0
          %v2793 = vmax.f32 %v2729, 0.0
          %v2794 = vmax.f32 %v2730, 0.0
          %v2795 = vmax.f32 %v2731, 0.0
          %v2796 = vmax.f32 %v2732, 0.0
          %v2797 = vmax.f32 %v2733, 0.0
          %v2798 = vmax.f32 %v2734, 0.0
          %v2799 = vmax.f32 %v2735, 0.0
          %v2800 = vmax.f32 %v2736, 0.0
          %v2801 = vmax.f32 %v2737, 0.0
          %v2802 = vmax.f32 %v2738, 0.0
          %v2803 = vmax.f32 %v2739, 0.0
          %v2804 = vmax.f32 %v2740, 0.0
          %v2805 = vmax.f32 %v2741, 0.0
          %v2806 = vmax.f32 %v2742, 0.0
          %v2807 = vmax.f32 %v2743, 0.0
          %v2808 = vmax.f32 %v2744, 0.0
          %v2809 = vmax.f32 %v2745, 0.0
          %v2810 = vmax.f32 %v2746, 0.0
          %v2811 = vmax.f32 %v2747, 0.0
          %v2812 = vmax.f32 %v2748, 0.0
          %v2813 = vmax.f32 %v2749, 0.0
          %v2814 = vmax.f32 %v2750, 0.0
          %v2815 = vmax.f32 %v2751, 0.0
          %v2816 = vmax.f32 %v2752, 0.0
          %v2817 = vmax.f32 %v2753, 0.0
          %v2818 = vmax.f32 %v2754, 0.0
          %v2819 = vmax.f32 %v2755, 0.0
          %v2820 = vmax.f32 %v2756, 0.0
          %v2821 = vmax.f32 %v2757, 0.0
          %v2822 = vmax.f32 %v2758, 0.0
          %v2823 = vmax.f32 %v2759, 0.0
          %v2824 = vmax.f32 %v2760, 0.0
          %v2825 = vmax.f32 %v2761, 0.0
          %v2826 = vmax.f32 %v2762, 0.0
          %v2827 = vmax.f32 %v2763, 0.0
          %v2828 = vmax.f32 %v2764, 0.0
          %v2829 = vmax.f32 %v2765, 0.0
          %v2830 = vmax.f32 %v2766, 0.0
          %v2831 = vmax.f32 %v2767, 0.0
          %v2832 = vmax.f32 %v2768, 0.0
          %v2833 = vmax.f32 %v2769, 0.0
          %v2834 = vmax.f32 %v2770, 0.0
          %v2835 = vmax.f32 %v2771, 0.0
          %v2836 = vmax.f32 %v2772, 0.0
          %v2837 = vmax.f32 %v2773, 0.0
          %v2838 = vmax.f32 %v2774, 0.0
          %v2839 = vmax.f32 %v2775, 0.0
          %v2840 = vadd.f32 %v2776, %v1482
          %v2841 = vadd.f32 %v2777, %v1483
          %v2842 = vadd.f32 %v2778, %v1484
          %v2843 = vadd.f32 %v2779, %v1485
          %v2844 = vadd.f32 %v2780, %v1486
          %v2845 = vadd.f32 %v2781, %v1487
          %v2846 = vadd.f32 %v2782, %v1488
          %v2847 = vadd.f32 %v2783, %v1489
          %v2848 = vadd.f32 %v2784, %v1490
          %v2849 = vadd.f32 %v2785, %v1491
          %v2850 = vadd.f32 %v2786, %v1492
          %v2851 = vadd.f32 %v2787, %v1493
          %v2852 = vadd.f32 %v2788, %v1494
          %v2853 = vadd.f32 %v2789, %v1495
          %v2854 = vadd.f32 %v2790, %v1496
          %v2855 = vadd.f32 %v2791, %v1497
          %v2856 = vadd.f32 %v2792, %v1498
          %v2857 = vadd.f32 %v2793, %v1499
          %v2858 = vadd.f32 %v2794, %v1500
          %v2859 = vadd.f32 %v2795, %v1501
          %v2860 = vadd.f32 %v2796, %v1502
          %v2861 = vadd.f32 %v2797, %v1503
          %v2862 = vadd.f32 %v2798, %v1504
          %v2863 = vadd.f32 %v2799, %v1505
          %v2864 = vadd.f32 %v2800, %v1506
          %v2865 = vadd.f32 %v2801, %v1507
          %v2866 = vadd.f32 %v2802, %v1508
          %v2867 = vadd.f32 %v2803, %v1509
          %v2868 = vadd.f32 %v2804, %v1510
          %v2869 = vadd.f32 %v2805, %v1511
          %v2870 = vadd.f32 %v2806, %v1512
          %v2871 = vadd.f32 %v2807, %v1513
          %v2872 = vadd.f32 %v2808, %v1514
          %v2873 = vadd.f32 %v2809, %v1515
          %v2874 = vadd.f32 %v2810, %v1516
          %v2875 = vadd.f32 %v2811, %v1517
          %v2876 = vadd.f32 %v2812, %v1518
          %v2877 = vadd.f32 %v2813, %v1519
          %v2878 = vadd.f32 %v2814, %v1520
          %v2879 = vadd.f32 %v2815, %v1521
          %v2880 = vadd.f32 %v2816, %v1522
          %v2881 = vadd.f32 %v2817, %v1523
          %v2882 = vadd.f32 %v2818, %v1524
          %v2883 = vadd.f32 %v2819, %v1525
          %v2884 = vadd.f32 %v2820, %v1526
          %v2885 = vadd.f32 %v2821, %v1527
          %v2886 = vadd.f32 %v2822, %v1528
          %v2887 = vadd.f32 %v2823, %v1529
          %v2888 = vadd.f32 %v2824, %v1530
          %v2889 = vadd.f32 %v2825, %v1531
          %v2890 = vadd.f32 %v2826, %v1532
          %v2891 = vadd.f32 %v2827, %v1533
          %v2892 = vadd.f32 %v2828, %v1534
          %v2893 = vadd.f32 %v2829, %v1535
          %v2894 = vadd.f32 %v2830, %v1536
          %v2895 = vadd.f32 %v2831, %v1537
          %v2896 = vadd.f32 %v2832, %v1538
          %v2897 = vadd.f32 %v2833, %v1539
          %v2898 = vadd.f32 %v2834, %v1540
          %v2899 = vadd.f32 %v2835, %v1541
          %v2900 = vadd.f32 %v2836, %v1542
          %v2901 = vadd.f32 %v2837, %v1543
          %v2902 = vadd.f32 %v2838, %v1544
          %v2903 = vadd.f32 %v2839, %v1545
          %v2904 = vpack.c.bf16 %v2842, %v2840
          %v2905 = vpack.c.bf16 %v2843, %v2841
          %v2906 = vpack.c.bf16 %v2846, %v2844
          %v2907 = vpack.c.bf16 %v2847, %v2845
          %v2908 = vpack.c.bf16 %v2850, %v2848
          %v2909 = vpack.c.bf16 %v2851, %v2849
          %v2910 = vpack.c.bf16 %v2854, %v2852
          %v2911 = vpack.c.bf16 %v2855, %v2853
          %v2912 = vpack.c.bf16 %v2858, %v2856
          %v2913 = vpack.c.bf16 %v2859, %v2857
          %v2914 = vpack.c.bf16 %v2862, %v2860
          %v2915 = vpack.c.bf16 %v2863, %v2861
          %v2916 = vpack.c.bf16 %v2866, %v2864
          %v2917 = vpack.c.bf16 %v2867, %v2865
          %v2918 = vpack.c.bf16 %v2870, %v2868
          %v2919 = vpack.c.bf16 %v2871, %v2869
          %v2920 = vpack.c.bf16 %v2874, %v2872
          %v2921 = vpack.c.bf16 %v2875, %v2873
          %v2922 = vpack.c.bf16 %v2878, %v2876
          %v2923 = vpack.c.bf16 %v2879, %v2877
          %v2924 = vpack.c.bf16 %v2882, %v2880
          %v2925 = vpack.c.bf16 %v2883, %v2881
          %v2926 = vpack.c.bf16 %v2886, %v2884
          %v2927 = vpack.c.bf16 %v2887, %v2885
          %v2928 = vpack.c.bf16 %v2890, %v2888
          %v2929 = vpack.c.bf16 %v2891, %v2889
          %v2930 = vpack.c.bf16 %v2894, %v2892
          %v2931 = vpack.c.bf16 %v2895, %v2893
          %v2932 = vpack.c.bf16 %v2898, %v2896
          %v2933 = vpack.c.bf16 %v2899, %v2897
          %v2934 = vpack.c.bf16 %v2902, %v2900
          %v2935 = vpack.c.bf16 %v2903, %v2901
          %v2936 = vld [vmem:[#allocation11] sm:$0xf]
          %v2937 = vld [vmem:[#allocation11 + $0x4] sm:$0xf]
          %v2938 = vld [vmem:[#allocation11 + $0x8] sm:$0xf]
          %v2939 = vld [vmem:[#allocation11 + $0xc] sm:$0xf]
          %v2940 = vld [vmem:[#allocation11 + $0x10] sm:$0xf]
          %v2941 = vld [vmem:[#allocation11 + $0x14] sm:$0xf]
          %v2942 = vld [vmem:[#allocation11 + $0x18] sm:$0xf]
          %v2943 = vld [vmem:[#allocation11 + $0x1c] sm:$0xf]
          %v2944 = vld [vmem:[#allocation11 + $0x20] sm:$0xf]
          %v2945 = vld [vmem:[#allocation11 + $0x24] sm:$0xf]
          %v2946 = vld [vmem:[#allocation11 + $0x28] sm:$0xf]
          %v2947 = vld [vmem:[#allocation11 + $0x2c] sm:$0xf]
          %v2948 = vld [vmem:[#allocation11 + $0x30] sm:$0xf]
          %v2949 = vld [vmem:[#allocation11 + $0x34] sm:$0xf]
          %v2950 = vld [vmem:[#allocation11 + $0x38] sm:$0xf]
          %v2951 = vld [vmem:[#allocation11 + $0x3c] sm:$0xf]
          %v2952 = vld [vmem:[#allocation11 + $0x40] sm:$0xf]
          %v2953 = vld [vmem:[#allocation11 + $0x44] sm:$0xf]
          %v2954 = vld [vmem:[#allocation11 + $0x48] sm:$0xf]
          %v2955 = vld [vmem:[#allocation11 + $0x4c] sm:$0xf]
          %v2956 = vld [vmem:[#allocation11 + $0x50] sm:$0xf]
          %v2957 = vld [vmem:[#allocation11 + $0x54] sm:$0xf]
          %v2958 = vld [vmem:[#allocation11 + $0x58] sm:$0xf]
          %v2959 = vld [vmem:[#allocation11 + $0x5c] sm:$0xf]
          %v2960 = vld [vmem:[#allocation11 + $0x60] sm:$0xf]
          %v2961 = vld [vmem:[#allocation11 + $0x64] sm:$0xf]
          %v2962 = vld [vmem:[#allocation11 + $0x68] sm:$0xf]
          %v2963 = vld [vmem:[#allocation11 + $0x6c] sm:$0xf]
          %v2964 = vld [vmem:[#allocation11 + $0x70] sm:$0xf]
          %v2965 = vld [vmem:[#allocation11 + $0x74] sm:$0xf]
          %v2966 = vld [vmem:[#allocation11 + $0x78] sm:$0xf]
          %v2967 = vld [vmem:[#allocation11 + $0x7c] sm:$0xf]
          %v2968 = vld [vmem:[%s8] sm:$0x1]
          %v2970 = vlaneseq
          %v2971 = vshrl.u32 %v2970, 7
          %v2972 = vsub.s32 0, %v2971
          %v2973 = vrot.slane %v2968, %v2972
          %v3007 = vunpack.c.l.b16 %v2936
          %v3008 = vunpack.c.l.b16 %v2937
          %v3009 = vunpack.c.l.b16 %v2938
          %v3010 = vunpack.c.l.b16 %v2939
          %v3011 = vunpack.c.l.b16 %v2940
          %v3012 = vunpack.c.l.b16 %v2941
          %v3013 = vunpack.c.l.b16 %v2942
          %v3014 = vunpack.c.l.b16 %v2943
          %v3015 = vunpack.c.l.b16 %v2944
          %v3016 = vunpack.c.l.b16 %v2945
          %v3017 = vunpack.c.l.b16 %v2946
          %v3018 = vunpack.c.l.b16 %v2947
          %v3019 = vunpack.c.l.b16 %v2948
          %v3020 = vunpack.c.l.b16 %v2949
          %v3021 = vunpack.c.l.b16 %v2950
          %v3022 = vunpack.c.l.b16 %v2951
          %v3023 = vunpack.c.l.b16 %v2952
          %v3024 = vunpack.c.l.b16 %v2953
          %v3025 = vunpack.c.l.b16 %v2954
          %v3026 = vunpack.c.l.b16 %v2955
          %v3027 = vunpack.c.l.b16 %v2956
          %v3028 = vunpack.c.l.b16 %v2957
          %v3029 = vunpack.c.l.b16 %v2958
          %v3030 = vunpack.c.l.b16 %v2959
          %v3031 = vunpack.c.l.b16 %v2960
          %v3032 = vunpack.c.l.b16 %v2961
          %v3033 = vunpack.c.l.b16 %v2962
          %v3034 = vunpack.c.l.b16 %v2963
          %v3035 = vunpack.c.l.b16 %v2964
          %v3036 = vunpack.c.l.b16 %v2965
          %v3037 = vunpack.c.l.b16 %v2966
          %v3038 = vunpack.c.l.b16 %v2967
          %v3039 = vpack.c.b16 %v3008, %v3007
          %v3040 = vpack.c.b16 %v3010, %v3009
          %v3041 = vpack.c.b16 %v3012, %v3011
          %v3042 = vpack.c.b16 %v3014, %v3013
          %v3043 = vpack.c.b16 %v3016, %v3015
          %v3044 = vpack.c.b16 %v3018, %v3017
          %v3045 = vpack.c.b16 %v3020, %v3019
          %v3046 = vpack.c.b16 %v3022, %v3021
          %v3047 = vpack.c.b16 %v3024, %v3023
          %v3048 = vpack.c.b16 %v3026, %v3025
          %v3049 = vpack.c.b16 %v3028, %v3027
          %v3050 = vpack.c.b16 %v3030, %v3029
          %v3051 = vpack.c.b16 %v3032, %v3031
          %v3052 = vpack.c.b16 %v3034, %v3033
          %v3053 = vpack.c.b16 %v3036, %v3035
          %v3054 = vpack.c.b16 %v3038, %v3037
          %3071 = vmatprep.subr.bf16.mxu0 0
          %3072 = vmatpush1.bf16.msra.mxu0 %v3039
          %3073 = vmatprep.subr.bf16.mxu0 0
          %3074 = vmatpush1.bf16.msra.mxu0 %v3040
          %3075 = vmatprep.subr.bf16.mxu0 0
          %3076 = vmatpush1.bf16.msra.mxu0 %v3041
          %3077 = vmatprep.subr.bf16.mxu0 0
          %3078 = vmatpush1.bf16.msra.mxu0 %v3042
          %3079 = vmatprep.subr.bf16.mxu0 0
          %3080 = vmatpush1.bf16.msra.mxu0 %v3043
          %3081 = vmatprep.subr.bf16.mxu0 0
          %3082 = vmatpush1.bf16.msra.mxu0 %v3044
          %3083 = vmatprep.subr.bf16.mxu0 0
          %3084 = vmatpush1.bf16.msra.mxu0 %v3045
          %3085 = vmatprep.subr.bf16.mxu0 0
          %3086 = vmatpush1.bf16.msra.mxu0 %v3046
          %3087 = vmatprep.subr.bf16.mxu0 0
          %3088 = vmatpush1.bf16.msra.mxu0 %v3047
          %3089 = vmatprep.subr.bf16.mxu0 0
          %3090 = vmatpush1.bf16.msra.mxu0 %v3048
          %3091 = vmatprep.subr.bf16.mxu0 0
          %3092 = vmatpush1.bf16.msra.mxu0 %v3049
          %3093 = vmatprep.subr.bf16.mxu0 0
          %3094 = vmatpush1.bf16.msra.mxu0 %v3050
          %3095 = vmatprep.subr.bf16.mxu0 0
          %3096 = vmatpush1.bf16.msra.mxu0 %v3051
          %3097 = vmatprep.subr.bf16.mxu0 0
          %3098 = vmatpush1.bf16.msra.mxu0 %v3052
          %3099 = vmatprep.subr.bf16.mxu0 0
          %3100 = vmatpush1.bf16.msra.mxu0 %v3053
          %3101 = vmatprep.subr.bf16.mxu0 0
          %3102 = vmatpush1.bf16.msra.mxu0 %v3054
          %3103 = vmatprep.mubr.bf16.mxu0 %v2905
          %3104 = vmatmul.mubr.bf16.gmra.mrb[0].mxu0 %v2904
          %v3105 = vpop.f32.mrb[0].mxu0
          %v3106 = vadd.f32 %v2973, %v3105
          %v3107 = vpop.f32.mrb[0].mxu0
          %v3108 = vpop.f32.mrb[0].mxu0
          %v3109 = vadd.f32 %v2973, %v3108
          %v3110 = vpop.f32.mrb[0].mxu0
          %3111 = vmatprep.mubr.bf16.mxu0 %v2907
          %3112 = vmatmul.mubr.bf16.gmra.mrb[0].mxu0 %v2906
          %v3113 = vpop.f32.mrb[0].mxu0
          %v3114 = vadd.f32 %v2973, %v3113
          %v3115 = vpop.f32.mrb[0].mxu0
          %v3116 = vpop.f32.mrb[0].mxu0
          %v3117 = vadd.f32 %v2973, %v3116
          %v3118 = vpop.f32.mrb[0].mxu0
          %3119 = vmatprep.mubr.bf16.mxu0 %v2909
          %3120 = vmatmul.mubr.bf16.gmra.mrb[0].mxu0 %v2908
          %v3121 = vpop.f32.mrb[0].mxu0
          %v3122 = vadd.f32 %v2973, %v3121
          %v3123 = vpop.f32.mrb[0].mxu0
          %v3124 = vpop.f32.mrb[0].mxu0
          %v3125 = vadd.f32 %v2973, %v3124
          %v3126 = vpop.f32.mrb[0].mxu0
          %3127 = vmatprep.mubr.bf16.mxu0 %v2911
          %3128 = vmatmul.mubr.bf16.gmra.mrb[0].mxu0 %v2910
          %v3129 = vpop.f32.mrb[0].mxu0
          %v3130 = vadd.f32 %v2973, %v3129
          %v3131 = vpop.f32.mrb[0].mxu0
          %v3132 = vpop.f32.mrb[0].mxu0
          %v3133 = vadd.f32 %v2973, %v3132
          %v3134 = vpop.f32.mrb[0].mxu0
          %3135 = vmatprep.mubr.bf16.mxu0 %v2913
          %3136 = vmatmul.mubr.bf16.gmra.mrb[0].mxu0 %v2912
          %v3137 = vpop.f32.mrb[0].mxu0
          %v3138 = vadd.f32 %v2973, %v3137
          %v3139 = vpop.f32.mrb[0].mxu0
          %v3140 = vpop.f32.mrb[0].mxu0
          %v3141 = vadd.f32 %v2973, %v3140
          %v3142 = vpop.f32.mrb[0].mxu0
          %3143 = vmatprep.mubr.bf16.mxu0 %v2915
          %3144 = vmatmul.mubr.bf16.gmra.mrb[0].mxu0 %v2914
          %v3145 = vpop.f32.mrb[0].mxu0
          %v3146 = vadd.f32 %v2973, %v3145
          %v3147 = vpop.f32.mrb[0].mxu0
          %v3148 = vpop.f32.mrb[0].mxu0
          %v3149 = vadd.f32 %v2973, %v3148
          %v3150 = vpop.f32.mrb[0].mxu0
          %3151 = vmatprep.mubr.bf16.mxu0 %v2917
          %3152 = vmatmul.mubr.bf16.gmra.mrb[0].mxu0 %v2916
          %v3153 = vpop.f32.mrb[0].mxu0
          %v3154 = vadd.f32 %v2973, %v3153
          %v3155 = vpop.f32.mrb[0].mxu0
          %v3156 = vpop.f32.mrb[0].mxu0
          %v3157 = vadd.f32 %v2973, %v3156
          %v3158 = vpop.f32.mrb[0].mxu0
          %3159 = vmatprep.mubr.bf16.mxu0 %v2919
          %3160 = vmatmul.mubr.bf16.gmra.mrb[0].mxu0 %v2918
          %v3161 = vpop.f32.mrb[0].mxu0
          %v3162 = vadd.f32 %v2973, %v3161
          %v3163 = vpop.f32.mrb[0].mxu0
          %v3164 = vpop.f32.mrb[0].mxu0
          %v3165 = vadd.f32 %v2973, %v3164
          %v3166 = vpop.f32.mrb[0].mxu0
          %3167 = vmatprep.mubr.bf16.mxu0 %v2921
          %3168 = vmatmul.mubr.bf16.gmra.mrb[0].mxu0 %v2920
          %v3169 = vpop.f32.mrb[0].mxu0
          %v3170 = vadd.f32 %v2973, %v3169
          %v3171 = vpop.f32.mrb[0].mxu0
          %v3172 = vpop.f32.mrb[0].mxu0
          %v3173 = vadd.f32 %v2973, %v3172
          %v3174 = vpop.f32.mrb[0].mxu0
          %3175 = vmatprep.mubr.bf16.mxu0 %v2923
          %3176 = vmatmul.mubr.bf16.gmra.mrb[0].mxu0 %v2922
          %v3177 = vpop.f32.mrb[0].mxu0
          %v3178 = vadd.f32 %v2973, %v3177
          %v3179 = vpop.f32.mrb[0].mxu0
          %v3180 = vpop.f32.mrb[0].mxu0
          %v3181 = vadd.f32 %v2973, %v3180
          %v3182 = vpop.f32.mrb[0].mxu0
          %3183 = vmatprep.mubr.bf16.mxu0 %v2925
          %3184 = vmatmul.mubr.bf16.gmra.mrb[0].mxu0 %v2924
          %v3185 = vpop.f32.mrb[0].mxu0
          %v3186 = vadd.f32 %v2973, %v3185
          %v3187 = vpop.f32.mrb[0].mxu0
          %v3188 = vpop.f32.mrb[0].mxu0
          %v3189 = vadd.f32 %v2973, %v3188
          %v3190 = vpop.f32.mrb[0].mxu0
          %3191 = vmatprep.mubr.bf16.mxu0 %v2927
          %3192 = vmatmul.mubr.bf16.gmra.mrb[0].mxu0 %v2926
          %v3193 = vpop.f32.mrb[0].mxu0
          %v3194 = vadd.f32 %v2973, %v3193
          %v3195 = vpop.f32.mrb[0].mxu0
          %v3196 = vpop.f32.mrb[0].mxu0
          %v3197 = vadd.f32 %v2973, %v3196
          %v3198 = vpop.f32.mrb[0].mxu0
          %3199 = vmatprep.mubr.bf16.mxu0 %v2929
          %3200 = vmatmul.mubr.bf16.gmra.mrb[0].mxu0 %v2928
          %v3201 = vpop.f32.mrb[0].mxu0
          %v3202 = vadd.f32 %v2973, %v3201
          %v3203 = vpop.f32.mrb[0].mxu0
          %v3204 = vpop.f32.mrb[0].mxu0
          %v3205 = vadd.f32 %v2973, %v3204
          %v3206 = vpop.f32.mrb[0].mxu0
          %3207 = vmatprep.mubr.bf16.mxu0 %v2931
          %3208 = vmatmul.mubr.bf16.gmra.mrb[0].mxu0 %v2930
          %v3209 = vpop.f32.mrb[0].mxu0
          %v3210 = vadd.f32 %v2973, %v3209
          %v3211 = vpop.f32.mrb[0].mxu0
          %v3212 = vpop.f32.mrb[0].mxu0
          %v3213 = vadd.f32 %v2973, %v3212
          %v3214 = vpop.f32.mrb[0].mxu0
          %3215 = vmatprep.mubr.bf16.mxu0 %v2933
          %3216 = vmatmul.mubr.bf16.gmra.mrb[0].mxu0 %v2932
          %v3217 = vpop.f32.mrb[0].mxu0
          %v3218 = vadd.f32 %v2973, %v3217
          %v3219 = vpop.f32.mrb[0].mxu0
          %v3220 = vpop.f32.mrb[0].mxu0
          %v3221 = vadd.f32 %v2973, %v3220
          %v3222 = vpop.f32.mrb[0].mxu0
          %3223 = vmatprep.mubr.bf16.mxu0 %v2935
          %3224 = vmatmul.mubr.bf16.gmra.mrb[0].mxu0 %v2934
          %v3225 = vpop.f32.mrb[0].mxu0
          %v3226 = vadd.f32 %v2973, %v3225
          %v3227 = vpop.f32.mrb[0].mxu0
          %v3228 = vpop.f32.mrb[0].mxu0
          %v3229 = vadd.f32 %v2973, %v3228
          %v3230 = vpop.f32.mrb[0].mxu0
          %3231 = vdwg.mxu0
          %v3232 = vmax.f32 %v3106, 0.0
          %v3233 = vmax.f32 %v3109, 0.0
          %v3234 = vmax.f32 %v3114, 0.0
          %v3235 = vmax.f32 %v3117, 0.0
          %v3236 = vmax.f32 %v3122, 0.0
          %v3237 = vmax.f32 %v3125, 0.0
          %v3238 = vmax.f32 %v3130, 0.0
          %v3239 = vmax.f32 %v3133, 0.0
          %v3240 = vmax.f32 %v3138, 0.0
          %v3241 = vmax.f32 %v3141, 0.0
          %v3242 = vmax.f32 %v3146, 0.0
          %v3243 = vmax.f32 %v3149, 0.0
          %v3244 = vmax.f32 %v3154, 0.0
          %v3245 = vmax.f32 %v3157, 0.0
          %v3246 = vmax.f32 %v3162, 0.0
          %v3247 = vmax.f32 %v3165, 0.0
          %v3248 = vmax.f32 %v3170, 0.0
          %v3249 = vmax.f32 %v3173, 0.0
          %v3250 = vmax.f32 %v3178, 0.0
          %v3251 = vmax.f32 %v3181, 0.0
          %v3252 = vmax.f32 %v3186, 0.0
          %v3253 = vmax.f32 %v3189, 0.0
          %v3254 = vmax.f32 %v3194, 0.0
          %v3255 = vmax.f32 %v3197, 0.0
          %v3256 = vmax.f32 %v3202, 0.0
          %v3257 = vmax.f32 %v3205, 0.0
          %v3258 = vmax.f32 %v3210, 0.0
          %v3259 = vmax.f32 %v3213, 0.0
          %v3260 = vmax.f32 %v3218, 0.0
          %v3261 = vmax.f32 %v3221, 0.0
          %v3262 = vmax.f32 %v3226, 0.0
          %v3263 = vmax.f32 %v3229, 0.0
          %v3264 = vpack.c.bf16 %v3233, %v3232
          %v3265 = vpack.c.bf16 %v3235, %v3234
          %v3266 = vpack.c.bf16 %v3237, %v3236
          %v3267 = vpack.c.bf16 %v3239, %v3238
          %v3268 = vpack.c.bf16 %v3241, %v3240
          %v3269 = vpack.c.bf16 %v3243, %v3242
          %v3270 = vpack.c.bf16 %v3245, %v3244
          %v3271 = vpack.c.bf16 %v3247, %v3246
          %v3272 = vpack.c.bf16 %v3249, %v3248
          %v3273 = vpack.c.bf16 %v3251, %v3250
          %v3274 = vpack.c.bf16 %v3253, %v3252
          %v3275 = vpack.c.bf16 %v3255, %v3254
          %v3276 = vpack.c.bf16 %v3257, %v3256
          %v3277 = vpack.c.bf16 %v3259, %v3258
          %v3278 = vpack.c.bf16 %v3261, %v3260
          %v3279 = vpack.c.bf16 %v3263, %v3262
          %v3280 = vld [vmem:[#allocation12] sm:$0xf]
          %v3281 = vld [vmem:[#allocation12 + $0x4] sm:$0xf]
          %v3282 = vld [vmem:[#allocation12 + $0x8] sm:$0xf]
          %v3283 = vld [vmem:[#allocation12 + $0xc] sm:$0xf]
          %v3284 = vld [vmem:[#allocation12 + $0x10] sm:$0xf]
          %v3285 = vld [vmem:[#allocation12 + $0x14] sm:$0xf]
          %v3286 = vld [vmem:[#allocation12 + $0x18] sm:$0xf]
          %v3287 = vld [vmem:[#allocation12 + $0x1c] sm:$0xf]
          %v3288 = vld [vmem:[#allocation12 + $0x20] sm:$0xf]
          %v3289 = vld [vmem:[#allocation12 + $0x24] sm:$0xf]
          %v3290 = vld [vmem:[#allocation12 + $0x28] sm:$0xf]
          %v3291 = vld [vmem:[#allocation12 + $0x2c] sm:$0xf]
          %v3292 = vld [vmem:[#allocation12 + $0x30] sm:$0xf]
          %v3293 = vld [vmem:[#allocation12 + $0x34] sm:$0xf]
          %v3294 = vld [vmem:[#allocation12 + $0x38] sm:$0xf]
          %v3295 = vld [vmem:[#allocation12 + $0x3c] sm:$0xf]
          %v3296 = vld [vmem:[%s10] sm:$0x1]
          %v3298 = vlaneseq
          %v3299 = vshrl.u32 %v3298, 7
          %v3300 = vsub.s32 0, %v3299
          %v3301 = vrot.slane %v3296, %v3300
          %v3319 = vunpack.c.l.b16 %v3280
          %v3320 = vunpack.c.l.b16 %v3281
          %v3321 = vunpack.c.l.b16 %v3282
          %v3322 = vunpack.c.l.b16 %v3283
          %v3323 = vunpack.c.l.b16 %v3284
          %v3324 = vunpack.c.l.b16 %v3285
          %v3325 = vunpack.c.l.b16 %v3286
          %v3326 = vunpack.c.l.b16 %v3287
          %v3327 = vunpack.c.l.b16 %v3288
          %v3328 = vunpack.c.l.b16 %v3289
          %v3329 = vunpack.c.l.b16 %v3290
          %v3330 = vunpack.c.l.b16 %v3291
          %v3331 = vunpack.c.l.b16 %v3292
          %v3332 = vunpack.c.l.b16 %v3293
          %v3333 = vunpack.c.l.b16 %v3294
          %v3334 = vunpack.c.l.b16 %v3295
          %v3335 = vpack.c.b16 %v3320, %v3319
          %v3336 = vpack.c.b16 %v3322, %v3321
          %v3337 = vpack.c.b16 %v3324, %v3323
          %v3338 = vpack.c.b16 %v3326, %v3325
          %v3339 = vpack.c.b16 %v3328, %v3327
          %v3340 = vpack.c.b16 %v3330, %v3329
          %v3341 = vpack.c.b16 %v3332, %v3331
          %v3342 = vpack.c.b16 %v3334, %v3333
          %3351 = vmatprep.subr.bf16.mxu0 0
          %3352 = vmatpush1.bf16.msra.mxu0 %v3335
          %3353 = vmatprep.subr.bf16.mxu0 0
          %3354 = vmatpush1.bf16.msra.mxu0 %v3336
          %3355 = vmatprep.subr.bf16.mxu0 0
          %3356 = vmatpush1.bf16.msra.mxu0 %v3337
          %3357 = vmatprep.subr.bf16.mxu0 0
          %3358 = vmatpush1.bf16.msra.mxu0 %v3338
          %3359 = vmatprep.subr.bf16.mxu0 0
          %3360 = vmatpush1.bf16.msra.mxu0 %v3339
          %3361 = vmatprep.subr.bf16.mxu0 0
          %3362 = vmatpush1.bf16.msra.mxu0 %v3340
          %3363 = vmatprep.subr.bf16.mxu0 0
          %3364 = vmatpush1.bf16.msra.mxu0 %v3341
          %3365 = vmatprep.subr.bf16.mxu0 0
          %3366 = vmatpush1.bf16.msra.mxu0 %v3342
          %3367 = vmatprep.subr.bf16.mxu0 0
          %3368 = vmatpush1.bf16.msra.mxu0 0
          %3369 = vmatprep.subr.bf16.mxu0 0
          %3370 = vmatpush1.bf16.msra.mxu0 0
          %3371 = vmatprep.subr.bf16.mxu0 0
          %3372 = vmatpush1.bf16.msra.mxu0 0
          %3373 = vmatprep.subr.bf16.mxu0 0
          %3374 = vmatpush1.bf16.msra.mxu0 0
          %3375 = vmatprep.subr.bf16.mxu0 0
          %3376 = vmatpush1.bf16.msra.mxu0 0
          %3377 = vmatprep.subr.bf16.mxu0 0
          %3378 = vmatpush1.bf16.msra.mxu0 0
          %3379 = vmatprep.subr.bf16.mxu0 0
          %3380 = vmatpush1.bf16.msra.mxu0 0
          %3381 = vmatprep.subr.bf16.mxu0 0
          %3382 = vmatpush1.bf16.msra.mxu0 0
          %3383 = vmatprep.mubr.bf16.mxu0 0
          %3384 = vmatmul.mubr.bf16.gmra.mrb[0].mxu0 %v3264
          %v3385 = vpop.f32.mrb[0].mxu0
          %v3386 = vadd.f32 %v3301, %v3385
          %v3387 = vpop.f32.mrb[0].mxu0
          %v3388 = vpop.f32.mrb[0].mxu0
          %v3389 = vadd.f32 %v3301, %v3388
          %v3390 = vpop.f32.mrb[0].mxu0
          %3391 = vmatprep.mubr.bf16.mxu0 0
          %3392 = vmatmul.mubr.bf16.gmra.mrb[0].mxu0 %v3265
          %v3393 = vpop.f32.mrb[0].mxu0
          %v3394 = vadd.f32 %v3301, %v3393
          %v3395 = vpop.f32.mrb[0].mxu0
          %v3396 = vpop.f32.mrb[0].mxu0
          %v3397 = vadd.f32 %v3301, %v3396
          %v3398 = vpop.f32.mrb[0].mxu0
          %3399 = vmatprep.mubr.bf16.mxu0 0
          %3400 = vmatmul.mubr.bf16.gmra.mrb[0].mxu0 %v3266
          %v3401 = vpop.f32.mrb[0].mxu0
          %v3402 = vadd.f32 %v3301, %v3401
          %v3403 = vpop.f32.mrb[0].mxu0
          %v3404 = vpop.f32.mrb[0].mxu0
          %v3405 = vadd.f32 %v3301, %v3404
          %v3406 = vpop.f32.mrb[0].mxu0
          %3407 = vmatprep.mubr.bf16.mxu0 0
          %3408 = vmatmul.mubr.bf16.gmra.mrb[0].mxu0 %v3267
          %v3409 = vpop.f32.mrb[0].mxu0
          %v3410 = vadd.f32 %v3301, %v3409
          %v3411 = vpop.f32.mrb[0].mxu0
          %v3412 = vpop.f32.mrb[0].mxu0
          %v3413 = vadd.f32 %v3301, %v3412
          %v3414 = vpop.f32.mrb[0].mxu0
          %3415 = vmatprep.mubr.bf16.mxu0 0
          %3416 = vmatmul.mubr.bf16.gmra.mrb[0].mxu0 %v3268
          %v3417 = vpop.f32.mrb[0].mxu0
          %v3418 = vadd.f32 %v3301, %v3417
          %v3419 = vpop.f32.mrb[0].mxu0
          %v3420 = vpop.f32.mrb[0].mxu0
          %v3421 = vadd.f32 %v3301, %v3420
          %v3422 = vpop.f32.mrb[0].mxu0
          %3423 = vmatprep.mubr.bf16.mxu0 0
          %3424 = vmatmul.mubr.bf16.gmra.mrb[0].mxu0 %v3269
          %v3425 = vpop.f32.mrb[0].mxu0
          %v3426 = vadd.f32 %v3301, %v3425
          %v3427 = vpop.f32.mrb[0].mxu0
          %v3428 = vpop.f32.mrb[0].mxu0
          %v3429 = vadd.f32 %v3301, %v3428
          %v3430 = vpop.f32.mrb[0].mxu0
          %3431 = vmatprep.mubr.bf16.mxu0 0
          %3432 = vmatmul.mubr.bf16.gmra.mrb[0].mxu0 %v3270
          %v3433 = vpop.f32.mrb[0].mxu0
          %v3434 = vadd.f32 %v3301, %v3433
          %v3435 = vpop.f32.mrb[0].mxu0
          %v3436 = vpop.f32.mrb[0].mxu0
          %v3437 = vadd.f32 %v3301, %v3436
          %v3438 = vpop.f32.mrb[0].mxu0
          %3439 = vmatprep.mubr.bf16.mxu0 0
          %3440 = vmatmul.mubr.bf16.gmra.mrb[0].mxu0 %v3271
          %v3441 = vpop.f32.mrb[0].mxu0
          %v3442 = vadd.f32 %v3301, %v3441
          %v3443 = vpop.f32.mrb[0].mxu0
          %v3444 = vpop.f32.mrb[0].mxu0
          %v3445 = vadd.f32 %v3301, %v3444
          %v3446 = vpop.f32.mrb[0].mxu0
          %3447 = vmatprep.mubr.bf16.mxu0 0
          %3448 = vmatmul.mubr.bf16.gmra.mrb[0].mxu0 %v3272
          %v3449 = vpop.f32.mrb[0].mxu0
          %v3450 = vadd.f32 %v3301, %v3449
          %v3451 = vpop.f32.mrb[0].mxu0
          %v3452 = vpop.f32.mrb[0].mxu0
          %v3453 = vadd.f32 %v3301, %v3452
          %v3454 = vpop.f32.mrb[0].mxu0
          %3455 = vmatprep.mubr.bf16.mxu0 0
          %3456 = vmatmul.mubr.bf16.gmra.mrb[0].mxu0 %v3273
          %v3457 = vpop.f32.mrb[0].mxu0
          %v3458 = vadd.f32 %v3301, %v3457
          %v3459 = vpop.f32.mrb[0].mxu0
          %v3460 = vpop.f32.mrb[0].mxu0
          %v3461 = vadd.f32 %v3301, %v3460
          %v3462 = vpop.f32.mrb[0].mxu0
          %3463 = vmatprep.mubr.bf16.mxu0 0
          %3464 = vmatmul.mubr.bf16.gmra.mrb[0].mxu0 %v3274
          %v3465 = vpop.f32.mrb[0].mxu0
          %v3466 = vadd.f32 %v3301, %v3465
          %v3467 = vpop.f32.mrb[0].mxu0
          %v3468 = vpop.f32.mrb[0].mxu0
          %v3469 = vadd.f32 %v3301, %v3468
          %v3470 = vpop.f32.mrb[0].mxu0
          %3471 = vmatprep.mubr.bf16.mxu0 0
          %3472 = vmatmul.mubr.bf16.gmra.mrb[0].mxu0 %v3275
          %v3473 = vpop.f32.mrb[0].mxu0
          %v3474 = vadd.f32 %v3301, %v3473
          %v3475 = vpop.f32.mrb[0].mxu0
          %v3476 = vpop.f32.mrb[0].mxu0
          %v3477 = vadd.f32 %v3301, %v3476
          %v3478 = vpop.f32.mrb[0].mxu0
          %3479 = vmatprep.mubr.bf16.mxu0 0
          %3480 = vmatmul.mubr.bf16.gmra.mrb[0].mxu0 %v3276
          %v3481 = vpop.f32.mrb[0].mxu0
          %v3482 = vadd.f32 %v3301, %v3481
          %v3483 = vpop.f32.mrb[0].mxu0
          %v3484 = vpop.f32.mrb[0].mxu0
          %v3485 = vadd.f32 %v3301, %v3484
          %v3486 = vpop.f32.mrb[0].mxu0
          %3487 = vmatprep.mubr.bf16.mxu0 0
          %3488 = vmatmul.mubr.bf16.gmra.mrb[0].mxu0 %v3277
          %v3489 = vpop.f32.mrb[0].mxu0
          %v3490 = vadd.f32 %v3301, %v3489
          %v3491 = vpop.f32.mrb[0].mxu0
          %v3492 = vpop.f32.mrb[0].mxu0
          %v3493 = vadd.f32 %v3301, %v3492
          %v3494 = vpop.f32.mrb[0].mxu0
          %3495 = vmatprep.mubr.bf16.mxu0 0
          %3496 = vmatmul.mubr.bf16.gmra.mrb[0].mxu0 %v3278
          %v3497 = vpop.f32.mrb[0].mxu0
          %v3498 = vadd.f32 %v3301, %v3497
          %v3499 = vpop.f32.mrb[0].mxu0
          %v3500 = vpop.f32.mrb[0].mxu0
          %v3501 = vadd.f32 %v3301, %v3500
          %v3502 = vpop.f32.mrb[0].mxu0
          %3503 = vmatprep.mubr.bf16.mxu0 0
          %3504 = vmatmul.mubr.bf16.gmra.mrb[0].mxu0 %v3279
          %v3505 = vpop.f32.mrb[0].mxu0
          %v3506 = vadd.f32 %v3301, %v3505
          %v3507 = vpop.f32.mrb[0].mxu0
          %v3508 = vpop.f32.mrb[0].mxu0
          %v3509 = vadd.f32 %v3301, %v3508
          %v3510 = vpop.f32.mrb[0].mxu0
          %3511 = vdwg.mxu0
          %v3512 = vmax.f32 %v3386, 0.0
          %v3513 = vmax.f32 %v3389, 0.0
          %v3514 = vmax.f32 %v3394, 0.0
          %v3515 = vmax.f32 %v3397, 0.0
          %v3516 = vmax.f32 %v3402, 0.0
          %v3517 = vmax.f32 %v3405, 0.0
          %v3518 = vmax.f32 %v3410, 0.0
          %v3519 = vmax.f32 %v3413, 0.0
          %v3520 = vmax.f32 %v3418, 0.0
          %v3521 = vmax.f32 %v3421, 0.0
          %v3522 = vmax.f32 %v3426, 0.0
          %v3523 = vmax.f32 %v3429, 0.0
          %v3524 = vmax.f32 %v3434, 0.0
          %v3525 = vmax.f32 %v3437, 0.0
          %v3526 = vmax.f32 %v3442, 0.0
          %v3527 = vmax.f32 %v3445, 0.0
          %v3528 = vmax.f32 %v3450, 0.0
          %v3529 = vmax.f32 %v3453, 0.0
          %v3530 = vmax.f32 %v3458, 0.0
          %v3531 = vmax.f32 %v3461, 0.0
          %v3532 = vmax.f32 %v3466, 0.0
          %v3533 = vmax.f32 %v3469, 0.0
          %v3534 = vmax.f32 %v3474, 0.0
          %v3535 = vmax.f32 %v3477, 0.0
          %v3536 = vmax.f32 %v3482, 0.0
          %v3537 = vmax.f32 %v3485, 0.0
          %v3538 = vmax.f32 %v3490, 0.0
          %v3539 = vmax.f32 %v3493, 0.0
          %v3540 = vmax.f32 %v3498, 0.0
          %v3541 = vmax.f32 %v3501, 0.0
          %v3542 = vmax.f32 %v3506, 0.0
          %v3543 = vmax.f32 %v3509, 0.0
          %v3544 = vpack.c.bf16 %v3513, %v3512
          %v3545 = vpack.c.bf16 %v3515, %v3514
          %v3546 = vpack.c.bf16 %v3517, %v3516
          %v3547 = vpack.c.bf16 %v3519, %v3518
          %v3548 = vpack.c.bf16 %v3521, %v3520
          %v3549 = vpack.c.bf16 %v3523, %v3522
          %v3550 = vpack.c.bf16 %v3525, %v3524
          %v3551 = vpack.c.bf16 %v3527, %v3526
          %v3552 = vpack.c.bf16 %v3529, %v3528
          %v3553 = vpack.c.bf16 %v3531, %v3530
          %v3554 = vpack.c.bf16 %v3533, %v3532
          %v3555 = vpack.c.bf16 %v3535, %v3534
          %v3556 = vpack.c.bf16 %v3537, %v3536
          %v3557 = vpack.c.bf16 %v3539, %v3538
          %v3558 = vpack.c.bf16 %v3541, %v3540
          %v3559 = vpack.c.bf16 %v3543, %v3542
          %v3560 = vld [vmem:[#allocation14] sm:$0xf]
          %v3561 = vld [vmem:[#allocation14 + $0x4] sm:$0xf]
          %v3562 = vld [vmem:[#allocation14 + $0x8] sm:$0xf]
          %v3563 = vld [vmem:[#allocation14 + $0xc] sm:$0xf]
          %v3564 = vld [vmem:[#allocation14 + $0x10] sm:$0xf]
          %v3565 = vld [vmem:[#allocation14 + $0x14] sm:$0xf]
          %v3566 = vld [vmem:[#allocation14 + $0x18] sm:$0xf]
          %v3567 = vld [vmem:[#allocation14 + $0x1c] sm:$0xf]
          %v3568 = vld [vmem:[#allocation14 + $0x20] sm:$0xf]
          %v3569 = vld [vmem:[#allocation14 + $0x24] sm:$0xf]
          %v3570 = vld [vmem:[#allocation14 + $0x28] sm:$0xf]
          %v3571 = vld [vmem:[#allocation14 + $0x2c] sm:$0xf]
          %v3572 = vld [vmem:[#allocation14 + $0x30] sm:$0xf]
          %v3573 = vld [vmem:[#allocation14 + $0x34] sm:$0xf]
          %v3574 = vld [vmem:[#allocation14 + $0x38] sm:$0xf]
          %v3575 = vld [vmem:[#allocation14 + $0x3c] sm:$0xf]
          %v3576 = vld [vmem:[%s12] sm:$0x1]
          %v3578 = vlaneseq
          %v3579 = vshrl.u32 %v3578, 7
          %v3580 = vsub.s32 0, %v3579
          %v3581 = vrot.slane %v3576, %v3580
          %v3599 = vunpack.c.l.b16 %v3560
          %v3600 = vunpack.c.l.b16 %v3561
          %v3601 = vunpack.c.l.b16 %v3562
          %v3602 = vunpack.c.l.b16 %v3563
          %v3603 = vunpack.c.l.b16 %v3564
          %v3604 = vunpack.c.l.b16 %v3565
          %v3605 = vunpack.c.l.b16 %v3566
          %v3606 = vunpack.c.l.b16 %v3567
          %v3607 = vunpack.c.l.b16 %v3568
          %v3608 = vunpack.c.l.b16 %v3569
          %v3609 = vunpack.c.l.b16 %v3570
          %v3610 = vunpack.c.l.b16 %v3571
          %v3611 = vunpack.c.l.b16 %v3572
          %v3612 = vunpack.c.l.b16 %v3573
          %v3613 = vunpack.c.l.b16 %v3574
          %v3614 = vunpack.c.l.b16 %v3575
          %v3615 = vpack.c.b16 %v3600, %v3599
          %v3616 = vpack.c.b16 %v3602, %v3601
          %v3617 = vpack.c.b16 %v3604, %v3603
          %v3618 = vpack.c.b16 %v3606, %v3605
          %v3619 = vpack.c.b16 %v3608, %v3607
          %v3620 = vpack.c.b16 %v3610, %v3609
          %v3621 = vpack.c.b16 %v3612, %v3611
          %v3622 = vpack.c.b16 %v3614, %v3613
          %3631 = vmatprep.subr.bf16.mxu0 0
          %3632 = vmatpush1.bf16.msra.mxu0 %v3615
          %3633 = vmatprep.subr.bf16.mxu0 0
          %3634 = vmatpush1.bf16.msra.mxu0 %v3616
          %3635 = vmatprep.subr.bf16.mxu0 0
          %3636 = vmatpush1.bf16.msra.mxu0 %v3617
          %3637 = vmatprep.subr.bf16.mxu0 0
          %3638 = vmatpush1.bf16.msra.mxu0 %v3618
          %3639 = vmatprep.subr.bf16.mxu0 0
          %3640 = vmatpush1.bf16.msra.mxu0 %v3619
          %3641 = vmatprep.subr.bf16.mxu0 0
          %3642 = vmatpush1.bf16.msra.mxu0 %v3620
          %3643 = vmatprep.subr.bf16.mxu0 0
          %3644 = vmatpush1.bf16.msra.mxu0 %v3621
          %3645 = vmatprep.subr.bf16.mxu0 0
          %3646 = vmatpush1.bf16.msra.mxu0 %v3622
          %3647 = vmatprep.subr.bf16.mxu0 0
          %3648 = vmatpush1.bf16.msra.mxu0 0
          %3649 = vmatprep.subr.bf16.mxu0 0
          %3650 = vmatpush1.bf16.msra.mxu0 0
          %3651 = vmatprep.subr.bf16.mxu0 0
          %3652 = vmatpush1.bf16.msra.mxu0 0
          %3653 = vmatprep.subr.bf16.mxu0 0
          %3654 = vmatpush1.bf16.msra.mxu0 0
          %3655 = vmatprep.subr.bf16.mxu0 0
          %3656 = vmatpush1.bf16.msra.mxu0 0
          %3657 = vmatprep.subr.bf16.mxu0 0
          %3658 = vmatpush1.bf16.msra.mxu0 0
          %3659 = vmatprep.subr.bf16.mxu0 0
          %3660 = vmatpush1.bf16.msra.mxu0 0
          %3661 = vmatprep.subr.bf16.mxu0 0
          %3662 = vmatpush1.bf16.msra.mxu0 0
          %3663 = vmatprep.mubr.bf16.mxu0 0
          %3664 = vmatmul.mubr.bf16.gmra.mrb[0].mxu0 %v3544
          %v3665 = vpop.f32.mrb[0].mxu0
          %v3666 = vadd.f32 %v3581, %v3665
          %v3667 = vpop.f32.mrb[0].mxu0
          %v3668 = vpop.f32.mrb[0].mxu0
          %v3669 = vadd.f32 %v3581, %v3668
          %v3670 = vpop.f32.mrb[0].mxu0
          %3671 = vmatprep.mubr.bf16.mxu0 0
          %3672 = vmatmul.mubr.bf16.gmra.mrb[0].mxu0 %v3545
          %v3673 = vpop.f32.mrb[0].mxu0
          %v3674 = vadd.f32 %v3581, %v3673
          %v3675 = vpop.f32.mrb[0].mxu0
          %v3676 = vpop.f32.mrb[0].mxu0
          %v3677 = vadd.f32 %v3581, %v3676
          %v3678 = vpop.f32.mrb[0].mxu0
          %3679 = vmatprep.mubr.bf16.mxu0 0
          %3680 = vmatmul.mubr.bf16.gmra.mrb[0].mxu0 %v3546
          %v3681 = vpop.f32.mrb[0].mxu0
          %v3682 = vadd.f32 %v3581, %v3681
          %v3683 = vpop.f32.mrb[0].mxu0
          %v3684 = vpop.f32.mrb[0].mxu0
          %v3685 = vadd.f32 %v3581, %v3684
          %v3686 = vpop.f32.mrb[0].mxu0
          %3687 = vmatprep.mubr.bf16.mxu0 0
          %3688 = vmatmul.mubr.bf16.gmra.mrb[0].mxu0 %v3547
          %v3689 = vpop.f32.mrb[0].mxu0
          %v3690 = vadd.f32 %v3581, %v3689
          %v3691 = vpop.f32.mrb[0].mxu0
          %v3692 = vpop.f32.mrb[0].mxu0
          %v3693 = vadd.f32 %v3581, %v3692
          %v3694 = vpop.f32.mrb[0].mxu0
          %3695 = vmatprep.mubr.bf16.mxu0 0
          %3696 = vmatmul.mubr.bf16.gmra.mrb[0].mxu0 %v3548
          %v3697 = vpop.f32.mrb[0].mxu0
          %v3698 = vadd.f32 %v3581, %v3697
          %v3699 = vpop.f32.mrb[0].mxu0
          %v3700 = vpop.f32.mrb[0].mxu0
          %v3701 = vadd.f32 %v3581, %v3700
          %v3702 = vpop.f32.mrb[0].mxu0
          %3703 = vmatprep.mubr.bf16.mxu0 0
          %3704 = vmatmul.mubr.bf16.gmra.mrb[0].mxu0 %v3549
          %v3705 = vpop.f32.mrb[0].mxu0
          %v3706 = vadd.f32 %v3581, %v3705
          %v3707 = vpop.f32.mrb[0].mxu0
          %v3708 = vpop.f32.mrb[0].mxu0
          %v3709 = vadd.f32 %v3581, %v3708
          %v3710 = vpop.f32.mrb[0].mxu0
          %3711 = vmatprep.mubr.bf16.mxu0 0
          %3712 = vmatmul.mubr.bf16.gmra.mrb[0].mxu0 %v3550
          %v3713 = vpop.f32.mrb[0].mxu0
          %v3714 = vadd.f32 %v3581, %v3713
          %v3715 = vpop.f32.mrb[0].mxu0
          %v3716 = vpop.f32.mrb[0].mxu0
          %v3717 = vadd.f32 %v3581, %v3716
          %v3718 = vpop.f32.mrb[0].mxu0
          %3719 = vmatprep.mubr.bf16.mxu0 0
          %3720 = vmatmul.mubr.bf16.gmra.mrb[0].mxu0 %v3551
          %v3721 = vpop.f32.mrb[0].mxu0
          %v3722 = vadd.f32 %v3581, %v3721
          %v3723 = vpop.f32.mrb[0].mxu0
          %v3724 = vpop.f32.mrb[0].mxu0
          %v3725 = vadd.f32 %v3581, %v3724
          %v3726 = vpop.f32.mrb[0].mxu0
          %3727 = vmatprep.mubr.bf16.mxu0 0
          %3728 = vmatmul.mubr.bf16.gmra.mrb[0].mxu0 %v3552
          %v3729 = vpop.f32.mrb[0].mxu0
          %v3730 = vadd.f32 %v3581, %v3729
          %v3731 = vpop.f32.mrb[0].mxu0
          %v3732 = vpop.f32.mrb[0].mxu0
          %v3733 = vadd.f32 %v3581, %v3732
          %v3734 = vpop.f32.mrb[0].mxu0
          %3735 = vmatprep.mubr.bf16.mxu0 0
          %3736 = vmatmul.mubr.bf16.gmra.mrb[0].mxu0 %v3553
          %v3737 = vpop.f32.mrb[0].mxu0
          %v3738 = vadd.f32 %v3581, %v3737
          %v3739 = vpop.f32.mrb[0].mxu0
          %v3740 = vpop.f32.mrb[0].mxu0
          %v3741 = vadd.f32 %v3581, %v3740
          %v3742 = vpop.f32.mrb[0].mxu0
          %3743 = vmatprep.mubr.bf16.mxu0 0
          %3744 = vmatmul.mubr.bf16.gmra.mrb[0].mxu0 %v3554
          %v3745 = vpop.f32.mrb[0].mxu0
          %v3746 = vadd.f32 %v3581, %v3745
          %v3747 = vpop.f32.mrb[0].mxu0
          %v3748 = vpop.f32.mrb[0].mxu0
          %v3749 = vadd.f32 %v3581, %v3748
          %v3750 = vpop.f32.mrb[0].mxu0
          %3751 = vmatprep.mubr.bf16.mxu0 0
          %3752 = vmatmul.mubr.bf16.gmra.mrb[0].mxu0 %v3555
          %v3753 = vpop.f32.mrb[0].mxu0
          %v3754 = vadd.f32 %v3581, %v3753
          %v3755 = vpop.f32.mrb[0].mxu0
          %v3756 = vpop.f32.mrb[0].mxu0
          %v3757 = vadd.f32 %v3581, %v3756
          %v3758 = vpop.f32.mrb[0].mxu0
          %3759 = vmatprep.mubr.bf16.mxu0 0
          %3760 = vmatmul.mubr.bf16.gmra.mrb[0].mxu0 %v3556
          %v3761 = vpop.f32.mrb[0].mxu0
          %v3762 = vadd.f32 %v3581, %v3761
          %v3763 = vpop.f32.mrb[0].mxu0
          %v3764 = vpop.f32.mrb[0].mxu0
          %v3765 = vadd.f32 %v3581, %v3764
          %v3766 = vpop.f32.mrb[0].mxu0
          %3767 = vmatprep.mubr.bf16.mxu0 0
          %3768 = vmatmul.mubr.bf16.gmra.mrb[0].mxu0 %v3557
          %v3769 = vpop.f32.mrb[0].mxu0
          %v3770 = vadd.f32 %v3581, %v3769
          %v3771 = vpop.f32.mrb[0].mxu0
          %v3772 = vpop.f32.mrb[0].mxu0
          %v3773 = vadd.f32 %v3581, %v3772
          %v3774 = vpop.f32.mrb[0].mxu0
          %3775 = vmatprep.mubr.bf16.mxu0 0
          %3776 = vmatmul.mubr.bf16.gmra.mrb[0].mxu0 %v3558
          %v3777 = vpop.f32.mrb[0].mxu0
          %v3778 = vadd.f32 %v3581, %v3777
          %v3779 = vpop.f32.mrb[0].mxu0
          %v3780 = vpop.f32.mrb[0].mxu0
          %v3781 = vadd.f32 %v3581, %v3780
          %v3782 = vpop.f32.mrb[0].mxu0
          %3783 = vmatprep.mubr.bf16.mxu0 0
          %3784 = vmatmul.mubr.bf16.gmra.mrb[0].mxu0 %v3559
          %v3785 = vpop.f32.mrb[0].mxu0
          %v3786 = vadd.f32 %v3581, %v3785
          %v3787 = vpop.f32.mrb[0].mxu0
          %v3788 = vpop.f32.mrb[0].mxu0
          %v3789 = vadd.f32 %v3581, %v3788
          %v3790 = vpop.f32.mrb[0].mxu0
          %3791 = vdwg.mxu0
          %3792 = vst [vmem:[%s622] sm:$0xff] %v3666
          %3793 = vst [vmem:[%s622 + $0x8] sm:$0xff] %v3669
          %3794 = vst [vmem:[%s622 + $0x10] sm:$0xff] %v3674
          %3795 = vst [vmem:[%s622 + $0x18] sm:$0xff] %v3677
          %3796 = vst [vmem:[%s622 + $0x20] sm:$0xff] %v3682
          %3797 = vst [vmem:[%s622 + $0x28] sm:$0xff] %v3685
          %3798 = vst [vmem:[%s622 + $0x30] sm:$0xff] %v3690
          %3799 = vst [vmem:[%s622 + $0x38] sm:$0xff] %v3693
          %3800 = vst [vmem:[%s622 + $0x40] sm:$0xff] %v3698
          %3801 = vst [vmem:[%s622 + $0x48] sm:$0xff] %v3701
          %3802 = vst [vmem:[%s622 + $0x50] sm:$0xff] %v3706
          %3803 = vst [vmem:[%s622 + $0x58] sm:$0xff] %v3709
          %3804 = vst [vmem:[%s622 + $0x60] sm:$0xff] %v3714
          %3805 = vst [vmem:[%s622 + $0x68] sm:$0xff] %v3717
          %3806 = vst [vmem:[%s622 + $0x70] sm:$0xff] %v3722
          %3807 = vst [vmem:[%s622 + $0x78] sm:$0xff] %v3725
          %3808 = vst [vmem:[%s622 + $0x80] sm:$0xff] %v3730
          %3809 = vst [vmem:[%s622 + $0x88] sm:$0xff] %v3733
          %3810 = vst [vmem:[%s622 + $0x90] sm:$0xff] %v3738
          %3811 = vst [vmem:[%s622 + $0x98] sm:$0xff] %v3741
          %3812 = vst [vmem:[%s622 + $0xa0] sm:$0xff] %v3746
          %3813 = vst [vmem:[%s622 + $0xa8] sm:$0xff] %v3749
          %3814 = vst [vmem:[%s622 + $0xb0] sm:$0xff] %v3754
          %3815 = vst [vmem:[%s622 + $0xb8] sm:$0xff] %v3757
          %3816 = vst [vmem:[%s622 + $0xc0] sm:$0xff] %v3762
          %3817 = vst [vmem:[%s622 + $0xc8] sm:$0xff] %v3765
          %3818 = vst [vmem:[%s622 + $0xd0] sm:$0xff] %v3770
          %3819 = vst [vmem:[%s622 + $0xd8] sm:$0xff] %v3773
          %3820 = vst [vmem:[%s622 + $0xe0] sm:$0xff] %v3778
          %3821 = vst [vmem:[%s622 + $0xe8] sm:$0xff] %v3781
          %3822 = vst [vmem:[%s622 + $0xf0] sm:$0xff] %v3786
          %3823 = vst [vmem:[%s622 + $0xf8] sm:$0xff] %v3789
        $region108: #{tpu_custom_call.1} parent=71 // pred_fallthru
          _
        %s3824 = sand.u32 %s350, 1
        %s3825 = scalar_lea.sflag [#allocation5], %s3824
        %s3826 = sand.u32 %s350, 1
        %s3827 = smul.addr %s3826, 256
        %s3828 = scalar_lea.vmem [#allocation15], %s3827
        // Predicated region
        $region109: #{tpu_custom_call.1} parent=71 // pred_check
          %p3829 = pneg %p360
        $region110: #{tpu_custom_call.1} parent=71 // pred_check_branch
          %3831 = sbr.rel (%p3829) target = $region112
        $region111: #{tpu_custom_call.1} parent=71 // pred_region
          %s3832 = smul.u32 32, %s39
          %s3834 = ssub.s32 4096, 4096
          %3835 = vsyncadd %s3825, %s3834
          %s3836 = smul.addr %s3832, 128
          %s3837 = scalar_lea.hbm %s13, %s3836
          %s3838 = sshll.u32 %s3828, 4
          %s3839 = int_to_ptr.vmem [resolvable:$true] %s3838
          %3844 = dma.vmem_to_hbm [thread:$0]  %s3839, 4096, %s3837, %s3825, 128, 128, 8
        $region112: #{tpu_custom_call.1} parent=71 // pred_fallthru
          _
      $region72: #{tpu_custom_call.1} parent=5 // pred_fallthru
        _
      %p3845 = scmp.le.s32.totalorder 2, %s30
      // Predicated region
      $region113: #{tpu_custom_call.1} parent=5 // pred_check
        %p3846 = pneg %p3845
      $region114: #{tpu_custom_call.1} parent=5 // pred_check_branch
        %3848 = sbr.rel (%p3846) target = $region116
      $region115: #{tpu_custom_call.1} parent=5 // pred_region
        %s3849 = ssub.s32 %s30, 2
        // Predicated region
        $region117: #{tpu_custom_call.1} parent=115 // pred_check
          %p3850 = pneg %p366
        $region118: #{tpu_custom_call.1} parent=115 // pred_check_branch
          %3852 = sbr.rel (%p3850) target = $region120
        $region119: #{tpu_custom_call.1} parent=115 // pred_region
          %s3853 = sand.u32 %s351, 1
          %s3854 = scalar_lea.sflag [#allocation5], %s3853
          %s3855 = sand.u32 %s351, 1
          %s3856 = smul.addr %s3855, 256
          %s3857 = scalar_lea.vmem [#allocation15], %s3856
          %3858 = dma.done %s3854, 4096
        $region120: #{tpu_custom_call.1} parent=115 // pred_fallthru
          _
      $region116: #{tpu_custom_call.1} parent=5 // pred_fallthru
        _
    $region6: #{tpu_custom_call.1} parent=1 // loop_footer
      %s34 = sadd.s32 1, %s30
    $region7: #{tpu_custom_call.1} parent=1 // loop_footer_branch
      %29 = sbr.rel target = $region3
    $region8: #{tpu_custom_call.1} parent=1 // loop_exit
      _
    %3859 = vsyncpa [#allocation4], 1
    %s3860 = scalar_lea.sflag [#allocation4], 1
    %3861 = vsyncpa %s3860, 1
    %3862 = vsyncpa [#allocation7], 1
    %s3863 = scalar_lea.sflag [#allocation7], 1
    %3864 = vsyncpa %s3863, 1
    %3865 = vsyncpa [#allocation10], 1
    %3866 = vsyncpa [#allocation13], 1
    %3867 = vsyncpa [#allocation5], 1
    %s3868 = scalar_lea.sflag [#allocation5], 1
    %3869 = vsyncpa %s3868, 1

</llo_original>
